<compile_context>
chip_gen: v7x
topology: tpu7x:2x2x1
jax: 0.10.0
libtpu: 0.0.40
codegen_flags: <defaults>
</compile_context>

<pallas_src>
import functools

import jax
import jax.numpy as jnp
from jax import lax
from jax.experimental import pallas as pl
from jax.experimental.pallas import tpu as pltpu

EPS = 1e-5


def _fused_kernel(x_ref, w1_ref, w2_ref, b1_ref, b2_ref, o_ref, *, TH, H, W):
    """One (batch, row-tile) step of the fused double conv-BN-ReLU.

    x_ref : (1, H+4, W+2, Cin)  bf16, zero-padded input (2-row / 1-col halo)
    w1_ref: (3, 3*Cin,  Cout)   bf16, [kw, kh*Cin + c, o] = (W1*scale1)[kh,kw,c,o]
    w2_ref: (3, 3*Cout, Cout)   bf16, same folding for layer 2
    b*_ref: (1, Cout)           f32 folded BN bias
    o_ref : (1, TH, W, Cout)    output row tile
    """
    Cin = x_ref.shape[3]
    Cout = o_ref.shape[3]

    t = pl.program_id(1)
    r0 = pl.multiple_of(t * TH, TH)

    # ---------------- layer 1: rows r0-1 .. r0+TH (TH+2 rows incl. halo) ----
    # Build the kh-folded slab ONCE, straight from the ref. Slab row j holds
    # output/halo row (r0-1+j); lane group kh holds padded input row r0+j+kh.
    xcat = jnp.concatenate(
        [x_ref[0, pl.ds(r0 + kh, TH + 2), :, :] for kh in range(3)],
        axis=-1)                                     # (TH+2, W+2, 3*Cin) bf16

    M1 = (TH + 2) * W
    acc1 = jnp.zeros((M1, Cout), dtype=jnp.float32)
    for kw in range(3):                              # static, unrolled
        acc1 += jnp.dot(xcat[:, kw:kw + W, :].reshape(M1, 3 * Cin),
                        w1_ref[kw], preferred_element_type=jnp.float32)

    # BN scale already folded into w1 -> epilogue is bias + ReLU only.
    y1 = jnp.maximum(acc1 + b1_ref[...], 0.0).reshape(TH + 2, W, Cout)

    # Halo rows that fall outside the image must be exact zeros for layer 2.
    row = r0 - 1 + lax.broadcasted_iota(jnp.int32, (TH + 2, 1), 0)
    valid = jnp.logical_and(row >= 0, row < H).reshape(TH + 2, 1, 1)
    y1 = jnp.where(valid, y1, 0.0).astype(jnp.bfloat16)

    # Width halo (SAME padding) for layer 2, kept entirely in VMEM.
    zcol = jnp.zeros((TH + 2, 1, Cout), dtype=jnp.bfloat16)
    y1p = jnp.concatenate([zcol, y1, zcol], axis=1)  # (TH+2, W+2, Cout)

    # ---------------- layer 2: output rows r0 .. r0+TH-1 --------------------
    # Same trick: one kh-folded slab, then cheap kw sublane slices.
    ycat = jnp.concatenate([y1p[kh:kh + TH] for kh in range(3)],
                           axis=-1)                  # (TH, W+2, 3*Cout) bf16

    M2 = TH * W
    acc2 = jnp.zeros((M2, Cout), dtype=jnp.float32)
    for kw in range(3):
        acc2 += jnp.dot(ycat[:, kw:kw + W, :].reshape(M2, 3 * Cout),
                        w2_ref[kw], preferred_element_type=jnp.float32)

    y2 = jnp.maximum(acc2 + b2_ref[...], 0.0)
    o_ref[...] = y2.reshape(1, TH, W, Cout).astype(o_ref.dtype)


def _pick_row_tile(H, W, target_rows):
    """Pick TH | H. Targets TH*W >= 256 (fills the MXU M dim, amortizes the
    2-row halo recompute) and never degrades to tiny tiles for awkward H."""
    divs = [d for d in range(1, H + 1) if H % d == 0]
    le = [d for d in divs if d <= target_rows]
    th = le[-1] if le else H
    if th * W < 256:
        ge = [d for d in divs if d * W >= 256]
        th = ge[0] if ge else H
    return th


def _vmem_limit_bytes(H, W, Cin, Cout, TH, out_itemsize):
    """Size the VMEM budget from the actual buffers instead of hard-coding."""
    bf16, f32 = 2, 4
    x_blk = (H + 4) * (W + 2) * Cin * bf16
    w_blk = 9 * Cin * Cout * bf16 + 9 * Cout * Cout * bf16
    b_blk = 2 * Cout * f32
    o_blk = TH * W * Cout * out_itemsize
    tmp = ((TH + 2) * (W + 2) * 3 * Cin * bf16        # xcat
           + (TH + 2) * W * 3 * Cin * bf16            # kw slice of xcat
           + (TH + 2) * W * Cout * (f32 + bf16)       # acc1 / y1
           + (TH + 2) * (W + 2) * Cout * bf16         # y1p
           + TH * (W + 2) * 3 * Cout * bf16           # ycat
           + TH * W * 3 * Cout * bf16                 # kw slice of ycat
           + TH * W * Cout * f32)                     # acc2
    need = 2 * (x_blk + w_blk + b_blk + o_blk) + 2 * tmp   # dbl-buffer + slack
    try:
        cap = pltpu.get_tpu_info().vmem_capacity_bytes
    except Exception:
        cap = 128 * 1024 * 1024
    return int(min(max(need, 32 * 1024 * 1024), int(0.8 * cap)))


def student_s32_forward_nhwc(x_nhwc, params, *, row_tile=16,
                             out_dtype=jnp.float32):
    """StudentS32 forward, NHWC in / NHWC out (no transpose HBM passes)."""
    N, H, W, Cin = x_nhwc.shape
    Cout = params["w1"].shape[-1]
    TH = _pick_row_tile(H, W, row_tile)

    # Single up-front halo pad (2 rows / 1 col); fuses with the bf16 cast.
    x_pad = jnp.pad(x_nhwc.astype(jnp.bfloat16), ((0, 0), (2, 2), (1, 1), (0, 0)))

    def fold_w(w, scale):  # HWIO (3,3,Ci,Co) -> (kw, kh*Ci + c, Co), bf16
        ci, co = w.shape[2], w.shape[3]
        w = w * scale.reshape(1, 1, 1, co)             # BN scale into weights
        return jnp.transpose(w, (1, 0, 2, 3)).reshape(3, 3 * ci, co).astype(
            jnp.bfloat16)

    w1 = fold_w(params["w1"], params["s1"])
    w2 = fold_w(params["w2"], params["s2"])
    b1 = params["b1"].reshape(1, Cout).astype(jnp.float32)
    b2 = params["b2"].reshape(1, Cout).astype(jnp.float32)

    kernel = functools.partial(_fused_kernel, TH=TH, H=H, W=W)
    vmem_limit = _vmem_limit_bytes(H, W, Cin, Cout, TH,
                                   jnp.dtype(out_dtype).itemsize)

    out = pl.pallas_call(
        kernel,
        out_shape=jax.ShapeDtypeStruct((N, H, W, Cout), out_dtype),
        grid_spec=pltpu.PrefetchScalarGridSpec(
            num_scalar_prefetch=0,
            grid=(N, H // TH),
            in_specs=[
                pl.BlockSpec((1, H + 4, W + 2, Cin), lambda n, t: (n, 0, 0, 0)),
                pl.BlockSpec((3, 3 * Cin, Cout), lambda n, t: (0, 0, 0)),
                pl.BlockSpec((3, 3 * Cout, Cout), lambda n, t: (0, 0, 0)),
                pl.BlockSpec((1, Cout), lambda n, t: (0, 0)),
                pl.BlockSpec((1, Cout), lambda n, t: (0, 0)),
            ],
            out_specs=pl.BlockSpec((1, TH, W, Cout), lambda n, t: (n, t, 0, 0)),
        ),
        compiler_params=pltpu.CompilerParams(
            dimension_semantics=("parallel", "parallel"),
            vmem_limit_bytes=vmem_limit,
        ),
    )(x_pad, w1, w2, b1, b2)
    return out


def student_s32_forward(x_nchw, params, *, row_tile=16, out_dtype=jnp.float32):
    """PyTorch-layout (NCHW) entry point. Prefer the NHWC entry point inside
    an NHWC pipeline to avoid the two full-tensor transpose passes."""
    x = jnp.transpose(x_nchw, (0, 2, 3, 1))
    out = student_s32_forward_nhwc(x, params, row_tile=row_tile,
                                   out_dtype=out_dtype)
    return jnp.transpose(out, (0, 3, 1, 2))


def init_params(key, in_channels, out_channels):
    """Deterministic synthetic parameters (shapes follow the PyTorch module)."""
    ks = jax.random.split(key, 10)

    def bn_params(kg, kb, km, kv, c):
        gamma = 1.0 + 0.1 * jax.random.normal(kg, (c,), jnp.float32)
        beta = 0.1 * jax.random.normal(kb, (c,), jnp.float32)
        mean = 0.05 * jax.random.normal(km, (c,), jnp.float32)
        var = jnp.abs(1.0 + 0.1 * jax.random.normal(kv, (c,), jnp.float32))
        scale = gamma / jnp.sqrt(var + EPS)
        bias = beta - mean * scale
        return scale, bias

    w1 = jax.random.normal(ks[0], (3, 3, in_channels, out_channels),
                           jnp.float32) * (2.0 / (9 * in_channels)) ** 0.5
    w2 = jax.random.normal(ks[1], (3, 3, out_channels, out_channels),
                           jnp.float32) * (2.0 / (9 * out_channels)) ** 0.5
    s1, b1 = bn_params(ks[2], ks[3], ks[4], ks[5], out_channels)
    s2, b2 = bn_params(ks[6], ks[7], ks[8], ks[9], out_channels)
    return dict(w1=w1, s1=s1, b1=b1, w2=w2, s2=s2, b2=b2)


def _reference_forward(x_nchw, params):
    """Pure-JAX reference with the same folded-BN / bf16 / f32-acc numerics."""
    x = jnp.transpose(x_nchw, (0, 2, 3, 1)).astype(jnp.bfloat16)

    def block(x, w, s, b):
        w_eff = (w * s.reshape(1, 1, 1, -1)).astype(jnp.bfloat16)
        y = lax.conv_general_dilated(
            x, w_eff, window_strides=(1, 1), padding="SAME",
            dimension_numbers=("NHWC", "HWIO", "NHWC"),
            preferred_element_type=jnp.float32)
        return jnp.maximum(y + b.reshape(1, 1, 1, -1), 0.0)

    y = block(x, params["w1"], params["s1"], params["b1"])
    y = block(y.astype(jnp.bfloat16), params["w2"], params["s2"], params["b2"])
    return jnp.transpose(y, (0, 3, 1, 2)).astype(jnp.float32)


# TODO(synk): BatchNorm is folded with fixed running stats (inference mode);
# training-mode batch-statistic updates are not implemented.

if __name__ == "__main__":
    # Small shapes consistent with the module (default 512 channels shrunk).
    N, C, H, W = 2, 32, 16, 16

    key = jax.random.PRNGKey(0)
    k_x, k_p = jax.random.split(key)
    x = jax.random.normal(k_x, (N, C, H, W), jnp.float32)          # NCHW
    params = init_params(k_p, in_channels=C, out_channels=C)

    out = jax.block_until_ready(jax.jit(student_s32_forward)(x, params))
    ref = jax.block_until_ready(_reference_forward(x, params))

    assert out.shape == (N, C, H, W), out.shape
    assert jnp.allclose(out, ref, atol=3e-2, rtol=3e-2), \
        float(jnp.max(jnp.abs(out - ref)))

    print("KERNEL_OK")
</pallas_src>

<mosaic_0001>
module attributes {stable_mosaic.version = 11 : i64} {
  func.func @_fused_kernel(%arg0: i32, %arg1: i32, %arg2: memref<1x20x18x32xbf16, #tpu.memory_space<vmem>>, %arg3: memref<3x96x32xbf16, #tpu.memory_space<vmem>>, %arg4: memref<3x96x32xbf16, #tpu.memory_space<vmem>>, %arg5: memref<1x32xf32, #tpu.memory_space<vmem>>, %arg6: memref<1x32xf32, #tpu.memory_space<vmem>>, %arg7: memref<1x16x16x32xf32, #tpu.memory_space<vmem>>) attributes {dimension_semantics = [#tpu.dimension_semantics<parallel>, #tpu.dimension_semantics<parallel>], iteration_bounds = array<i64: 2, 1>, scalar_prefetch = 0 : i64, scratch_operands = 0 : i64, tpu.core_type = #tpu.core_type<tc>, window_params = [{transform_indices = @transform_0, window_bounds = array<i64: 1, 20, 18, 32>}, {pipeline_mode = #tpu.pipeline_mode<synchronous>, transform_indices = @transform_1, window_bounds = array<i64: 3, 96, 32>}, {pipeline_mode = #tpu.pipeline_mode<synchronous>, transform_indices = @transform_2, window_bounds = array<i64: 3, 96, 32>}, {pipeline_mode = #tpu.pipeline_mode<synchronous>, transform_indices = @transform_3, window_bounds = array<i64: 1, 32>}, {pipeline_mode = #tpu.pipeline_mode<synchronous>, transform_indices = @transform_4, window_bounds = array<i64: 1, 32>}, {transform_indices = @transform_5, window_bounds = array<i64: 1, 16, 16, 32>}]} {
    %c16_i32 = arith.constant 16 : i32
    %0 = arith.muli %arg1, %c16_i32 : i32
    %1 = tpu.assume_multiple %0, 16 : i32
    %c0_i32 = arith.constant 0 : i32
    %2 = arith.addi %1, %c0_i32 : i32
    %c0 = arith.constant 0 : index
    %3 = arith.index_cast %2 : i32 to index
    %c0_0 = arith.constant 0 : index
    %c0_1 = arith.constant 0 : index
    %4 = vector.load %arg2[%c0, %3, %c0_0, %c0_1] : memref<1x20x18x32xbf16, #tpu.memory_space<vmem>>, vector<1x18x18x32xbf16>
    %5 = vector.shape_cast %4 : vector<1x18x18x32xbf16> to vector<18x18x32xbf16>
    %c1_i32 = arith.constant 1 : i32
    %6 = arith.addi %1, %c1_i32 : i32
    %c0_2 = arith.constant 0 : index
    %7 = arith.index_cast %6 : i32 to index
    %c0_3 = arith.constant 0 : index
    %c0_4 = arith.constant 0 : index
    %8 = vector.load %arg2[%c0_2, %7, %c0_3, %c0_4] : memref<1x20x18x32xbf16, #tpu.memory_space<vmem>>, vector<1x18x18x32xbf16>
    %9 = vector.shape_cast %8 : vector<1x18x18x32xbf16> to vector<18x18x32xbf16>
    %c2_i32 = arith.constant 2 : i32
    %10 = arith.addi %1, %c2_i32 : i32
    %c0_5 = arith.constant 0 : index
    %11 = arith.index_cast %10 : i32 to index
    %c0_6 = arith.constant 0 : index
    %c0_7 = arith.constant 0 : index
    %12 = vector.load %arg2[%c0_5, %11, %c0_6, %c0_7] : memref<1x20x18x32xbf16, #tpu.memory_space<vmem>>, vector<1x18x18x32xbf16>
    %13 = vector.shape_cast %12 : vector<1x18x18x32xbf16> to vector<18x18x32xbf16>
    %14 = tpu.concatenate %5, %9, %13 in 2 : vector<18x18x32xbf16>, vector<18x18x32xbf16>, vector<18x18x32xbf16> -> vector<18x18x96xbf16>
    %cst = arith.constant 0.000000e+00 : f32
    %15 = vector.broadcast %cst : f32 to vector<288x32xf32>
    %16 = vector.extract_strided_slice %14 {offsets = [0, 0, 0], sizes = [18, 16, 96], strides = [1, 1, 1]} : vector<18x18x96xbf16> to vector<18x16x96xbf16>
    %17 = vector.shape_cast %16 : vector<18x16x96xbf16> to vector<288x96xbf16>
    %c0_8 = arith.constant 0 : index
    %c0_9 = arith.constant 0 : index
    %c0_10 = arith.constant 0 : index
    %18 = vector.load %arg3[%c0_8, %c0_9, %c0_10] : memref<3x96x32xbf16, #tpu.memory_space<vmem>>, vector<1x96x32xbf16>
    %19 = vector.shape_cast %18 : vector<1x96x32xbf16> to vector<96x32xbf16>
    %cst_11 = arith.constant dense<0.000000e+00> : vector<288x32xf32>
    %20 = tpu.matmul %17, %19, %cst_11 {dimension_numbers = #tpu.dot_dimension_numbers<[1], [0], [0], [1], [0, 0, 1, 1], [], []>} : vector<288x96xbf16>, vector<96x32xbf16>, vector<288x32xf32> -> vector<288x32xf32>
    %21 = arith.addf %15, %20 : vector<288x32xf32>
    %22 = vector.extract_strided_slice %14 {offsets = [0, 1, 0], sizes = [18, 16, 96], strides = [1, 1, 1]} : vector<18x18x96xbf16> to vector<18x16x96xbf16>
    %23 = vector.shape_cast %22 : vector<18x16x96xbf16> to vector<288x96xbf16>
    %c1 = arith.constant 1 : index
    %c0_12 = arith.constant 0 : index
    %c0_13 = arith.constant 0 : index
    %24 = vector.load %arg3[%c1, %c0_12, %c0_13] : memref<3x96x32xbf16, #tpu.memory_space<vmem>>, vector<1x96x32xbf16>
    %25 = vector.shape_cast %24 : vector<1x96x32xbf16> to vector<96x32xbf16>
    %cst_14 = arith.constant dense<0.000000e+00> : vector<288x32xf32>
    %26 = tpu.matmul %23, %25, %cst_14 {dimension_numbers = #tpu.dot_dimension_numbers<[1], [0], [0], [1], [0, 0, 1, 1], [], []>} : vector<288x96xbf16>, vector<96x32xbf16>, vector<288x32xf32> -> vector<288x32xf32>
    %27 = arith.addf %21, %26 : vector<288x32xf32>
    %28 = vector.extract_strided_slice %14 {offsets = [0, 2, 0], sizes = [18, 16, 96], strides = [1, 1, 1]} : vector<18x18x96xbf16> to vector<18x16x96xbf16>
    %29 = vector.shape_cast %28 : vector<18x16x96xbf16> to vector<288x96xbf16>
    %c2 = arith.constant 2 : index
    %c0_15 = arith.constant 0 : index
    %c0_16 = arith.constant 0 : index
    %30 = vector.load %arg3[%c2, %c0_15, %c0_16] : memref<3x96x32xbf16, #tpu.memory_space<vmem>>, vector<1x96x32xbf16>
    %31 = vector.shape_cast %30 : vector<1x96x32xbf16> to vector<96x32xbf16>
    %cst_17 = arith.constant dense<0.000000e+00> : vector<288x32xf32>
    %32 = tpu.matmul %29, %31, %cst_17 {dimension_numbers = #tpu.dot_dimension_numbers<[1], [0], [0], [1], [0, 0, 1, 1], [], []>} : vector<288x96xbf16>, vector<96x32xbf16>, vector<288x32xf32> -> vector<288x32xf32>
    %33 = arith.addf %27, %32 : vector<288x32xf32>
    %c0_18 = arith.constant 0 : index
    %c0_19 = arith.constant 0 : index
    %34 = vector.load %arg5[%c0_18, %c0_19] : memref<1x32xf32, #tpu.memory_space<vmem>>, vector<1x32xf32>
    %35 = vector.broadcast %34 : vector<1x32xf32> to vector<288x32xf32>
    %36 = arith.addf %33, %35 : vector<288x32xf32>
    %cst_20 = arith.constant 0.000000e+00 : f32
    %37 = vector.broadcast %cst_20 : f32 to vector<288x32xf32>
    %38 = arith.maximumf %36, %37 : vector<288x32xf32>
    %39 = vector.shape_cast %38 : vector<288x32xf32> to vector<18x16x32xf32>
    %c1_i32_21 = arith.constant 1 : i32
    %40 = arith.subi %1, %c1_i32_21 : i32
    %41 = tpu.iota {dimensions = array<i32: 0>} : vector<18x1xi32>
    %42 = vector.broadcast %40 : i32 to vector<18x1xi32>
    %43 = arith.addi %42, %41 : vector<18x1xi32>
    %c0_i32_22 = arith.constant 0 : i32
    %44 = vector.broadcast %c0_i32_22 : i32 to vector<18x1xi32>
    %45 = arith.cmpi sge, %43, %44 : vector<18x1xi32>
    %c16_i32_23 = arith.constant 16 : i32
    %46 = vector.broadcast %c16_i32_23 : i32 to vector<18x1xi32>
    %47 = arith.cmpi slt, %43, %46 : vector<18x1xi32>
    %48 = arith.andi %45, %47 : vector<18x1xi1>
    %49 = vector.shape_cast %48 : vector<18x1xi1> to vector<18x1x1xi1>
    %cst_24 = arith.constant 0.000000e+00 : f32
    %50 = vector.shape_cast %49 : vector<18x1x1xi1> to vector<18x1x1xi1>
    %51 = vector.broadcast %50 : vector<18x1x1xi1> to vector<18x16x32xi1>
    %52 = vector.broadcast %cst_24 : f32 to vector<18x16x32xf32>
    %53 = arith.select %51, %39, %52 : vector<18x16x32xi1>, vector<18x16x32xf32>
    %54 = arith.truncf %53 : vector<18x16x32xf32> to vector<18x16x32xbf16>
    %cst_25 = arith.constant 0.000000e+00 : bf16
    %55 = vector.broadcast %cst_25 : bf16 to vector<18x1x32xbf16>
    %56 = tpu.concatenate %55, %54, %55 in 1 : vector<18x1x32xbf16>, vector<18x16x32xbf16>, vector<18x1x32xbf16> -> vector<18x18x32xbf16>
    %57 = vector.extract_strided_slice %56 {offsets = [0, 0, 0], sizes = [16, 18, 32], strides = [1, 1, 1]} : vector<18x18x32xbf16> to vector<16x18x32xbf16>
    %58 = vector.extract_strided_slice %56 {offsets = [1, 0, 0], sizes = [16, 18, 32], strides = [1, 1, 1]} : vector<18x18x32xbf16> to vector<16x18x32xbf16>
    %59 = vector.extract_strided_slice %56 {offsets = [2, 0, 0], sizes = [16, 18, 32], strides = [1, 1, 1]} : vector<18x18x32xbf16> to vector<16x18x32xbf16>
    %60 = tpu.concatenate %57, %58, %59 in 2 : vector<16x18x32xbf16>, vector<16x18x32xbf16>, vector<16x18x32xbf16> -> vector<16x18x96xbf16>
    %cst_26 = arith.constant 0.000000e+00 : f32
    %61 = vector.broadcast %cst_26 : f32 to vector<256x32xf32>
    %62 = vector.extract_strided_slice %60 {offsets = [0, 0, 0], sizes = [16, 16, 96], strides = [1, 1, 1]} : vector<16x18x96xbf16> to vector<16x16x96xbf16>
    %63 = vector.shape_cast %62 : vector<16x16x96xbf16> to vector<256x96xbf16>
    %c0_27 = arith.constant 0 : index
    %c0_28 = arith.constant 0 : index
    %c0_29 = arith.constant 0 : index
    %64 = vector.load %arg4[%c0_27, %c0_28, %c0_29] : memref<3x96x32xbf16, #tpu.memory_space<vmem>>, vector<1x96x32xbf16>
    %65 = vector.shape_cast %64 : vector<1x96x32xbf16> to vector<96x32xbf16>
    %cst_30 = arith.constant dense<0.000000e+00> : vector<256x32xf32>
    %66 = tpu.matmul %63, %65, %cst_30 {dimension_numbers = #tpu.dot_dimension_numbers<[1], [0], [0], [1], [0, 0, 1, 1], [], []>} : vector<256x96xbf16>, vector<96x32xbf16>, vector<256x32xf32> -> vector<256x32xf32>
    %67 = arith.addf %61, %66 : vector<256x32xf32>
    %68 = vector.extract_strided_slice %60 {offsets = [0, 1, 0], sizes = [16, 16, 96], strides = [1, 1, 1]} : vector<16x18x96xbf16> to vector<16x16x96xbf16>
    %69 = vector.shape_cast %68 : vector<16x16x96xbf16> to vector<256x96xbf16>
    %c1_31 = arith.constant 1 : index
    %c0_32 = arith.constant 0 : index
    %c0_33 = arith.constant 0 : index
    %70 = vector.load %arg4[%c1_31, %c0_32, %c0_33] : memref<3x96x32xbf16, #tpu.memory_space<vmem>>, vector<1x96x32xbf16>
    %71 = vector.shape_cast %70 : vector<1x96x32xbf16> to vector<96x32xbf16>
    %cst_34 = arith.constant dense<0.000000e+00> : vector<256x32xf32>
    %72 = tpu.matmul %69, %71, %cst_34 {dimension_numbers = #tpu.dot_dimension_numbers<[1], [0], [0], [1], [0, 0, 1, 1], [], []>} : vector<256x96xbf16>, vector<96x32xbf16>, vector<256x32xf32> -> vector<256x32xf32>
    %73 = arith.addf %67, %72 : vector<256x32xf32>
    %74 = vector.extract_strided_slice %60 {offsets = [0, 2, 0], sizes = [16, 16, 96], strides = [1, 1, 1]} : vector<16x18x96xbf16> to vector<16x16x96xbf16>
    %75 = vector.shape_cast %74 : vector<16x16x96xbf16> to vector<256x96xbf16>
    %c2_35 = arith.constant 2 : index
    %c0_36 = arith.constant 0 : index
    %c0_37 = arith.constant 0 : index
    %76 = vector.load %arg4[%c2_35, %c0_36, %c0_37] : memref<3x96x32xbf16, #tpu.memory_space<vmem>>, vector<1x96x32xbf16>
    %77 = vector.shape_cast %76 : vector<1x96x32xbf16> to vector<96x32xbf16>
    %cst_38 = arith.constant dense<0.000000e+00> : vector<256x32xf32>
    %78 = tpu.matmul %75, %77, %cst_38 {dimension_numbers = #tpu.dot_dimension_numbers<[1], [0], [0], [1], [0, 0, 1, 1], [], []>} : vector<256x96xbf16>, vector<96x32xbf16>, vector<256x32xf32> -> vector<256x32xf32>
    %79 = arith.addf %73, %78 : vector<256x32xf32>
    %c0_39 = arith.constant 0 : index
    %c0_40 = arith.constant 0 : index
    %80 = vector.load %arg6[%c0_39, %c0_40] : memref<1x32xf32, #tpu.memory_space<vmem>>, vector<1x32xf32>
    %81 = vector.broadcast %80 : vector<1x32xf32> to vector<256x32xf32>
    %82 = arith.addf %79, %81 : vector<256x32xf32>
    %cst_41 = arith.constant 0.000000e+00 : f32
    %83 = vector.broadcast %cst_41 : f32 to vector<256x32xf32>
    %84 = arith.maximumf %82, %83 : vector<256x32xf32>
    %85 = vector.shape_cast %84 : vector<256x32xf32> to vector<1x16x16x32xf32>
    %c0_42 = arith.constant 0 : index
    %c0_43 = arith.constant 0 : index
    %c0_44 = arith.constant 0 : index
    %c0_45 = arith.constant 0 : index
    %86 = vector.load %arg7[%c0_42, %c0_43, %c0_44, %c0_45] : memref<1x16x16x32xf32, #tpu.memory_space<vmem>>, vector<1x16x16x32xf32>
    tpu.vector_store %arg7[%c0_42, %c0_43, %c0_44, %c0_45], %85 {strides = array<i32>} : memref<1x16x16x32xf32, #tpu.memory_space<vmem>>, vector<1x16x16x32xf32>,
    return
  }
  func.func @transform_0(%arg0: i32, %arg1: i32) -> (i32, i32, i32, i32) {
    %c0_i32 = arith.constant 0 : i32
    %c0_i32_0 = arith.constant 0 : i32
    %c0_i32_1 = arith.constant 0 : i32
    %c0_i32_2 = arith.constant 0 : i32
    return %arg0, %c0_i32, %c0_i32_0, %c0_i32_1 : i32, i32, i32, i32
  }
  func.func @transform_1(%arg0: i32, %arg1: i32) -> (i32, i32, i32) {
    %c0_i32 = arith.constant 0 : i32
    %c0_i32_0 = arith.constant 0 : i32
    %c0_i32_1 = arith.constant 0 : i32
    %c0_i32_2 = arith.constant 0 : i32
    return %c0_i32, %c0_i32_0, %c0_i32_1 : i32, i32, i32
  }
  func.func @transform_2(%arg0: i32, %arg1: i32) -> (i32, i32, i32) {
    %c0_i32 = arith.constant 0 : i32
    %c0_i32_0 = arith.constant 0 : i32
    %c0_i32_1 = arith.constant 0 : i32
    %c0_i32_2 = arith.constant 0 : i32
    return %c0_i32, %c0_i32_0, %c0_i32_1 : i32, i32, i32
  }
  func.func @transform_3(%arg0: i32, %arg1: i32) -> (i32, i32) {
    %c0_i32 = arith.constant 0 : i32
    %c0_i32_0 = arith.constant 0 : i32
    %c0_i32_1 = arith.constant 0 : i32
    return %c0_i32, %c0_i32_0 : i32, i32
  }
  func.func @transform_4(%arg0: i32, %arg1: i32) -> (i32, i32) {
    %c0_i32 = arith.constant 0 : i32
    %c0_i32_0 = arith.constant 0 : i32
    %c0_i32_1 = arith.constant 0 : i32
    return %c0_i32, %c0_i32_0 : i32, i32
  }
  func.func @transform_5(%arg0: i32, %arg1: i32) -> (i32, i32, i32, i32) {
    %c0_i32 = arith.constant 0 : i32
    %c0_i32_0 = arith.constant 0 : i32
    %c0_i32_1 = arith.constant 0 : i32
    return %arg0, %arg1, %c0_i32, %c0_i32_0 : i32, i32, i32, i32
  }
}

</mosaic_0001>

<llo_original>
// kernel: student_s32_forward.1
$region0: #{student_s32_forward.1}
  #allocation0 [shape = 'u32[]', space=smem, size = 0x4, offset = 0x4, fixed_abs, tag = 'smem constant byte address 0x4 - core index']
  #allocation1 [shape = 'u32[144,128]{1,0:T(1,128)}', space=vmem, size = 0x12000, scoped, tag = 'internal scratch']
  %s0 = inlined_call_operand.vmem [shape: bf16[2,20,18,32], index: 0, kind: input, shape index: {}]
  %s1 = inlined_call_operand.vmem [shape: bf16[3,96,32], index: 1, kind: input, shape index: {}]
  %s2 = inlined_call_operand.vmem [shape: bf16[3,96,32], index: 2, kind: input, shape index: {}]
  %s3 = inlined_call_operand.vmem [shape: f32[1,32], index: 3, kind: input, shape index: {}]
  %s4 = inlined_call_operand.vmem [shape: f32[1,32], index: 4, kind: input, shape index: {}]
  %s5 = inlined_call_operand.hbm [shape: f32[2,16,16,32], index: 5, kind: output, shape index: {}]
  %s6 = sld [smem:[#allocation0]]
  $region53: #{student_s32_forward.1} parent=0
    _
  %s8 = ssub.s32 1, %s6
  %s9 = scalar_select 0, %s8, %s6
  $region1: #{student_s32_forward.1} parent=0
    #allocation2 [shape = 'u8[262144]{0}', space=vmem, size = 0x40000, scoped, tag = 'output window, operand 0']
    #allocation3 [shape = 's32[2]{0}', space=sflag, size = 0x8, scoped, tag = 'scoped memory for student_s32_forward.1']
    %10 = vsyncpa [#allocation3], 0
    %s11 = scalar_lea.sflag [#allocation3], 1
    %12 = vsyncpa %s11, 0
    loop: start=0, step=1, limit=4
    $region2: #{student_s32_forward.1} parent=1 // loop_pre_header
      _
    $region3: #{student_s32_forward.1} parent=1 // loop_header
      %s14 = sphi 0, %s18
      %p15 = scmp.ge.s32.totalorder %s14, 4
      %s21 = sphi 0, %s33
      %s22 = sphi 0, %s29
      %s23 = sphi 0, %s21
      %s24 = sphi 0, %s22
      %s25 = sphi 0, %s23
      %s26 = sphi 0, %s24
      %s36 = sphi 0, %s38
      %s39 = sphi 0, %s36
      %s40 = sphi 0, %s39
      %s56 = sphi 0, %s40
      %s60 = sphi 0, %s60
      %s62 = sphi 0, %s60
      %s63 = sphi 0, %s62
      %s77 = sphi 0, %s63
      %s81 = sphi 0, %s81
      %s83 = sphi 0, %s81
      %s84 = sphi 0, %s83
      %s98 = sphi 0, %s84
      %s102 = sphi 0, %s102
      %s104 = sphi 0, %s102
      %s105 = sphi 0, %s104
      %s119 = sphi 0, %s105
      %s123 = sphi 0, %s123
      %s125 = sphi 0, %s123
      %s126 = sphi 0, %s125
      %s140 = sphi 0, %s126
      %s148 = sphi 0, %s150
      %s151 = sphi 0, %s148
      %s152 = sphi 0, %s151
      %s168 = sphi 0, %s152
    $region4: #{student_s32_forward.1} parent=1 // loop_header_branch
      %17 = sbr.rel (%p15) target = $region8
    $region5: #{student_s32_forward.1} parent=1 // loop_body
      %s19 = ssub.s32 %s14, 1
      %s20 = ssub.s32 %s14, 2
      %s27 = sadd.s32 1, %s22
      %p28 = scmp.ge.s32.totalorder %s27, 1
      %s29 = scalar_select %p28, 0, %s27
      %s30 = sadd.s32 1, %s21
      %s31 = scalar_select %p28, %s30, %s21
      %p32 = scmp.ge.s32.totalorder %s31, 2
      %s33 = scalar_select %p32, 0, %s31
      %s34 = ssub.s32 %s21, %s33
      %p35 = scmp.eq.s32.totalorder %s34, 0
      %s37 = sadd.s32 %s36, 1
      %s38 = scalar_select %p35, %s36, %s37
      %p41 = pneg %p35
      %p42 = scmp.eq.s32.totalorder %s14, 1
      %p43 = por %p41, %p42
      %p44 = scmp.ne.s32.totalorder %s36, %s39
      %p45 = scmp.eq.s32.totalorder %s14, 0
      %p46 = por %p44, %p45
      %p47 = scmp.ne.s32.totalorder %s36, %s39
      %p48 = scmp.eq.s32.totalorder %s19, 1
      %p49 = por %p47, %p48
      %p50 = scmp.ne.s32.totalorder %s39, %s40
      %p51 = scmp.eq.s32.totalorder %s19, 0
      %p52 = por %p50, %p51
      %p53 = scmp.ne.s32.totalorder %s39, %s40
      %p54 = scmp.eq.s32.totalorder %s20, 1
      %p55 = por %p53, %p54
      %p57 = scmp.ne.s32.totalorder %s40, %s56
      %p58 = scmp.eq.s32.totalorder %s20, 0
      %p59 = por %p57, %p58
      %s61 = sadd.s32 %s60, 1
      %p64 = scmp.eq.s32.totalorder %s14, 1
      %p65 = scmp.ne.s32.totalorder %s60, %s62
      %p66 = scmp.eq.s32.totalorder %s14, 0
      %p67 = por %p65, %p66
      %p68 = scmp.ne.s32.totalorder %s60, %s62
      %p69 = scmp.eq.s32.totalorder %s19, 1
      %p70 = por %p68, %p69
      %p71 = scmp.ne.s32.totalorder %s62, %s63
      %p72 = scmp.eq.s32.totalorder %s19, 0
      %p73 = por %p71, %p72
      %p74 = scmp.ne.s32.totalorder %s62, %s63
      %p75 = scmp.eq.s32.totalorder %s20, 1
      %p76 = por %p74, %p75
      %p78 = scmp.ne.s32.totalorder %s63, %s77
      %p79 = scmp.eq.s32.totalorder %s20, 0
      %p80 = por %p78, %p79
      %s82 = sadd.s32 %s81, 1
      %p85 = scmp.eq.s32.totalorder %s14, 1
      %p86 = scmp.ne.s32.totalorder %s81, %s83
      %p87 = scmp.eq.s32.totalorder %s14, 0
      %p88 = por %p86, %p87
      %p89 = scmp.ne.s32.totalorder %s81, %s83
      %p90 = scmp.eq.s32.totalorder %s19, 1
      %p91 = por %p89, %p90
      %p92 = scmp.ne.s32.totalorder %s83, %s84
      %p93 = scmp.eq.s32.totalorder %s19, 0
      %p94 = por %p92, %p93
      %p95 = scmp.ne.s32.totalorder %s83, %s84
      %p96 = scmp.eq.s32.totalorder %s20, 1
      %p97 = por %p95, %p96
      %p99 = scmp.ne.s32.totalorder %s84, %s98
      %p100 = scmp.eq.s32.totalorder %s20, 0
      %p101 = por %p99, %p100
      %s103 = sadd.s32 %s102, 1
      %p106 = scmp.eq.s32.totalorder %s14, 1
      %p107 = scmp.ne.s32.totalorder %s102, %s104
      %p108 = scmp.eq.s32.totalorder %s14, 0
      %p109 = por %p107, %p108
      %p110 = scmp.ne.s32.totalorder %s102, %s104
      %p111 = scmp.eq.s32.totalorder %s19, 1
      %p112 = por %p110, %p111
      %p113 = scmp.ne.s32.totalorder %s104, %s105
      %p114 = scmp.eq.s32.totalorder %s19, 0
      %p115 = por %p113, %p114
      %p116 = scmp.ne.s32.totalorder %s104, %s105
      %p117 = scmp.eq.s32.totalorder %s20, 1
      %p118 = por %p116, %p117
      %p120 = scmp.ne.s32.totalorder %s105, %s119
      %p121 = scmp.eq.s32.totalorder %s20, 0
      %p122 = por %p120, %p121
      %s124 = sadd.s32 %s123, 1
      %p127 = scmp.eq.s32.totalorder %s14, 1
      %p128 = scmp.ne.s32.totalorder %s123, %s125
      %p129 = scmp.eq.s32.totalorder %s14, 0
      %p130 = por %p128, %p129
      %p131 = scmp.ne.s32.totalorder %s123, %s125
      %p132 = scmp.eq.s32.totalorder %s19, 1
      %p133 = por %p131, %p132
      %p134 = scmp.ne.s32.totalorder %s125, %s126
      %p135 = scmp.eq.s32.totalorder %s19, 0
      %p136 = por %p134, %p135
      %p137 = scmp.ne.s32.totalorder %s125, %s126
      %p138 = scmp.eq.s32.totalorder %s20, 1
      %p139 = por %p137, %p138
      %p141 = scmp.ne.s32.totalorder %s126, %s140
      %p142 = scmp.eq.s32.totalorder %s20, 0
      %p143 = por %p141, %p142
      %s144 = ssub.s32 %s21, %s33
      %s145 = ssub.s32 %s22, %s29
      %s146 = sor.u32 %s144, %s145
      %p147 = scmp.eq.s32.totalorder %s146, 0
      %s149 = sadd.s32 %s148, 1
      %s150 = scalar_select %p147, %s148, %s149
      %p153 = pneg %p147
      %p154 = scmp.eq.s32.totalorder %s14, 1
      %p155 = por %p153, %p154
      %p156 = scmp.ne.s32.totalorder %s148, %s151
      %p157 = scmp.eq.s32.totalorder %s14, 0
      %p158 = por %p156, %p157
      %p159 = scmp.ne.s32.totalorder %s148, %s151
      %p160 = scmp.eq.s32.totalorder %s19, 1
      %p161 = por %p159, %p160
      %p162 = scmp.ne.s32.totalorder %s151, %s152
      %p163 = scmp.eq.s32.totalorder %s19, 0
      %p164 = por %p162, %p163
      %p165 = scmp.ne.s32.totalorder %s151, %s152
      %p166 = scmp.eq.s32.totalorder %s20, 1
      %p167 = por %p165, %p166
      %p169 = scmp.ne.s32.totalorder %s152, %s168
      %p170 = scmp.eq.s32.totalorder %s20, 0
      %p171 = por %p169, %p170
      %p172 = scmp.le.s32.totalorder 1, %s14
      %p173 = scmp.lt.s32.totalorder %s14, 3
      %p174 = pnand %p172, %p173
      %p175 = pneg %p174
      // Predicated region
      $region9: #{student_s32_forward.1} parent=5 // pred_check
        _
      $region10: #{student_s32_forward.1} parent=5 // pred_check_branch
        %177 = sbr.rel (%p174) target = $region12
      $region11: #{student_s32_forward.1} parent=5 // pred_region
        %s178 = ssub.s32 %s14, 1
        // Predicated region
        $region13: #{student_s32_forward.1} parent=11 // pred_check
          %p179 = pneg %p73
        $region14: #{student_s32_forward.1} parent=11 // pred_check_branch
          %181 = sbr.rel (%p179) target = $region16
        $region15: #{student_s32_forward.1} parent=11 // pred_region
          _
        $region16: #{student_s32_forward.1} parent=11 // pred_fallthru
          _
        // Predicated region
        $region17: #{student_s32_forward.1} parent=11 // pred_check
          %p182 = pneg %p94
        $region18: #{student_s32_forward.1} parent=11 // pred_check_branch
          %184 = sbr.rel (%p182) target = $region20
        $region19: #{student_s32_forward.1} parent=11 // pred_region
          _
        $region20: #{student_s32_forward.1} parent=11 // pred_fallthru
          _
        // Predicated region
        $region21: #{student_s32_forward.1} parent=11 // pred_check
          %p185 = pneg %p115
        $region22: #{student_s32_forward.1} parent=11 // pred_check_branch
          %187 = sbr.rel (%p185) target = $region24
        $region23: #{student_s32_forward.1} parent=11 // pred_region
          _
        $region24: #{student_s32_forward.1} parent=11 // pred_fallthru
          _
        // Predicated region
        $region25: #{student_s32_forward.1} parent=11 // pred_check
          %p188 = pneg %p136
        $region26: #{student_s32_forward.1} parent=11 // pred_check_branch
          %190 = sbr.rel (%p188) target = $region28
        $region27: #{student_s32_forward.1} parent=11 // pred_region
          _
        $region28: #{student_s32_forward.1} parent=11 // pred_fallthru
          _
      $region12: #{student_s32_forward.1} parent=5 // pred_fallthru
        _
      %p191 = scmp.lt.s32.totalorder %s14, 2
      // Predicated region
      $region29: #{student_s32_forward.1} parent=5 // pred_check
        %p192 = pneg %p191
      $region30: #{student_s32_forward.1} parent=5 // pred_check_branch
        %194 = sbr.rel (%p192) target = $region32
      $region31: #{student_s32_forward.1} parent=5 // pred_region
        // Predicated region
        $region33: #{student_s32_forward.1} parent=31 // pred_check
          %p195 = pneg %p46
        $region34: #{student_s32_forward.1} parent=31 // pred_check_branch
          %197 = sbr.rel (%p195) target = $region36
        $region35: #{student_s32_forward.1} parent=31 // pred_region
          %p198 = scmp.lt.s32.totalorder %s21, 1
          %s199 = scalar_select %p198, %s21, 1
          %s200 = smul.addr %s199, 60
          %s201 = smul.addr %s200, 4
          %s202 = scalar_lea.vmem %s0, %s201
        $region36: #{student_s32_forward.1} parent=31 // pred_fallthru
          _
      $region32: #{student_s32_forward.1} parent=5 // pred_fallthru
        _
      %p203 = scmp.le.s32.totalorder 1, %s14
      %p204 = scmp.lt.s32.totalorder %s14, 3
      %p205 = pnand %p203, %p204
      %p206 = pneg %p205
      // Predicated region
      $region37: #{student_s32_forward.1} parent=5 // pred_check
        _
      $region38: #{student_s32_forward.1} parent=5 // pred_check_branch
        %208 = sbr.rel (%p205) target = $region40
      $region39: #{student_s32_forward.1} parent=5 // pred_region
        %s209 = ssub.s32 %s14, 1
        %p210 = scmp.lt.s32.totalorder %s23, 1
        %s211 = scalar_select %p210, %s23, 1
        %s212 = smul.addr %s211, 60
        %s213 = smul.addr %s212, 4
        %s214 = scalar_lea.vmem %s0, %s213
        %p215 = pneg %p52
        %p216 = pneg %p49
        %p217 = pneg %p73
        %p218 = pneg %p70
        %p219 = pneg %p94
        %p220 = pneg %p91
        %p221 = pneg %p115
        %p222 = pneg %p112
        %p223 = pneg %p136
        %p224 = pneg %p133
        %p225 = pneg %p164
        %p226 = pneg %p161
        %s227 = sand.u32 %s151, 1
        %s228 = scalar_lea.sflag [#allocation3], %s227
        %s229 = sand.u32 %s151, 1
        %s230 = smul.addr %s229, 256
        %s231 = scalar_lea.vmem [#allocation2], %s230
        %p232 = scmp.lt.s32.totalorder %s23, 1
        %s233 = scalar_select %p232, %s23, 1
        %s234 = smul.addr %s233, 60
        %s235 = smul.addr %s234, 4
        %s236 = scalar_lea.vmem %s0, %s235
        %s237 = smul.u32 16, %s24
        %s239 = smul.u32 %s24, 16
        %s240 = smul.u32 %s239, 3
        %s241 = smul.addr %s240, 4
        %s242 = scalar_lea.vmem %s236, %s241
        %v243 = vld [vmem:[%s242] sm:$0xf]
        %v244 = vld [vmem:[%s242 + $0x4] sm:$0xf]
        %v245 = vld [vmem:[%s242 + $0x8] sm:$0x1]
        %v246 = vld [vmem:[%s242 + $0xc] sm:$0xf]
        %v247 = vld [vmem:[%s242 + $0x10] sm:$0xf]
        %v248 = vld [vmem:[%s242 + $0x14] sm:$0x1]
        %v249 = vld [vmem:[%s242 + $0x18] sm:$0xf]
        %v250 = vld [vmem:[%s242 + $0x1c] sm:$0xf]
        %v251 = vld [vmem:[%s242 + $0x20] sm:$0x1]
        %v252 = vld [vmem:[%s242 + $0x24] sm:$0xf]
        %v253 = vld [vmem:[%s242 + $0x28] sm:$0xf]
        %v254 = vld [vmem:[%s242 + $0x2c] sm:$0x1]
        %v255 = vld [vmem:[%s242 + $0x30] sm:$0xf]
        %v256 = vld [vmem:[%s242 + $0x34] sm:$0xf]
        %v257 = vld [vmem:[%s242 + $0x38] sm:$0x1]
        %v258 = vld [vmem:[%s242 + $0x3c] sm:$0xf]
        %v259 = vld [vmem:[%s242 + $0x40] sm:$0xf]
        %v260 = vld [vmem:[%s242 + $0x44] sm:$0x1]
        %v261 = vld [vmem:[%s242 + $0x48] sm:$0xf]
        %v262 = vld [vmem:[%s242 + $0x4c] sm:$0xf]
        %v263 = vld [vmem:[%s242 + $0x50] sm:$0x1]
        %v264 = vld [vmem:[%s242 + $0x54] sm:$0xf]
        %v265 = vld [vmem:[%s242 + $0x58] sm:$0xf]
        %v266 = vld [vmem:[%s242 + $0x5c] sm:$0x1]
        %v267 = vld [vmem:[%s242 + $0x60] sm:$0xf]
        %v268 = vld [vmem:[%s242 + $0x64] sm:$0xf]
        %v269 = vld [vmem:[%s242 + $0x68] sm:$0x1]
        %v270 = vld [vmem:[%s242 + $0x6c] sm:$0xf]
        %v271 = vld [vmem:[%s242 + $0x70] sm:$0xf]
        %v272 = vld [vmem:[%s242 + $0x74] sm:$0x1]
        %v273 = vld [vmem:[%s242 + $0x78] sm:$0xf]
        %v274 = vld [vmem:[%s242 + $0x7c] sm:$0xf]
        %v275 = vld [vmem:[%s242 + $0x80] sm:$0x1]
        %v276 = vld [vmem:[%s242 + $0x84] sm:$0xf]
        %v277 = vld [vmem:[%s242 + $0x88] sm:$0xf]
        %v278 = vld [vmem:[%s242 + $0x8c] sm:$0x1]
        %v279 = vld [vmem:[%s242 + $0x90] sm:$0xf]
        %v280 = vld [vmem:[%s242 + $0x94] sm:$0xf]
        %v281 = vld [vmem:[%s242 + $0x98] sm:$0x1]
        %v282 = vld [vmem:[%s242 + $0x9c] sm:$0xf]
        %v283 = vld [vmem:[%s242 + $0xa0] sm:$0xf]
        %v284 = vld [vmem:[%s242 + $0xa4] sm:$0x1]
        %v285 = vld [vmem:[%s242 + $0xa8] sm:$0xf]
        %v286 = vld [vmem:[%s242 + $0xac] sm:$0xf]
        %v287 = vld [vmem:[%s242 + $0xb0] sm:$0x1]
        %v288 = vld [vmem:[%s242 + $0xb4] sm:$0xf]
        %v289 = vld [vmem:[%s242 + $0xb8] sm:$0xf]
        %v290 = vld [vmem:[%s242 + $0xbc] sm:$0x1]
        %v291 = vld [vmem:[%s242 + $0xc0] sm:$0xf]
        %v292 = vld [vmem:[%s242 + $0xc4] sm:$0xf]
        %v293 = vld [vmem:[%s242 + $0xc8] sm:$0x1]
        %v294 = vld [vmem:[%s242 + $0xcc] sm:$0xf]
        %v295 = vld [vmem:[%s242 + $0xd0] sm:$0xf]
        %v296 = vld [vmem:[%s242 + $0xd4] sm:$0x1]
        %s297 = sadd.s32 %s239, 1
        %s298 = smul.u32 %s297, 3
        %s299 = smul.addr %s298, 4
        %s300 = scalar_lea.vmem %s236, %s299
        %v301 = vld [vmem:[%s300] sm:$0xf]
        %v302 = vld [vmem:[%s300 + $0x4] sm:$0xf]
        %v303 = vld [vmem:[%s300 + $0x8] sm:$0x1]
        %v304 = vld [vmem:[%s300 + $0xc] sm:$0xf]
        %v305 = vld [vmem:[%s300 + $0x10] sm:$0xf]
        %v306 = vld [vmem:[%s300 + $0x14] sm:$0x1]
        %v307 = vld [vmem:[%s300 + $0x18] sm:$0xf]
        %v308 = vld [vmem:[%s300 + $0x1c] sm:$0xf]
        %v309 = vld [vmem:[%s300 + $0x20] sm:$0x1]
        %v310 = vld [vmem:[%s300 + $0x24] sm:$0xf]
        %v311 = vld [vmem:[%s300 + $0x28] sm:$0xf]
        %v312 = vld [vmem:[%s300 + $0x2c] sm:$0x1]
        %v313 = vld [vmem:[%s300 + $0x30] sm:$0xf]
        %v314 = vld [vmem:[%s300 + $0x34] sm:$0xf]
        %v315 = vld [vmem:[%s300 + $0x38] sm:$0x1]
        %v316 = vld [vmem:[%s300 + $0x3c] sm:$0xf]
        %v317 = vld [vmem:[%s300 + $0x40] sm:$0xf]
        %v318 = vld [vmem:[%s300 + $0x44] sm:$0x1]
        %v319 = vld [vmem:[%s300 + $0x48] sm:$0xf]
        %v320 = vld [vmem:[%s300 + $0x4c] sm:$0xf]
        %v321 = vld [vmem:[%s300 + $0x50] sm:$0x1]
        %v322 = vld [vmem:[%s300 + $0x54] sm:$0xf]
        %v323 = vld [vmem:[%s300 + $0x58] sm:$0xf]
        %v324 = vld [vmem:[%s300 + $0x5c] sm:$0x1]
        %v325 = vld [vmem:[%s300 + $0x60] sm:$0xf]
        %v326 = vld [vmem:[%s300 + $0x64] sm:$0xf]
        %v327 = vld [vmem:[%s300 + $0x68] sm:$0x1]
        %v328 = vld [vmem:[%s300 + $0x6c] sm:$0xf]
        %v329 = vld [vmem:[%s300 + $0x70] sm:$0xf]
        %v330 = vld [vmem:[%s300 + $0x74] sm:$0x1]
        %v331 = vld [vmem:[%s300 + $0x78] sm:$0xf]
        %v332 = vld [vmem:[%s300 + $0x7c] sm:$0xf]
        %v333 = vld [vmem:[%s300 + $0x80] sm:$0x1]
        %v334 = vld [vmem:[%s300 + $0x84] sm:$0xf]
        %v335 = vld [vmem:[%s300 + $0x88] sm:$0xf]
        %v336 = vld [vmem:[%s300 + $0x8c] sm:$0x1]
        %v337 = vld [vmem:[%s300 + $0x90] sm:$0xf]
        %v338 = vld [vmem:[%s300 + $0x94] sm:$0xf]
        %v339 = vld [vmem:[%s300 + $0x98] sm:$0x1]
        %v340 = vld [vmem:[%s300 + $0x9c] sm:$0xf]
        %v341 = vld [vmem:[%s300 + $0xa0] sm:$0xf]
        %v342 = vld [vmem:[%s300 + $0xa4] sm:$0x1]
        %v343 = vld [vmem:[%s300 + $0xa8] sm:$0xf]
        %v344 = vld [vmem:[%s300 + $0xac] sm:$0xf]
        %v345 = vld [vmem:[%s300 + $0xb0] sm:$0x1]
        %v346 = vld [vmem:[%s300 + $0xb4] sm:$0xf]
        %v347 = vld [vmem:[%s300 + $0xb8] sm:$0xf]
        %v348 = vld [vmem:[%s300 + $0xbc] sm:$0x1]
        %v349 = vld [vmem:[%s300 + $0xc0] sm:$0xf]
        %v350 = vld [vmem:[%s300 + $0xc4] sm:$0xf]
        %v351 = vld [vmem:[%s300 + $0xc8] sm:$0x1]
        %v352 = vld [vmem:[%s300 + $0xcc] sm:$0xf]
        %v353 = vld [vmem:[%s300 + $0xd0] sm:$0xf]
        %v354 = vld [vmem:[%s300 + $0xd4] sm:$0x1]
        %s355 = sadd.s32 %s239, 2
        %s356 = smul.u32 %s355, 3
        %s357 = smul.addr %s356, 4
        %s358 = scalar_lea.vmem %s236, %s357
        %v359 = vld [vmem:[%s358] sm:$0xf]
        %v360 = vld [vmem:[%s358 + $0x4] sm:$0xf]
        %v361 = vld [vmem:[%s358 + $0x8] sm:$0x1]
        %v362 = vld [vmem:[%s358 + $0xc] sm:$0xf]
        %v363 = vld [vmem:[%s358 + $0x10] sm:$0xf]
        %v364 = vld [vmem:[%s358 + $0x14] sm:$0x1]
        %v365 = vld [vmem:[%s358 + $0x18] sm:$0xf]
        %v366 = vld [vmem:[%s358 + $0x1c] sm:$0xf]
        %v367 = vld [vmem:[%s358 + $0x20] sm:$0x1]
        %v368 = vld [vmem:[%s358 + $0x24] sm:$0xf]
        %v369 = vld [vmem:[%s358 + $0x28] sm:$0xf]
        %v370 = vld [vmem:[%s358 + $0x2c] sm:$0x1]
        %v371 = vld [vmem:[%s358 + $0x30] sm:$0xf]
        %v372 = vld [vmem:[%s358 + $0x34] sm:$0xf]
        %v373 = vld [vmem:[%s358 + $0x38] sm:$0x1]
        %v374 = vld [vmem:[%s358 + $0x3c] sm:$0xf]
        %v375 = vld [vmem:[%s358 + $0x40] sm:$0xf]
        %v376 = vld [vmem:[%s358 + $0x44] sm:$0x1]
        %v377 = vld [vmem:[%s358 + $0x48] sm:$0xf]
        %v378 = vld [vmem:[%s358 + $0x4c] sm:$0xf]
        %v379 = vld [vmem:[%s358 + $0x50] sm:$0x1]
        %v380 = vld [vmem:[%s358 + $0x54] sm:$0xf]
        %v381 = vld [vmem:[%s358 + $0x58] sm:$0xf]
        %v382 = vld [vmem:[%s358 + $0x5c] sm:$0x1]
        %v383 = vld [vmem:[%s358 + $0x60] sm:$0xf]
        %v384 = vld [vmem:[%s358 + $0x64] sm:$0xf]
        %v385 = vld [vmem:[%s358 + $0x68] sm:$0x1]
        %v386 = vld [vmem:[%s358 + $0x6c] sm:$0xf]
        %v387 = vld [vmem:[%s358 + $0x70] sm:$0xf]
        %v388 = vld [vmem:[%s358 + $0x74] sm:$0x1]
        %v389 = vld [vmem:[%s358 + $0x78] sm:$0xf]
        %v390 = vld [vmem:[%s358 + $0x7c] sm:$0xf]
        %v391 = vld [vmem:[%s358 + $0x80] sm:$0x1]
        %v392 = vld [vmem:[%s358 + $0x84] sm:$0xf]
        %v393 = vld [vmem:[%s358 + $0x88] sm:$0xf]
        %v394 = vld [vmem:[%s358 + $0x8c] sm:$0x1]
        %v395 = vld [vmem:[%s358 + $0x90] sm:$0xf]
        %v396 = vld [vmem:[%s358 + $0x94] sm:$0xf]
        %v397 = vld [vmem:[%s358 + $0x98] sm:$0x1]
        %v398 = vld [vmem:[%s358 + $0x9c] sm:$0xf]
        %v399 = vld [vmem:[%s358 + $0xa0] sm:$0xf]
        %v400 = vld [vmem:[%s358 + $0xa4] sm:$0x1]
        %v401 = vld [vmem:[%s358 + $0xa8] sm:$0xf]
        %v402 = vld [vmem:[%s358 + $0xac] sm:$0xf]
        %v403 = vld [vmem:[%s358 + $0xb0] sm:$0x1]
        %v404 = vld [vmem:[%s358 + $0xb4] sm:$0xf]
        %v405 = vld [vmem:[%s358 + $0xb8] sm:$0xf]
        %v406 = vld [vmem:[%s358 + $0xbc] sm:$0x1]
        %v407 = vld [vmem:[%s358 + $0xc0] sm:$0xf]
        %v408 = vld [vmem:[%s358 + $0xc4] sm:$0xf]
        %v409 = vld [vmem:[%s358 + $0xc8] sm:$0x1]
        %v410 = vld [vmem:[%s358 + $0xcc] sm:$0xf]
        %v411 = vld [vmem:[%s358 + $0xd0] sm:$0xf]
        %v412 = vld [vmem:[%s358 + $0xd4] sm:$0x1]
        %v467 = vunpack.c.l.b16 %v243
        %v468 = vunpack.c.l.b16 %v244
        %v469 = vunpack.c.l.b16 %v245
        %v470 = vunpack.c.l.b16 %v246
        %v471 = vunpack.c.l.b16 %v247
        %v472 = vunpack.c.l.b16 %v248
        %v473 = vunpack.c.l.b16 %v249
        %v474 = vunpack.c.l.b16 %v250
        %v475 = vunpack.c.l.b16 %v251
        %v476 = vunpack.c.l.b16 %v252
        %v477 = vunpack.c.l.b16 %v253
        %v478 = vunpack.c.l.b16 %v254
        %v479 = vunpack.c.l.b16 %v255
        %v480 = vunpack.c.l.b16 %v256
        %v481 = vunpack.c.l.b16 %v257
        %v482 = vunpack.c.l.b16 %v258
        %v483 = vunpack.c.l.b16 %v259
        %v484 = vunpack.c.l.b16 %v260
        %v485 = vunpack.c.l.b16 %v261
        %v486 = vunpack.c.l.b16 %v262
        %v487 = vunpack.c.l.b16 %v263
        %v488 = vunpack.c.l.b16 %v264
        %v489 = vunpack.c.l.b16 %v265
        %v490 = vunpack.c.l.b16 %v266
        %v491 = vunpack.c.l.b16 %v267
        %v492 = vunpack.c.l.b16 %v268
        %v493 = vunpack.c.l.b16 %v269
        %v494 = vunpack.c.l.b16 %v270
        %v495 = vunpack.c.l.b16 %v271
        %v496 = vunpack.c.l.b16 %v272
        %v497 = vunpack.c.l.b16 %v273
        %v498 = vunpack.c.l.b16 %v274
        %v499 = vunpack.c.l.b16 %v275
        %v500 = vunpack.c.l.b16 %v276
        %v501 = vunpack.c.l.b16 %v277
        %v502 = vunpack.c.l.b16 %v278
        %v503 = vunpack.c.l.b16 %v279
        %v504 = vunpack.c.l.b16 %v280
        %v505 = vunpack.c.l.b16 %v281
        %v506 = vunpack.c.l.b16 %v282
        %v507 = vunpack.c.l.b16 %v283
        %v508 = vunpack.c.l.b16 %v284
        %v509 = vunpack.c.l.b16 %v285
        %v510 = vunpack.c.l.b16 %v286
        %v511 = vunpack.c.l.b16 %v287
        %v512 = vunpack.c.l.b16 %v288
        %v513 = vunpack.c.l.b16 %v289
        %v514 = vunpack.c.l.b16 %v290
        %v515 = vunpack.c.l.b16 %v291
        %v516 = vunpack.c.l.b16 %v292
        %v517 = vunpack.c.l.b16 %v293
        %v518 = vunpack.c.l.b16 %v294
        %v519 = vunpack.c.l.b16 %v295
        %v520 = vunpack.c.l.b16 %v296
        %v521 = vpack.c.b16 %v468, %v467
        %v522 = vpack.c.b16 %v469, %v469
        %v523 = vpack.c.b16 %v471, %v470
        %v524 = vpack.c.b16 %v472, %v472
        %v525 = vpack.c.b16 %v474, %v473
        %v526 = vpack.c.b16 %v475, %v475
        %v527 = vpack.c.b16 %v477, %v476
        %v528 = vpack.c.b16 %v478, %v478
        %v529 = vpack.c.b16 %v480, %v479
        %v530 = vpack.c.b16 %v481, %v481
        %v531 = vpack.c.b16 %v483, %v482
        %v532 = vpack.c.b16 %v484, %v484
        %v533 = vpack.c.b16 %v486, %v485
        %v534 = vpack.c.b16 %v487, %v487
        %v535 = vpack.c.b16 %v489, %v488
        %v536 = vpack.c.b16 %v490, %v490
        %v537 = vpack.c.b16 %v492, %v491
        %v538 = vpack.c.b16 %v493, %v493
        %v539 = vpack.c.b16 %v495, %v494
        %v540 = vpack.c.b16 %v496, %v496
        %v541 = vpack.c.b16 %v498, %v497
        %v542 = vpack.c.b16 %v499, %v499
        %v543 = vpack.c.b16 %v501, %v500
        %v544 = vpack.c.b16 %v502, %v502
        %v545 = vpack.c.b16 %v504, %v503
        %v546 = vpack.c.b16 %v505, %v505
        %v547 = vpack.c.b16 %v507, %v506
        %v548 = vpack.c.b16 %v508, %v508
        %v549 = vpack.c.b16 %v510, %v509
        %v550 = vpack.c.b16 %v511, %v511
        %v551 = vpack.c.b16 %v513, %v512
        %v552 = vpack.c.b16 %v514, %v514
        %v553 = vpack.c.b16 %v516, %v515
        %v554 = vpack.c.b16 %v517, %v517
        %v555 = vpack.c.b16 %v519, %v518
        %v556 = vpack.c.b16 %v520, %v520
        %v611 = vunpack.c.l.b16 %v301
        %v612 = vunpack.c.l.b16 %v302
        %v613 = vunpack.c.l.b16 %v303
        %v614 = vunpack.c.l.b16 %v304
        %v615 = vunpack.c.l.b16 %v305
        %v616 = vunpack.c.l.b16 %v306
        %v617 = vunpack.c.l.b16 %v307
        %v618 = vunpack.c.l.b16 %v308
        %v619 = vunpack.c.l.b16 %v309
        %v620 = vunpack.c.l.b16 %v310
        %v621 = vunpack.c.l.b16 %v311
        %v622 = vunpack.c.l.b16 %v312
        %v623 = vunpack.c.l.b16 %v313
        %v624 = vunpack.c.l.b16 %v314
        %v625 = vunpack.c.l.b16 %v315
        %v626 = vunpack.c.l.b16 %v316
        %v627 = vunpack.c.l.b16 %v317
        %v628 = vunpack.c.l.b16 %v318
        %v629 = vunpack.c.l.b16 %v319
        %v630 = vunpack.c.l.b16 %v320
        %v631 = vunpack.c.l.b16 %v321
        %v632 = vunpack.c.l.b16 %v322
        %v633 = vunpack.c.l.b16 %v323
        %v634 = vunpack.c.l.b16 %v324
        %v635 = vunpack.c.l.b16 %v325
        %v636 = vunpack.c.l.b16 %v326
        %v637 = vunpack.c.l.b16 %v327
        %v638 = vunpack.c.l.b16 %v328
        %v639 = vunpack.c.l.b16 %v329
        %v640 = vunpack.c.l.b16 %v330
        %v641 = vunpack.c.l.b16 %v331
        %v642 = vunpack.c.l.b16 %v332
        %v643 = vunpack.c.l.b16 %v333
        %v644 = vunpack.c.l.b16 %v334
        %v645 = vunpack.c.l.b16 %v335
        %v646 = vunpack.c.l.b16 %v336
        %v647 = vunpack.c.l.b16 %v337
        %v648 = vunpack.c.l.b16 %v338
        %v649 = vunpack.c.l.b16 %v339
        %v650 = vunpack.c.l.b16 %v340
        %v651 = vunpack.c.l.b16 %v341
        %v652 = vunpack.c.l.b16 %v342
        %v653 = vunpack.c.l.b16 %v343
        %v654 = vunpack.c.l.b16 %v344
        %v655 = vunpack.c.l.b16 %v345
        %v656 = vunpack.c.l.b16 %v346
        %v657 = vunpack.c.l.b16 %v347
        %v658 = vunpack.c.l.b16 %v348
        %v659 = vunpack.c.l.b16 %v349
        %v660 = vunpack.c.l.b16 %v350
        %v661 = vunpack.c.l.b16 %v351
        %v662 = vunpack.c.l.b16 %v352
        %v663 = vunpack.c.l.b16 %v353
        %v664 = vunpack.c.l.b16 %v354
        %v665 = vpack.c.b16 %v612, %v611
        %v666 = vpack.c.b16 %v613, %v613
        %v667 = vpack.c.b16 %v615, %v614
        %v668 = vpack.c.b16 %v616, %v616
        %v669 = vpack.c.b16 %v618, %v617
        %v670 = vpack.c.b16 %v619, %v619
        %v671 = vpack.c.b16 %v621, %v620
        %v672 = vpack.c.b16 %v622, %v622
        %v673 = vpack.c.b16 %v624, %v623
        %v674 = vpack.c.b16 %v625, %v625
        %v675 = vpack.c.b16 %v627, %v626
        %v676 = vpack.c.b16 %v628, %v628
        %v677 = vpack.c.b16 %v630, %v629
        %v678 = vpack.c.b16 %v631, %v631
        %v679 = vpack.c.b16 %v633, %v632
        %v680 = vpack.c.b16 %v634, %v634
        %v681 = vpack.c.b16 %v636, %v635
        %v682 = vpack.c.b16 %v637, %v637
        %v683 = vpack.c.b16 %v639, %v638
        %v684 = vpack.c.b16 %v640, %v640
        %v685 = vpack.c.b16 %v642, %v641
        %v686 = vpack.c.b16 %v643, %v643
        %v687 = vpack.c.b16 %v645, %v644
        %v688 = vpack.c.b16 %v646, %v646
        %v689 = vpack.c.b16 %v648, %v647
        %v690 = vpack.c.b16 %v649, %v649
        %v691 = vpack.c.b16 %v651, %v650
        %v692 = vpack.c.b16 %v652, %v652
        %v693 = vpack.c.b16 %v654, %v653
        %v694 = vpack.c.b16 %v655, %v655
        %v695 = vpack.c.b16 %v657, %v656
        %v696 = vpack.c.b16 %v658, %v658
        %v697 = vpack.c.b16 %v660, %v659
        %v698 = vpack.c.b16 %v661, %v661
        %v699 = vpack.c.b16 %v663, %v662
        %v700 = vpack.c.b16 %v664, %v664
        %701 = vrot.lane.b32.xlu0 %v665, 32
        %v702 = vpop.permute.xlu0 %701
        %703 = vrot.lane.b32.xlu0 %v666, 32
        %v704 = vpop.permute.xlu0 %703
        %705 = vrot.lane.b32.xlu0 %v667, 32
        %v706 = vpop.permute.xlu0 %705
        %707 = vrot.lane.b32.xlu0 %v668, 32
        %v708 = vpop.permute.xlu0 %707
        %709 = vrot.lane.b32.xlu0 %v669, 32
        %v710 = vpop.permute.xlu0 %709
        %711 = vrot.lane.b32.xlu0 %v670, 32
        %v712 = vpop.permute.xlu0 %711
        %713 = vrot.lane.b32.xlu0 %v671, 32
        %v714 = vpop.permute.xlu0 %713
        %715 = vrot.lane.b32.xlu0 %v672, 32
        %v716 = vpop.permute.xlu0 %715
        %717 = vrot.lane.b32.xlu0 %v673, 32
        %v718 = vpop.permute.xlu0 %717
        %719 = vrot.lane.b32.xlu0 %v674, 32
        %v720 = vpop.permute.xlu0 %719
        %721 = vrot.lane.b32.xlu0 %v675, 32
        %v722 = vpop.permute.xlu0 %721
        %723 = vrot.lane.b32.xlu0 %v676, 32
        %v724 = vpop.permute.xlu0 %723
        %725 = vrot.lane.b32.xlu0 %v677, 32
        %v726 = vpop.permute.xlu0 %725
        %727 = vrot.lane.b32.xlu0 %v678, 32
        %v728 = vpop.permute.xlu0 %727
        %729 = vrot.lane.b32.xlu0 %v679, 32
        %v730 = vpop.permute.xlu0 %729
        %731 = vrot.lane.b32.xlu0 %v680, 32
        %v732 = vpop.permute.xlu0 %731
        %733 = vrot.lane.b32.xlu0 %v681, 32
        %v734 = vpop.permute.xlu0 %733
        %735 = vrot.lane.b32.xlu0 %v682, 32
        %v736 = vpop.permute.xlu0 %735
        %737 = vrot.lane.b32.xlu0 %v683, 32
        %v738 = vpop.permute.xlu0 %737
        %739 = vrot.lane.b32.xlu0 %v684, 32
        %v740 = vpop.permute.xlu0 %739
        %741 = vrot.lane.b32.xlu0 %v685, 32
        %v742 = vpop.permute.xlu0 %741
        %743 = vrot.lane.b32.xlu0 %v686, 32
        %v744 = vpop.permute.xlu0 %743
        %745 = vrot.lane.b32.xlu0 %v687, 32
        %v746 = vpop.permute.xlu0 %745
        %747 = vrot.lane.b32.xlu0 %v688, 32
        %v748 = vpop.permute.xlu0 %747
        %749 = vrot.lane.b32.xlu0 %v689, 32
        %v750 = vpop.permute.xlu0 %749
        %751 = vrot.lane.b32.xlu0 %v690, 32
        %v752 = vpop.permute.xlu0 %751
        %753 = vrot.lane.b32.xlu0 %v691, 32
        %v754 = vpop.permute.xlu0 %753
        %755 = vrot.lane.b32.xlu0 %v692, 32
        %v756 = vpop.permute.xlu0 %755
        %757 = vrot.lane.b32.xlu0 %v693, 32
        %v758 = vpop.permute.xlu0 %757
        %759 = vrot.lane.b32.xlu0 %v694, 32
        %v760 = vpop.permute.xlu0 %759
        %761 = vrot.lane.b32.xlu0 %v695, 32
        %v762 = vpop.permute.xlu0 %761
        %763 = vrot.lane.b32.xlu0 %v696, 32
        %v764 = vpop.permute.xlu0 %763
        %765 = vrot.lane.b32.xlu0 %v697, 32
        %v766 = vpop.permute.xlu0 %765
        %767 = vrot.lane.b32.xlu0 %v698, 32
        %v768 = vpop.permute.xlu0 %767
        %769 = vrot.lane.b32.xlu0 %v699, 32
        %v770 = vpop.permute.xlu0 %769
        %771 = vrot.lane.b32.xlu0 %v700, 32
        %v772 = vpop.permute.xlu0 %771
        %v827 = vunpack.c.l.b16 %v359
        %v828 = vunpack.c.l.b16 %v360
        %v829 = vunpack.c.l.b16 %v361
        %v830 = vunpack.c.l.b16 %v362
        %v831 = vunpack.c.l.b16 %v363
        %v832 = vunpack.c.l.b16 %v364
        %v833 = vunpack.c.l.b16 %v365
        %v834 = vunpack.c.l.b16 %v366
        %v835 = vunpack.c.l.b16 %v367
        %v836 = vunpack.c.l.b16 %v368
        %v837 = vunpack.c.l.b16 %v369
        %v838 = vunpack.c.l.b16 %v370
        %v839 = vunpack.c.l.b16 %v371
        %v840 = vunpack.c.l.b16 %v372
        %v841 = vunpack.c.l.b16 %v373
        %v842 = vunpack.c.l.b16 %v374
        %v843 = vunpack.c.l.b16 %v375
        %v844 = vunpack.c.l.b16 %v376
        %v845 = vunpack.c.l.b16 %v377
        %v846 = vunpack.c.l.b16 %v378
        %v847 = vunpack.c.l.b16 %v379
        %v848 = vunpack.c.l.b16 %v380
        %v849 = vunpack.c.l.b16 %v381
        %v850 = vunpack.c.l.b16 %v382
        %v851 = vunpack.c.l.b16 %v383
        %v852 = vunpack.c.l.b16 %v384
        %v853 = vunpack.c.l.b16 %v385
        %v854 = vunpack.c.l.b16 %v386
        %v855 = vunpack.c.l.b16 %v387
        %v856 = vunpack.c.l.b16 %v388
        %v857 = vunpack.c.l.b16 %v389
        %v858 = vunpack.c.l.b16 %v390
        %v859 = vunpack.c.l.b16 %v391
        %v860 = vunpack.c.l.b16 %v392
        %v861 = vunpack.c.l.b16 %v393
        %v862 = vunpack.c.l.b16 %v394
        %v863 = vunpack.c.l.b16 %v395
        %v864 = vunpack.c.l.b16 %v396
        %v865 = vunpack.c.l.b16 %v397
        %v866 = vunpack.c.l.b16 %v398
        %v867 = vunpack.c.l.b16 %v399
        %v868 = vunpack.c.l.b16 %v400
        %v869 = vunpack.c.l.b16 %v401
        %v870 = vunpack.c.l.b16 %v402
        %v871 = vunpack.c.l.b16 %v403
        %v872 = vunpack.c.l.b16 %v404
        %v873 = vunpack.c.l.b16 %v405
        %v874 = vunpack.c.l.b16 %v406
        %v875 = vunpack.c.l.b16 %v407
        %v876 = vunpack.c.l.b16 %v408
        %v877 = vunpack.c.l.b16 %v409
        %v878 = vunpack.c.l.b16 %v410
        %v879 = vunpack.c.l.b16 %v411
        %v880 = vunpack.c.l.b16 %v412
        %v881 = vpack.c.b16 %v828, %v827
        %v882 = vpack.c.b16 %v829, %v829
        %v883 = vpack.c.b16 %v831, %v830
        %v884 = vpack.c.b16 %v832, %v832
        %v885 = vpack.c.b16 %v834, %v833
        %v886 = vpack.c.b16 %v835, %v835
        %v887 = vpack.c.b16 %v837, %v836
        %v888 = vpack.c.b16 %v838, %v838
        %v889 = vpack.c.b16 %v840, %v839
        %v890 = vpack.c.b16 %v841, %v841
        %v891 = vpack.c.b16 %v843, %v842
        %v892 = vpack.c.b16 %v844, %v844
        %v893 = vpack.c.b16 %v846, %v845
        %v894 = vpack.c.b16 %v847, %v847
        %v895 = vpack.c.b16 %v849, %v848
        %v896 = vpack.c.b16 %v850, %v850
        %v897 = vpack.c.b16 %v852, %v851
        %v898 = vpack.c.b16 %v853, %v853
        %v899 = vpack.c.b16 %v855, %v854
        %v900 = vpack.c.b16 %v856, %v856
        %v901 = vpack.c.b16 %v858, %v857
        %v902 = vpack.c.b16 %v859, %v859
        %v903 = vpack.c.b16 %v861, %v860
        %v904 = vpack.c.b16 %v862, %v862
        %v905 = vpack.c.b16 %v864, %v863
        %v906 = vpack.c.b16 %v865, %v865
        %v907 = vpack.c.b16 %v867, %v866
        %v908 = vpack.c.b16 %v868, %v868
        %v909 = vpack.c.b16 %v870, %v869
        %v910 = vpack.c.b16 %v871, %v871
        %v911 = vpack.c.b16 %v873, %v872
        %v912 = vpack.c.b16 %v874, %v874
        %v913 = vpack.c.b16 %v876, %v875
        %v914 = vpack.c.b16 %v877, %v877
        %v915 = vpack.c.b16 %v879, %v878
        %v916 = vpack.c.b16 %v880, %v880
        %917 = vrot.lane.b32.xlu0 %v881, 64
        %v918 = vpop.permute.xlu0 %917
        %919 = vrot.lane.b32.xlu0 %v882, 64
        %v920 = vpop.permute.xlu0 %919
        %921 = vrot.lane.b32.xlu0 %v883, 64
        %v922 = vpop.permute.xlu0 %921
        %923 = vrot.lane.b32.xlu0 %v884, 64
        %v924 = vpop.permute.xlu0 %923
        %925 = vrot.lane.b32.xlu0 %v885, 64
        %v926 = vpop.permute.xlu0 %925
        %927 = vrot.lane.b32.xlu0 %v886, 64
        %v928 = vpop.permute.xlu0 %927
        %929 = vrot.lane.b32.xlu0 %v887, 64
        %v930 = vpop.permute.xlu0 %929
        %931 = vrot.lane.b32.xlu0 %v888, 64
        %v932 = vpop.permute.xlu0 %931
        %933 = vrot.lane.b32.xlu0 %v889, 64
        %v934 = vpop.permute.xlu0 %933
        %935 = vrot.lane.b32.xlu0 %v890, 64
        %v936 = vpop.permute.xlu0 %935
        %937 = vrot.lane.b32.xlu0 %v891, 64
        %v938 = vpop.permute.xlu0 %937
        %939 = vrot.lane.b32.xlu0 %v892, 64
        %v940 = vpop.permute.xlu0 %939
        %941 = vrot.lane.b32.xlu0 %v893, 64
        %v942 = vpop.permute.xlu0 %941
        %943 = vrot.lane.b32.xlu0 %v894, 64
        %v944 = vpop.permute.xlu0 %943
        %945 = vrot.lane.b32.xlu0 %v895, 64
        %v946 = vpop.permute.xlu0 %945
        %947 = vrot.lane.b32.xlu0 %v896, 64
        %v948 = vpop.permute.xlu0 %947
        %949 = vrot.lane.b32.xlu0 %v897, 64
        %v950 = vpop.permute.xlu0 %949
        %951 = vrot.lane.b32.xlu0 %v898, 64
        %v952 = vpop.permute.xlu0 %951
        %953 = vrot.lane.b32.xlu0 %v899, 64
        %v954 = vpop.permute.xlu0 %953
        %955 = vrot.lane.b32.xlu0 %v900, 64
        %v956 = vpop.permute.xlu0 %955
        %957 = vrot.lane.b32.xlu0 %v901, 64
        %v958 = vpop.permute.xlu0 %957
        %959 = vrot.lane.b32.xlu0 %v902, 64
        %v960 = vpop.permute.xlu0 %959
        %961 = vrot.lane.b32.xlu0 %v903, 64
        %v962 = vpop.permute.xlu0 %961
        %963 = vrot.lane.b32.xlu0 %v904, 64
        %v964 = vpop.permute.xlu0 %963
        %965 = vrot.lane.b32.xlu0 %v905, 64
        %v966 = vpop.permute.xlu0 %965
        %967 = vrot.lane.b32.xlu0 %v906, 64
        %v968 = vpop.permute.xlu0 %967
        %969 = vrot.lane.b32.xlu0 %v907, 64
        %v970 = vpop.permute.xlu0 %969
        %971 = vrot.lane.b32.xlu0 %v908, 64
        %v972 = vpop.permute.xlu0 %971
        %973 = vrot.lane.b32.xlu0 %v909, 64
        %v974 = vpop.permute.xlu0 %973
        %975 = vrot.lane.b32.xlu0 %v910, 64
        %v976 = vpop.permute.xlu0 %975
        %977 = vrot.lane.b32.xlu0 %v911, 64
        %v978 = vpop.permute.xlu0 %977
        %979 = vrot.lane.b32.xlu0 %v912, 64
        %v980 = vpop.permute.xlu0 %979
        %981 = vrot.lane.b32.xlu0 %v913, 64
        %v982 = vpop.permute.xlu0 %981
        %983 = vrot.lane.b32.xlu0 %v914, 64
        %v984 = vpop.permute.xlu0 %983
        %985 = vrot.lane.b32.xlu0 %v915, 64
        %v986 = vpop.permute.xlu0 %985
        %987 = vrot.lane.b32.xlu0 %v916, 64
        %v988 = vpop.permute.xlu0 %987
        %vm989 = vcmask 261120
        %v992 = vsel %vm989, %v521, %v702
        %v995 = vsel %vm989, %v522, %v704
        %v998 = vsel %vm989, %v523, %v706
        %v1001 = vsel %vm989, %v524, %v708
        %v1004 = vsel %vm989, %v525, %v710
        %v1007 = vsel %vm989, %v526, %v712
        %v1010 = vsel %vm989, %v527, %v714
        %v1013 = vsel %vm989, %v528, %v716
        %v1016 = vsel %vm989, %v529, %v718
        %v1019 = vsel %vm989, %v530, %v720
        %v1022 = vsel %vm989, %v531, %v722
        %v1025 = vsel %vm989, %v532, %v724
        %v1028 = vsel %vm989, %v533, %v726
        %v1031 = vsel %vm989, %v534, %v728
        %v1034 = vsel %vm989, %v535, %v730
        %v1037 = vsel %vm989, %v536, %v732
        %v1040 = vsel %vm989, %v537, %v734
        %v1043 = vsel %vm989, %v538, %v736
        %v1046 = vsel %vm989, %v539, %v738
        %v1049 = vsel %vm989, %v540, %v740
        %v1052 = vsel %vm989, %v541, %v742
        %v1055 = vsel %vm989, %v542, %v744
        %v1058 = vsel %vm989, %v543, %v746
        %v1061 = vsel %vm989, %v544, %v748
        %v1064 = vsel %vm989, %v545, %v750
        %v1067 = vsel %vm989, %v546, %v752
        %v1070 = vsel %vm989, %v547, %v754
        %v1073 = vsel %vm989, %v548, %v756
        %v1076 = vsel %vm989, %v549, %v758
        %v1079 = vsel %vm989, %v550, %v760
        %v1082 = vsel %vm989, %v551, %v762
        %v1085 = vsel %vm989, %v552, %v764
        %v1088 = vsel %vm989, %v553, %v766
        %v1091 = vsel %vm989, %v554, %v768
        %v1094 = vsel %vm989, %v555, %v770
        %v1097 = vsel %vm989, %v556, %v772
        %vm1098 = vcmask 523264
        %v1100 = vsel %vm1098, %v992, %v918
        %v1102 = vsel %vm1098, %v995, %v920
        %v1104 = vsel %vm1098, %v998, %v922
        %v1106 = vsel %vm1098, %v1001, %v924
        %v1108 = vsel %vm1098, %v1004, %v926
        %v1110 = vsel %vm1098, %v1007, %v928
        %v1112 = vsel %vm1098, %v1010, %v930
        %v1114 = vsel %vm1098, %v1013, %v932
        %v1116 = vsel %vm1098, %v1016, %v934
        %v1118 = vsel %vm1098, %v1019, %v936
        %v1120 = vsel %vm1098, %v1022, %v938
        %v1122 = vsel %vm1098, %v1025, %v940
        %v1124 = vsel %vm1098, %v1028, %v942
        %v1126 = vsel %vm1098, %v1031, %v944
        %v1128 = vsel %vm1098, %v1034, %v946
        %v1130 = vsel %vm1098, %v1037, %v948
        %v1132 = vsel %vm1098, %v1040, %v950
        %v1134 = vsel %vm1098, %v1043, %v952
        %v1136 = vsel %vm1098, %v1046, %v954
        %v1138 = vsel %vm1098, %v1049, %v956
        %v1140 = vsel %vm1098, %v1052, %v958
        %v1142 = vsel %vm1098, %v1055, %v960
        %v1144 = vsel %vm1098, %v1058, %v962
        %v1146 = vsel %vm1098, %v1061, %v964
        %v1148 = vsel %vm1098, %v1064, %v966
        %v1150 = vsel %vm1098, %v1067, %v968
        %v1152 = vsel %vm1098, %v1070, %v970
        %v1154 = vsel %vm1098, %v1073, %v972
        %v1156 = vsel %vm1098, %v1076, %v974
        %v1158 = vsel %vm1098, %v1079, %v976
        %v1160 = vsel %vm1098, %v1082, %v978
        %v1162 = vsel %vm1098, %v1085, %v980
        %v1164 = vsel %vm1098, %v1088, %v982
        %v1166 = vsel %vm1098, %v1091, %v984
        %v1168 = vsel %vm1098, %v1094, %v986
        %v1170 = vsel %vm1098, %v1097, %v988
        %v1171 = vld [vmem:[%s1] sm:$0xf]
        %v1172 = vld [vmem:[%s1 + $0x4] sm:$0xf]
        %v1173 = vld [vmem:[%s1 + $0x8] sm:$0xf]
        %v1174 = vld [vmem:[%s1 + $0xc] sm:$0xf]
        %v1175 = vld [vmem:[%s1 + $0x10] sm:$0xf]
        %v1176 = vld [vmem:[%s1 + $0x14] sm:$0xf]
        %v1177 = vld [vmem:[%s1 + $0x18] sm:$0xf]
        %v1178 = vld [vmem:[%s1 + $0x1c] sm:$0xf]
        %v1179 = vld [vmem:[%s1 + $0x20] sm:$0xf]
        %v1180 = vld [vmem:[%s1 + $0x24] sm:$0xf]
        %v1181 = vld [vmem:[%s1 + $0x28] sm:$0xf]
        %v1182 = vld [vmem:[%s1 + $0x2c] sm:$0xf]
        %vm1183 = vsmask.f32 7424
        %v1184 = vshrl.u32 %v1100, 16
        %v1186 = vshll.u32 %v1100, 16
        %v1188 = vrot.slane %v1186, 1
        %v1189 = vor.u32 %v1184, %v1188
        %v1190 = vshll.u32 %v1102, 16
        %v1192 = vrot.slane %v1190, 1
        %v1193 = vsel %vm1183, %v1189, %v1192
        %v1194 = vshrl.u32 %v1104, 16
        %v1196 = vshll.u32 %v1104, 16
        %v1198 = vrot.slane %v1196, 1
        %v1199 = vor.u32 %v1194, %v1198
        %v1200 = vshll.u32 %v1106, 16
        %v1202 = vrot.slane %v1200, 1
        %v1203 = vsel %vm1183, %v1199, %v1202
        %v1204 = vshrl.u32 %v1108, 16
        %v1206 = vshll.u32 %v1108, 16
        %v1208 = vrot.slane %v1206, 1
        %v1209 = vor.u32 %v1204, %v1208
        %v1210 = vshll.u32 %v1110, 16
        %v1212 = vrot.slane %v1210, 1
        %v1213 = vsel %vm1183, %v1209, %v1212
        %v1214 = vshrl.u32 %v1112, 16
        %v1216 = vshll.u32 %v1112, 16
        %v1218 = vrot.slane %v1216, 1
        %v1219 = vor.u32 %v1214, %v1218
        %v1220 = vshll.u32 %v1114, 16
        %v1222 = vrot.slane %v1220, 1
        %v1223 = vsel %vm1183, %v1219, %v1222
        %v1224 = vshrl.u32 %v1116, 16
        %v1226 = vshll.u32 %v1116, 16
        %v1228 = vrot.slane %v1226, 1
        %v1229 = vor.u32 %v1224, %v1228
        %v1230 = vshll.u32 %v1118, 16
        %v1232 = vrot.slane %v1230, 1
        %v1233 = vsel %vm1183, %v1229, %v1232
        %v1234 = vshrl.u32 %v1120, 16
        %v1236 = vshll.u32 %v1120, 16
        %v1238 = vrot.slane %v1236, 1
        %v1239 = vor.u32 %v1234, %v1238
        %v1240 = vshll.u32 %v1122, 16
        %v1242 = vrot.slane %v1240, 1
        %v1243 = vsel %vm1183, %v1239, %v1242
        %v1244 = vshrl.u32 %v1124, 16
        %v1246 = vshll.u32 %v1124, 16
        %v1248 = vrot.slane %v1246, 1
        %v1249 = vor.u32 %v1244, %v1248
        %v1250 = vshll.u32 %v1126, 16
        %v1252 = vrot.slane %v1250, 1
        %v1253 = vsel %vm1183, %v1249, %v1252
        %v1254 = vshrl.u32 %v1128, 16
        %v1256 = vshll.u32 %v1128, 16
        %v1258 = vrot.slane %v1256, 1
        %v1259 = vor.u32 %v1254, %v1258
        %v1260 = vshll.u32 %v1130, 16
        %v1262 = vrot.slane %v1260, 1
        %v1263 = vsel %vm1183, %v1259, %v1262
        %v1264 = vshrl.u32 %v1132, 16
        %v1266 = vshll.u32 %v1132, 16
        %v1268 = vrot.slane %v1266, 1
        %v1269 = vor.u32 %v1264, %v1268
        %v1270 = vshll.u32 %v1134, 16
        %v1272 = vrot.slane %v1270, 1
        %v1273 = vsel %vm1183, %v1269, %v1272
        %v1274 = vshrl.u32 %v1136, 16
        %v1276 = vshll.u32 %v1136, 16
        %v1278 = vrot.slane %v1276, 1
        %v1279 = vor.u32 %v1274, %v1278
        %v1280 = vshll.u32 %v1138, 16
        %v1282 = vrot.slane %v1280, 1
        %v1283 = vsel %vm1183, %v1279, %v1282
        %v1284 = vshrl.u32 %v1140, 16
        %v1286 = vshll.u32 %v1140, 16
        %v1288 = vrot.slane %v1286, 1
        %v1289 = vor.u32 %v1284, %v1288
        %v1290 = vshll.u32 %v1142, 16
        %v1292 = vrot.slane %v1290, 1
        %v1293 = vsel %vm1183, %v1289, %v1292
        %v1294 = vshrl.u32 %v1144, 16
        %v1296 = vshll.u32 %v1144, 16
        %v1298 = vrot.slane %v1296, 1
        %v1299 = vor.u32 %v1294, %v1298
        %v1300 = vshll.u32 %v1146, 16
        %v1302 = vrot.slane %v1300, 1
        %v1303 = vsel %vm1183, %v1299, %v1302
        %v1304 = vshrl.u32 %v1148, 16
        %v1306 = vshll.u32 %v1148, 16
        %v1308 = vrot.slane %v1306, 1
        %v1309 = vor.u32 %v1304, %v1308
        %v1310 = vshll.u32 %v1150, 16
        %v1312 = vrot.slane %v1310, 1
        %v1313 = vsel %vm1183, %v1309, %v1312
        %v1314 = vshrl.u32 %v1152, 16
        %v1316 = vshll.u32 %v1152, 16
        %v1318 = vrot.slane %v1316, 1
        %v1319 = vor.u32 %v1314, %v1318
        %v1320 = vshll.u32 %v1154, 16
        %v1322 = vrot.slane %v1320, 1
        %v1323 = vsel %vm1183, %v1319, %v1322
        %v1324 = vshrl.u32 %v1156, 16
        %v1326 = vshll.u32 %v1156, 16
        %v1328 = vrot.slane %v1326, 1
        %v1329 = vor.u32 %v1324, %v1328
        %v1330 = vshll.u32 %v1158, 16
        %v1332 = vrot.slane %v1330, 1
        %v1333 = vsel %vm1183, %v1329, %v1332
        %v1334 = vshrl.u32 %v1160, 16
        %v1336 = vshll.u32 %v1160, 16
        %v1338 = vrot.slane %v1336, 1
        %v1339 = vor.u32 %v1334, %v1338
        %v1340 = vshll.u32 %v1162, 16
        %v1342 = vrot.slane %v1340, 1
        %v1343 = vsel %vm1183, %v1339, %v1342
        %v1344 = vshrl.u32 %v1164, 16
        %v1346 = vshll.u32 %v1164, 16
        %v1348 = vrot.slane %v1346, 1
        %v1349 = vor.u32 %v1344, %v1348
        %v1350 = vshll.u32 %v1166, 16
        %v1352 = vrot.slane %v1350, 1
        %v1353 = vsel %vm1183, %v1349, %v1352
        %v1354 = vshrl.u32 %v1168, 16
        %v1356 = vshll.u32 %v1168, 16
        %v1358 = vrot.slane %v1356, 1
        %v1359 = vor.u32 %v1354, %v1358
        %v1360 = vshll.u32 %v1170, 16
        %v1362 = vrot.slane %v1360, 1
        %v1363 = vsel %vm1183, %v1359, %v1362
        %s1364 = scalar_lea.vmem %s1, 48
        %v1365 = vld [vmem:[%s1364] sm:$0xf]
        %v1366 = vld [vmem:[%s1364 + $0x4] sm:$0xf]
        %v1367 = vld [vmem:[%s1364 + $0x8] sm:$0xf]
        %v1368 = vld [vmem:[%s1364 + $0xc] sm:$0xf]
        %v1369 = vld [vmem:[%s1364 + $0x10] sm:$0xf]
        %v1370 = vld [vmem:[%s1364 + $0x14] sm:$0xf]
        %v1371 = vld [vmem:[%s1364 + $0x18] sm:$0xf]
        %v1372 = vld [vmem:[%s1364 + $0x1c] sm:$0xf]
        %v1373 = vld [vmem:[%s1364 + $0x20] sm:$0xf]
        %v1374 = vld [vmem:[%s1364 + $0x24] sm:$0xf]
        %v1375 = vld [vmem:[%s1364 + $0x28] sm:$0xf]
        %v1376 = vld [vmem:[%s1364 + $0x2c] sm:$0xf]
        %v1389 = vunpack.c.l.b16 %v1365
        %v1390 = vunpack.c.l.b16 %v1366
        %v1391 = vunpack.c.l.b16 %v1367
        %v1392 = vunpack.c.l.b16 %v1368
        %v1393 = vunpack.c.l.b16 %v1369
        %v1394 = vunpack.c.l.b16 %v1370
        %v1395 = vunpack.c.l.b16 %v1371
        %v1396 = vunpack.c.l.b16 %v1372
        %v1397 = vunpack.c.l.b16 %v1373
        %v1398 = vunpack.c.l.b16 %v1374
        %v1399 = vunpack.c.l.b16 %v1375
        %v1400 = vunpack.c.l.b16 %v1376
        %v1401 = vpack.c.b16 %v1390, %v1389
        %v1402 = vpack.c.b16 %v1392, %v1391
        %v1403 = vpack.c.b16 %v1394, %v1393
        %v1404 = vpack.c.b16 %v1396, %v1395
        %v1405 = vpack.c.b16 %v1398, %v1397
        %v1406 = vpack.c.b16 %v1400, %v1399
        %vm1413 = vcmask 785408
        %v1415 = vsel %vm1413, %v1193, 0
        %v1418 = vsel %vm1413, %v1203, 0
        %v1421 = vsel %vm1413, %v1213, 0
        %v1424 = vsel %vm1413, %v1223, 0
        %v1427 = vsel %vm1413, %v1233, 0
        %v1430 = vsel %vm1413, %v1243, 0
        %v1433 = vsel %vm1413, %v1253, 0
        %v1436 = vsel %vm1413, %v1263, 0
        %v1439 = vsel %vm1413, %v1273, 0
        %v1442 = vsel %vm1413, %v1283, 0
        %v1445 = vsel %vm1413, %v1293, 0
        %v1448 = vsel %vm1413, %v1303, 0
        %v1451 = vsel %vm1413, %v1313, 0
        %v1454 = vsel %vm1413, %v1323, 0
        %v1457 = vsel %vm1413, %v1333, 0
        %v1460 = vsel %vm1413, %v1343, 0
        %v1463 = vsel %vm1413, %v1353, 0
        %v1466 = vsel %vm1413, %v1363, 0
        %1468 = vmatprep.subr.bf16.mxu0 0
        %1469 = vmatpush1.bf16.msra.mxu0 %v1401
        %1470 = vmatprep.subr.bf16.mxu0 0
        %1471 = vmatpush1.bf16.msra.mxu0 %v1402
        %1472 = vmatprep.subr.bf16.mxu0 0
        %1473 = vmatpush1.bf16.msra.mxu0 %v1403
        %1474 = vmatprep.subr.bf16.mxu0 0
        %1475 = vmatpush1.bf16.msra.mxu0 %v1404
        %1476 = vmatprep.subr.bf16.mxu0 0
        %1477 = vmatpush1.bf16.msra.mxu0 %v1405
        %1478 = vmatprep.subr.bf16.mxu0 0
        %1479 = vmatpush1.bf16.msra.mxu0 %v1406
        %1480 = vmatprep.subr.bf16.mxu0 0
        %1481 = vmatpush1.bf16.msra.mxu0 0
        %1482 = vmatprep.subr.bf16.mxu0 0
        %1483 = vmatpush1.bf16.msra.mxu0 0
        %1484 = vmatprep.subr.bf16.mxu0 0
        %1485 = vmatpush1.bf16.msra.mxu0 0
        %1486 = vmatprep.subr.bf16.mxu0 0
        %1487 = vmatpush1.bf16.msra.mxu0 0
        %1488 = vmatprep.subr.bf16.mxu0 0
        %1489 = vmatpush1.bf16.msra.mxu0 0
        %1490 = vmatprep.subr.bf16.mxu0 0
        %1491 = vmatpush1.bf16.msra.mxu0 0
        %1492 = vmatprep.subr.bf16.mxu0 0
        %1493 = vmatpush1.bf16.msra.mxu0 0
        %1494 = vmatprep.subr.bf16.mxu0 0
        %1495 = vmatpush1.bf16.msra.mxu0 0
        %1496 = vmatprep.subr.bf16.mxu0 0
        %1497 = vmatpush1.bf16.msra.mxu0 0
        %1498 = vmatprep.subr.bf16.mxu0 0
        %1499 = vmatpush1.bf16.msra.mxu0 0
        %1500 = vmatprep.mubr.bf16.mxu0 0
        %1501 = vmatmul.mubr.bf16.gmra.mrb[0].mxu0 %v1415
        %v1502 = vpop.f32.mrb[0].mxu0
        %v1503 = vadd.f32 0.0, %v1502
        %v1504 = vpop.f32.mrb[0].mxu0
        %v1505 = vpop.f32.mrb[0].mxu0
        %v1506 = vadd.f32 0.0, %v1505
        %v1507 = vpop.f32.mrb[0].mxu0
        %1508 = vmatprep.mubr.bf16.mxu0 0
        %1509 = vmatmul.mubr.bf16.gmra.mrb[0].mxu0 %v1418
        %v1510 = vpop.f32.mrb[0].mxu0
        %v1511 = vadd.f32 0.0, %v1510
        %v1512 = vpop.f32.mrb[0].mxu0
        %v1513 = vpop.f32.mrb[0].mxu0
        %v1514 = vadd.f32 0.0, %v1513
        %v1515 = vpop.f32.mrb[0].mxu0
        %1516 = vmatprep.mubr.bf16.mxu0 0
        %1517 = vmatmul.mubr.bf16.gmra.mrb[0].mxu0 %v1421
        %v1518 = vpop.f32.mrb[0].mxu0
        %v1519 = vadd.f32 0.0, %v1518
        %v1520 = vpop.f32.mrb[0].mxu0
        %v1521 = vpop.f32.mrb[0].mxu0
        %v1522 = vadd.f32 0.0, %v1521
        %v1523 = vpop.f32.mrb[0].mxu0
        %1524 = vmatprep.mubr.bf16.mxu0 0
        %1525 = vmatmul.mubr.bf16.gmra.mrb[0].mxu0 %v1424
        %v1526 = vpop.f32.mrb[0].mxu0
        %v1527 = vadd.f32 0.0, %v1526
        %v1528 = vpop.f32.mrb[0].mxu0
        %v1529 = vpop.f32.mrb[0].mxu0
        %v1530 = vadd.f32 0.0, %v1529
        %v1531 = vpop.f32.mrb[0].mxu0
        %1532 = vmatprep.mubr.bf16.mxu0 0
        %1533 = vmatmul.mubr.bf16.gmra.mrb[0].mxu0 %v1427
        %v1534 = vpop.f32.mrb[0].mxu0
        %v1535 = vadd.f32 0.0, %v1534
        %v1536 = vpop.f32.mrb[0].mxu0
        %v1537 = vpop.f32.mrb[0].mxu0
        %v1538 = vadd.f32 0.0, %v1537
        %v1539 = vpop.f32.mrb[0].mxu0
        %1540 = vmatprep.mubr.bf16.mxu0 0
        %1541 = vmatmul.mubr.bf16.gmra.mrb[0].mxu0 %v1430
        %v1542 = vpop.f32.mrb[0].mxu0
        %v1543 = vadd.f32 0.0, %v1542
        %v1544 = vpop.f32.mrb[0].mxu0
        %v1545 = vpop.f32.mrb[0].mxu0
        %v1546 = vadd.f32 0.0, %v1545
        %v1547 = vpop.f32.mrb[0].mxu0
        %1548 = vmatprep.mubr.bf16.mxu0 0
        %1549 = vmatmul.mubr.bf16.gmra.mrb[0].mxu0 %v1433
        %v1550 = vpop.f32.mrb[0].mxu0
        %v1551 = vadd.f32 0.0, %v1550
        %v1552 = vpop.f32.mrb[0].mxu0
        %v1553 = vpop.f32.mrb[0].mxu0
        %v1554 = vadd.f32 0.0, %v1553
        %v1555 = vpop.f32.mrb[0].mxu0
        %1556 = vmatprep.mubr.bf16.mxu0 0
        %1557 = vmatmul.mubr.bf16.gmra.mrb[0].mxu0 %v1436
        %v1558 = vpop.f32.mrb[0].mxu0
        %v1559 = vadd.f32 0.0, %v1558
        %v1560 = vpop.f32.mrb[0].mxu0
        %v1561 = vpop.f32.mrb[0].mxu0
        %v1562 = vadd.f32 0.0, %v1561
        %v1563 = vpop.f32.mrb[0].mxu0
        %1564 = vmatprep.mubr.bf16.mxu0 0
        %1565 = vmatmul.mubr.bf16.gmra.mrb[0].mxu0 %v1439
        %v1566 = vpop.f32.mrb[0].mxu0
        %v1567 = vadd.f32 0.0, %v1566
        %v1568 = vpop.f32.mrb[0].mxu0
        %v1569 = vpop.f32.mrb[0].mxu0
        %v1570 = vadd.f32 0.0, %v1569
        %v1571 = vpop.f32.mrb[0].mxu0
        %1572 = vmatprep.mubr.bf16.mxu0 0
        %1573 = vmatmul.mubr.bf16.gmra.mrb[0].mxu0 %v1442
        %v1574 = vpop.f32.mrb[0].mxu0
        %v1575 = vadd.f32 0.0, %v1574
        %v1576 = vpop.f32.mrb[0].mxu0
        %v1577 = vpop.f32.mrb[0].mxu0
        %v1578 = vadd.f32 0.0, %v1577
        %v1579 = vpop.f32.mrb[0].mxu0
        %1580 = vmatprep.mubr.bf16.mxu0 0
        %1581 = vmatmul.mubr.bf16.gmra.mrb[0].mxu0 %v1445
        %v1582 = vpop.f32.mrb[0].mxu0
        %v1583 = vadd.f32 0.0, %v1582
        %v1584 = vpop.f32.mrb[0].mxu0
        %v1585 = vpop.f32.mrb[0].mxu0
        %v1586 = vadd.f32 0.0, %v1585
        %v1587 = vpop.f32.mrb[0].mxu0
        %1588 = vmatprep.mubr.bf16.mxu0 0
        %1589 = vmatmul.mubr.bf16.gmra.mrb[0].mxu0 %v1448
        %v1590 = vpop.f32.mrb[0].mxu0
        %v1591 = vadd.f32 0.0, %v1590
        %v1592 = vpop.f32.mrb[0].mxu0
        %v1593 = vpop.f32.mrb[0].mxu0
        %v1594 = vadd.f32 0.0, %v1593
        %v1595 = vpop.f32.mrb[0].mxu0
        %1596 = vmatprep.mubr.bf16.mxu0 0
        %1597 = vmatmul.mubr.bf16.gmra.mrb[0].mxu0 %v1451
        %v1598 = vpop.f32.mrb[0].mxu0
        %v1599 = vadd.f32 0.0, %v1598
        %v1600 = vpop.f32.mrb[0].mxu0
        %v1601 = vpop.f32.mrb[0].mxu0
        %v1602 = vadd.f32 0.0, %v1601
        %v1603 = vpop.f32.mrb[0].mxu0
        %1604 = vmatprep.mubr.bf16.mxu0 0
        %1605 = vmatmul.mubr.bf16.gmra.mrb[0].mxu0 %v1454
        %v1606 = vpop.f32.mrb[0].mxu0
        %v1607 = vadd.f32 0.0, %v1606
        %v1608 = vpop.f32.mrb[0].mxu0
        %v1609 = vpop.f32.mrb[0].mxu0
        %v1610 = vadd.f32 0.0, %v1609
        %v1611 = vpop.f32.mrb[0].mxu0
        %1612 = vmatprep.mubr.bf16.mxu0 0
        %1613 = vmatmul.mubr.bf16.gmra.mrb[0].mxu0 %v1457
        %v1614 = vpop.f32.mrb[0].mxu0
        %v1615 = vadd.f32 0.0, %v1614
        %v1616 = vpop.f32.mrb[0].mxu0
        %v1617 = vpop.f32.mrb[0].mxu0
        %v1618 = vadd.f32 0.0, %v1617
        %v1619 = vpop.f32.mrb[0].mxu0
        %1620 = vmatprep.mubr.bf16.mxu0 0
        %1621 = vmatmul.mubr.bf16.gmra.mrb[0].mxu0 %v1460
        %v1622 = vpop.f32.mrb[0].mxu0
        %v1623 = vadd.f32 0.0, %v1622
        %v1624 = vpop.f32.mrb[0].mxu0
        %v1625 = vpop.f32.mrb[0].mxu0
        %v1626 = vadd.f32 0.0, %v1625
        %v1627 = vpop.f32.mrb[0].mxu0
        %1628 = vmatprep.mubr.bf16.mxu0 0
        %1629 = vmatmul.mubr.bf16.gmra.mrb[0].mxu0 %v1463
        %v1630 = vpop.f32.mrb[0].mxu0
        %v1631 = vadd.f32 0.0, %v1630
        %v1632 = vpop.f32.mrb[0].mxu0
        %v1633 = vpop.f32.mrb[0].mxu0
        %v1634 = vadd.f32 0.0, %v1633
        %v1635 = vpop.f32.mrb[0].mxu0
        %1636 = vmatprep.mubr.bf16.mxu0 0
        %1637 = vmatmul.mubr.bf16.gmra.mrb[0].mxu0 %v1466
        %v1638 = vpop.f32.mrb[0].mxu0
        %v1639 = vadd.f32 0.0, %v1638
        %v1640 = vpop.f32.mrb[0].mxu0
        %v1641 = vpop.f32.mrb[0].mxu0
        %v1642 = vadd.f32 0.0, %v1641
        %v1643 = vpop.f32.mrb[0].mxu0
        %1644 = vdwg.mxu0
        %v1657 = vunpack.c.l.b16 %v1171
        %v1658 = vunpack.c.l.b16 %v1172
        %v1659 = vunpack.c.l.b16 %v1173
        %v1660 = vunpack.c.l.b16 %v1174
        %v1661 = vunpack.c.l.b16 %v1175
        %v1662 = vunpack.c.l.b16 %v1176
        %v1663 = vunpack.c.l.b16 %v1177
        %v1664 = vunpack.c.l.b16 %v1178
        %v1665 = vunpack.c.l.b16 %v1179
        %v1666 = vunpack.c.l.b16 %v1180
        %v1667 = vunpack.c.l.b16 %v1181
        %v1668 = vunpack.c.l.b16 %v1182
        %v1669 = vpack.c.b16 %v1658, %v1657
        %v1670 = vpack.c.b16 %v1660, %v1659
        %v1671 = vpack.c.b16 %v1662, %v1661
        %v1672 = vpack.c.b16 %v1664, %v1663
        %v1673 = vpack.c.b16 %v1666, %v1665
        %v1674 = vpack.c.b16 %v1668, %v1667
        %v1681 = vsel %vm1413, %v1100, 0
        %v1683 = vsel %vm1413, %v1104, 0
        %v1685 = vsel %vm1413, %v1108, 0
        %v1687 = vsel %vm1413, %v1112, 0
        %v1689 = vsel %vm1413, %v1116, 0
        %v1691 = vsel %vm1413, %v1120, 0
        %v1693 = vsel %vm1413, %v1124, 0
        %v1695 = vsel %vm1413, %v1128, 0
        %v1697 = vsel %vm1413, %v1132, 0
        %v1699 = vsel %vm1413, %v1136, 0
        %v1701 = vsel %vm1413, %v1140, 0
        %v1703 = vsel %vm1413, %v1144, 0
        %v1705 = vsel %vm1413, %v1148, 0
        %v1707 = vsel %vm1413, %v1152, 0
        %v1709 = vsel %vm1413, %v1156, 0
        %v1711 = vsel %vm1413, %v1160, 0
        %v1713 = vsel %vm1413, %v1164, 0
        %v1715 = vsel %vm1413, %v1168, 0
        %1717 = vmatprep.subr.bf16.mxu0 0
        %1718 = vmatpush1.bf16.msra.mxu0 %v1669
        %1719 = vmatprep.subr.bf16.mxu0 0
        %1720 = vmatpush1.bf16.msra.mxu0 %v1670
        %1721 = vmatprep.subr.bf16.mxu0 0
        %1722 = vmatpush1.bf16.msra.mxu0 %v1671
        %1723 = vmatprep.subr.bf16.mxu0 0
        %1724 = vmatpush1.bf16.msra.mxu0 %v1672
        %1725 = vmatprep.subr.bf16.mxu0 0
        %1726 = vmatpush1.bf16.msra.mxu0 %v1673
        %1727 = vmatprep.subr.bf16.mxu0 0
        %1728 = vmatpush1.bf16.msra.mxu0 %v1674
        %1729 = vmatprep.subr.bf16.mxu0 0
        %1730 = vmatpush1.bf16.msra.mxu0 0
        %1731 = vmatprep.subr.bf16.mxu0 0
        %1732 = vmatpush1.bf16.msra.mxu0 0
        %1733 = vmatprep.subr.bf16.mxu0 0
        %1734 = vmatpush1.bf16.msra.mxu0 0
        %1735 = vmatprep.subr.bf16.mxu0 0
        %1736 = vmatpush1.bf16.msra.mxu0 0
        %1737 = vmatprep.subr.bf16.mxu0 0
        %1738 = vmatpush1.bf16.msra.mxu0 0
        %1739 = vmatprep.subr.bf16.mxu0 0
        %1740 = vmatpush1.bf16.msra.mxu0 0
        %1741 = vmatprep.subr.bf16.mxu0 0
        %1742 = vmatpush1.bf16.msra.mxu0 0
        %1743 = vmatprep.subr.bf16.mxu0 0
        %1744 = vmatpush1.bf16.msra.mxu0 0
        %1745 = vmatprep.subr.bf16.mxu0 0
        %1746 = vmatpush1.bf16.msra.mxu0 0
        %1747 = vmatprep.subr.bf16.mxu0 0
        %1748 = vmatpush1.bf16.msra.mxu0 0
        %1749 = vmatprep.mubr.bf16.mxu0 0
        %1750 = vmatmul.mubr.bf16.gmra.mrb[0].mxu0 %v1681
        %v1751 = vpop.f32.mrb[0].mxu0
        %v1752 = vadd.f32 %v1503, %v1751
        %v1753 = vpop.f32.mrb[0].mxu0
        %v1754 = vpop.f32.mrb[0].mxu0
        %v1755 = vadd.f32 %v1506, %v1754
        %v1756 = vpop.f32.mrb[0].mxu0
        %1757 = vmatprep.mubr.bf16.mxu0 0
        %1758 = vmatmul.mubr.bf16.gmra.mrb[0].mxu0 %v1683
        %v1759 = vpop.f32.mrb[0].mxu0
        %v1760 = vadd.f32 %v1511, %v1759
        %v1761 = vpop.f32.mrb[0].mxu0
        %v1762 = vpop.f32.mrb[0].mxu0
        %v1763 = vadd.f32 %v1514, %v1762
        %v1764 = vpop.f32.mrb[0].mxu0
        %1765 = vmatprep.mubr.bf16.mxu0 0
        %1766 = vmatmul.mubr.bf16.gmra.mrb[0].mxu0 %v1685
        %v1767 = vpop.f32.mrb[0].mxu0
        %v1768 = vadd.f32 %v1519, %v1767
        %v1769 = vpop.f32.mrb[0].mxu0
        %v1770 = vpop.f32.mrb[0].mxu0
        %v1771 = vadd.f32 %v1522, %v1770
        %v1772 = vpop.f32.mrb[0].mxu0
        %1773 = vmatprep.mubr.bf16.mxu0 0
        %1774 = vmatmul.mubr.bf16.gmra.mrb[0].mxu0 %v1687
        %v1775 = vpop.f32.mrb[0].mxu0
        %v1776 = vadd.f32 %v1527, %v1775
        %v1777 = vpop.f32.mrb[0].mxu0
        %v1778 = vpop.f32.mrb[0].mxu0
        %v1779 = vadd.f32 %v1530, %v1778
        %v1780 = vpop.f32.mrb[0].mxu0
        %1781 = vmatprep.mubr.bf16.mxu0 0
        %1782 = vmatmul.mubr.bf16.gmra.mrb[0].mxu0 %v1689
        %v1783 = vpop.f32.mrb[0].mxu0
        %v1784 = vadd.f32 %v1535, %v1783
        %v1785 = vpop.f32.mrb[0].mxu0
        %v1786 = vpop.f32.mrb[0].mxu0
        %v1787 = vadd.f32 %v1538, %v1786
        %v1788 = vpop.f32.mrb[0].mxu0
        %1789 = vmatprep.mubr.bf16.mxu0 0
        %1790 = vmatmul.mubr.bf16.gmra.mrb[0].mxu0 %v1691
        %v1791 = vpop.f32.mrb[0].mxu0
        %v1792 = vadd.f32 %v1543, %v1791
        %v1793 = vpop.f32.mrb[0].mxu0
        %v1794 = vpop.f32.mrb[0].mxu0
        %v1795 = vadd.f32 %v1546, %v1794
        %v1796 = vpop.f32.mrb[0].mxu0
        %1797 = vmatprep.mubr.bf16.mxu0 0
        %1798 = vmatmul.mubr.bf16.gmra.mrb[0].mxu0 %v1693
        %v1799 = vpop.f32.mrb[0].mxu0
        %v1800 = vadd.f32 %v1551, %v1799
        %v1801 = vpop.f32.mrb[0].mxu0
        %v1802 = vpop.f32.mrb[0].mxu0
        %v1803 = vadd.f32 %v1554, %v1802
        %v1804 = vpop.f32.mrb[0].mxu0
        %1805 = vmatprep.mubr.bf16.mxu0 0
        %1806 = vmatmul.mubr.bf16.gmra.mrb[0].mxu0 %v1695
        %v1807 = vpop.f32.mrb[0].mxu0
        %v1808 = vadd.f32 %v1559, %v1807
        %v1809 = vpop.f32.mrb[0].mxu0
        %v1810 = vpop.f32.mrb[0].mxu0
        %v1811 = vadd.f32 %v1562, %v1810
        %v1812 = vpop.f32.mrb[0].mxu0
        %1813 = vmatprep.mubr.bf16.mxu0 0
        %1814 = vmatmul.mubr.bf16.gmra.mrb[0].mxu0 %v1697
        %v1815 = vpop.f32.mrb[0].mxu0
        %v1816 = vadd.f32 %v1567, %v1815
        %v1817 = vpop.f32.mrb[0].mxu0
        %v1818 = vpop.f32.mrb[0].mxu0
        %v1819 = vadd.f32 %v1570, %v1818
        %v1820 = vpop.f32.mrb[0].mxu0
        %1821 = vmatprep.mubr.bf16.mxu0 0
        %1822 = vmatmul.mubr.bf16.gmra.mrb[0].mxu0 %v1699
        %v1823 = vpop.f32.mrb[0].mxu0
        %v1824 = vadd.f32 %v1575, %v1823
        %v1825 = vpop.f32.mrb[0].mxu0
        %v1826 = vpop.f32.mrb[0].mxu0
        %v1827 = vadd.f32 %v1578, %v1826
        %v1828 = vpop.f32.mrb[0].mxu0
        %1829 = vmatprep.mubr.bf16.mxu0 0
        %1830 = vmatmul.mubr.bf16.gmra.mrb[0].mxu0 %v1701
        %v1831 = vpop.f32.mrb[0].mxu0
        %v1832 = vadd.f32 %v1583, %v1831
        %v1833 = vpop.f32.mrb[0].mxu0
        %v1834 = vpop.f32.mrb[0].mxu0
        %v1835 = vadd.f32 %v1586, %v1834
        %v1836 = vpop.f32.mrb[0].mxu0
        %1837 = vmatprep.mubr.bf16.mxu0 0
        %1838 = vmatmul.mubr.bf16.gmra.mrb[0].mxu0 %v1703
        %v1839 = vpop.f32.mrb[0].mxu0
        %v1840 = vadd.f32 %v1591, %v1839
        %v1841 = vpop.f32.mrb[0].mxu0
        %v1842 = vpop.f32.mrb[0].mxu0
        %v1843 = vadd.f32 %v1594, %v1842
        %v1844 = vpop.f32.mrb[0].mxu0
        %1845 = vmatprep.mubr.bf16.mxu0 0
        %1846 = vmatmul.mubr.bf16.gmra.mrb[0].mxu0 %v1705
        %v1847 = vpop.f32.mrb[0].mxu0
        %v1848 = vadd.f32 %v1599, %v1847
        %v1849 = vpop.f32.mrb[0].mxu0
        %v1850 = vpop.f32.mrb[0].mxu0
        %v1851 = vadd.f32 %v1602, %v1850
        %v1852 = vpop.f32.mrb[0].mxu0
        %1853 = vmatprep.mubr.bf16.mxu0 0
        %1854 = vmatmul.mubr.bf16.gmra.mrb[0].mxu0 %v1707
        %v1855 = vpop.f32.mrb[0].mxu0
        %v1856 = vadd.f32 %v1607, %v1855
        %v1857 = vpop.f32.mrb[0].mxu0
        %v1858 = vpop.f32.mrb[0].mxu0
        %v1859 = vadd.f32 %v1610, %v1858
        %v1860 = vpop.f32.mrb[0].mxu0
        %1861 = vmatprep.mubr.bf16.mxu0 0
        %1862 = vmatmul.mubr.bf16.gmra.mrb[0].mxu0 %v1709
        %v1863 = vpop.f32.mrb[0].mxu0
        %v1864 = vadd.f32 %v1615, %v1863
        %v1865 = vpop.f32.mrb[0].mxu0
        %v1866 = vpop.f32.mrb[0].mxu0
        %v1867 = vadd.f32 %v1618, %v1866
        %v1868 = vpop.f32.mrb[0].mxu0
        %1869 = vmatprep.mubr.bf16.mxu0 0
        %1870 = vmatmul.mubr.bf16.gmra.mrb[0].mxu0 %v1711
        %v1871 = vpop.f32.mrb[0].mxu0
        %v1872 = vadd.f32 %v1623, %v1871
        %v1873 = vpop.f32.mrb[0].mxu0
        %v1874 = vpop.f32.mrb[0].mxu0
        %v1875 = vadd.f32 %v1626, %v1874
        %v1876 = vpop.f32.mrb[0].mxu0
        %1877 = vmatprep.mubr.bf16.mxu0 0
        %1878 = vmatmul.mubr.bf16.gmra.mrb[0].mxu0 %v1713
        %v1879 = vpop.f32.mrb[0].mxu0
        %v1880 = vadd.f32 %v1631, %v1879
        %v1881 = vpop.f32.mrb[0].mxu0
        %v1882 = vpop.f32.mrb[0].mxu0
        %v1883 = vadd.f32 %v1634, %v1882
        %v1884 = vpop.f32.mrb[0].mxu0
        %1885 = vmatprep.mubr.bf16.mxu0 0
        %1886 = vmatmul.mubr.bf16.gmra.mrb[0].mxu0 %v1715
        %v1887 = vpop.f32.mrb[0].mxu0
        %v1888 = vadd.f32 %v1639, %v1887
        %v1889 = vpop.f32.mrb[0].mxu0
        %v1890 = vpop.f32.mrb[0].mxu0
        %v1891 = vadd.f32 %v1642, %v1890
        %v1892 = vpop.f32.mrb[0].mxu0
        %1893 = vdwg.mxu0
        %vm1930 = vcmask 1046528
        %v1931 = vrot.slane %v1100, 1
        %v1932 = vrot.slane %v1102, 1
        %v1933 = vsel %vm1930, %v1931, %v1932
        %v1934 = vrot.slane %v1104, 1
        %v1935 = vrot.slane %v1106, 1
        %v1936 = vsel %vm1930, %v1934, %v1935
        %v1937 = vrot.slane %v1108, 1
        %v1938 = vrot.slane %v1110, 1
        %v1939 = vsel %vm1930, %v1937, %v1938
        %v1940 = vrot.slane %v1112, 1
        %v1941 = vrot.slane %v1114, 1
        %v1942 = vsel %vm1930, %v1940, %v1941
        %v1943 = vrot.slane %v1116, 1
        %v1944 = vrot.slane %v1118, 1
        %v1945 = vsel %vm1930, %v1943, %v1944
        %v1946 = vrot.slane %v1120, 1
        %v1947 = vrot.slane %v1122, 1
        %v1948 = vsel %vm1930, %v1946, %v1947
        %v1949 = vrot.slane %v1124, 1
        %v1950 = vrot.slane %v1126, 1
        %v1951 = vsel %vm1930, %v1949, %v1950
        %v1952 = vrot.slane %v1128, 1
        %v1953 = vrot.slane %v1130, 1
        %v1954 = vsel %vm1930, %v1952, %v1953
        %v1955 = vrot.slane %v1132, 1
        %v1956 = vrot.slane %v1134, 1
        %v1957 = vsel %vm1930, %v1955, %v1956
        %v1958 = vrot.slane %v1136, 1
        %v1959 = vrot.slane %v1138, 1
        %v1960 = vsel %vm1930, %v1958, %v1959
        %v1961 = vrot.slane %v1140, 1
        %v1962 = vrot.slane %v1142, 1
        %v1963 = vsel %vm1930, %v1961, %v1962
        %v1964 = vrot.slane %v1144, 1
        %v1965 = vrot.slane %v1146, 1
        %v1966 = vsel %vm1930, %v1964, %v1965
        %v1967 = vrot.slane %v1148, 1
        %v1968 = vrot.slane %v1150, 1
        %v1969 = vsel %vm1930, %v1967, %v1968
        %v1970 = vrot.slane %v1152, 1
        %v1971 = vrot.slane %v1154, 1
        %v1972 = vsel %vm1930, %v1970, %v1971
        %v1973 = vrot.slane %v1156, 1
        %v1974 = vrot.slane %v1158, 1
        %v1975 = vsel %vm1930, %v1973, %v1974
        %v1976 = vrot.slane %v1160, 1
        %v1977 = vrot.slane %v1162, 1
        %v1978 = vsel %vm1930, %v1976, %v1977
        %v1979 = vrot.slane %v1164, 1
        %v1980 = vrot.slane %v1166, 1
        %v1981 = vsel %vm1930, %v1979, %v1980
        %v1982 = vrot.slane %v1168, 1
        %v1983 = vrot.slane %v1170, 1
        %v1984 = vsel %vm1930, %v1982, %v1983
        %s1985 = scalar_lea.vmem %s1, 96
        %v1986 = vld [vmem:[%s1985] sm:$0xf]
        %v1987 = vld [vmem:[%s1985 + $0x4] sm:$0xf]
        %v1988 = vld [vmem:[%s1985 + $0x8] sm:$0xf]
        %v1989 = vld [vmem:[%s1985 + $0xc] sm:$0xf]
        %v1990 = vld [vmem:[%s1985 + $0x10] sm:$0xf]
        %v1991 = vld [vmem:[%s1985 + $0x14] sm:$0xf]
        %v1992 = vld [vmem:[%s1985 + $0x18] sm:$0xf]
        %v1993 = vld [vmem:[%s1985 + $0x1c] sm:$0xf]
        %v1994 = vld [vmem:[%s1985 + $0x20] sm:$0xf]
        %v1995 = vld [vmem:[%s1985 + $0x24] sm:$0xf]
        %v1996 = vld [vmem:[%s1985 + $0x28] sm:$0xf]
        %v1997 = vld [vmem:[%s1985 + $0x2c] sm:$0xf]
        %v2010 = vunpack.c.l.b16 %v1986
        %v2011 = vunpack.c.l.b16 %v1987
        %v2012 = vunpack.c.l.b16 %v1988
        %v2013 = vunpack.c.l.b16 %v1989
        %v2014 = vunpack.c.l.b16 %v1990
        %v2015 = vunpack.c.l.b16 %v1991
        %v2016 = vunpack.c.l.b16 %v1992
        %v2017 = vunpack.c.l.b16 %v1993
        %v2018 = vunpack.c.l.b16 %v1994
        %v2019 = vunpack.c.l.b16 %v1995
        %v2020 = vunpack.c.l.b16 %v1996
        %v2021 = vunpack.c.l.b16 %v1997
        %v2022 = vpack.c.b16 %v2011, %v2010
        %v2023 = vpack.c.b16 %v2013, %v2012
        %v2024 = vpack.c.b16 %v2015, %v2014
        %v2025 = vpack.c.b16 %v2017, %v2016
        %v2026 = vpack.c.b16 %v2019, %v2018
        %v2027 = vpack.c.b16 %v2021, %v2020
        %v2035 = vsel %vm1413, %v1933, 0
        %v2038 = vsel %vm1413, %v1936, 0
        %v2041 = vsel %vm1413, %v1939, 0
        %v2044 = vsel %vm1413, %v1942, 0
        %v2047 = vsel %vm1413, %v1945, 0
        %v2050 = vsel %vm1413, %v1948, 0
        %v2053 = vsel %vm1413, %v1951, 0
        %v2056 = vsel %vm1413, %v1954, 0
        %v2059 = vsel %vm1413, %v1957, 0
        %v2062 = vsel %vm1413, %v1960, 0
        %v2065 = vsel %vm1413, %v1963, 0
        %v2068 = vsel %vm1413, %v1966, 0
        %v2071 = vsel %vm1413, %v1969, 0
        %v2074 = vsel %vm1413, %v1972, 0
        %v2077 = vsel %vm1413, %v1975, 0
        %v2080 = vsel %vm1413, %v1978, 0
        %v2083 = vsel %vm1413, %v1981, 0
        %v2086 = vsel %vm1413, %v1984, 0
        %2088 = vmatprep.subr.bf16.mxu0 0
        %2089 = vmatpush1.bf16.msra.mxu0 %v2022
        %2090 = vmatprep.subr.bf16.mxu0 0
        %2091 = vmatpush1.bf16.msra.mxu0 %v2023
        %2092 = vmatprep.subr.bf16.mxu0 0
        %2093 = vmatpush1.bf16.msra.mxu0 %v2024
        %2094 = vmatprep.subr.bf16.mxu0 0
        %2095 = vmatpush1.bf16.msra.mxu0 %v2025
        %2096 = vmatprep.subr.bf16.mxu0 0
        %2097 = vmatpush1.bf16.msra.mxu0 %v2026
        %2098 = vmatprep.subr.bf16.mxu0 0
        %2099 = vmatpush1.bf16.msra.mxu0 %v2027
        %2100 = vmatprep.subr.bf16.mxu0 0
        %2101 = vmatpush1.bf16.msra.mxu0 0
        %2102 = vmatprep.subr.bf16.mxu0 0
        %2103 = vmatpush1.bf16.msra.mxu0 0
        %2104 = vmatprep.subr.bf16.mxu0 0
        %2105 = vmatpush1.bf16.msra.mxu0 0
        %2106 = vmatprep.subr.bf16.mxu0 0
        %2107 = vmatpush1.bf16.msra.mxu0 0
        %2108 = vmatprep.subr.bf16.mxu0 0
        %2109 = vmatpush1.bf16.msra.mxu0 0
        %2110 = vmatprep.subr.bf16.mxu0 0
        %2111 = vmatpush1.bf16.msra.mxu0 0
        %2112 = vmatprep.subr.bf16.mxu0 0
        %2113 = vmatpush1.bf16.msra.mxu0 0
        %2114 = vmatprep.subr.bf16.mxu0 0
        %2115 = vmatpush1.bf16.msra.mxu0 0
        %2116 = vmatprep.subr.bf16.mxu0 0
        %2117 = vmatpush1.bf16.msra.mxu0 0
        %2118 = vmatprep.subr.bf16.mxu0 0
        %2119 = vmatpush1.bf16.msra.mxu0 0
        %2120 = vmatprep.mubr.bf16.mxu0 0
        %2121 = vmatmul.mubr.bf16.gmra.mrb[0].mxu0 %v2035
        %v2122 = vpop.f32.mrb[0].mxu0
        %v2123 = vadd.f32 0.0, %v2122
        %v2124 = vpop.f32.mrb[0].mxu0
        %v2125 = vpop.f32.mrb[0].mxu0
        %v2126 = vadd.f32 0.0, %v2125
        %v2127 = vpop.f32.mrb[0].mxu0
        %2128 = vmatprep.mubr.bf16.mxu0 0
        %2129 = vmatmul.mubr.bf16.gmra.mrb[0].mxu0 %v2038
        %v2130 = vpop.f32.mrb[0].mxu0
        %v2131 = vadd.f32 0.0, %v2130
        %v2132 = vpop.f32.mrb[0].mxu0
        %v2133 = vpop.f32.mrb[0].mxu0
        %v2134 = vadd.f32 0.0, %v2133
        %v2135 = vpop.f32.mrb[0].mxu0
        %2136 = vmatprep.mubr.bf16.mxu0 0
        %2137 = vmatmul.mubr.bf16.gmra.mrb[0].mxu0 %v2041
        %v2138 = vpop.f32.mrb[0].mxu0
        %v2139 = vadd.f32 0.0, %v2138
        %v2140 = vpop.f32.mrb[0].mxu0
        %v2141 = vpop.f32.mrb[0].mxu0
        %v2142 = vadd.f32 0.0, %v2141
        %v2143 = vpop.f32.mrb[0].mxu0
        %2144 = vmatprep.mubr.bf16.mxu0 0
        %2145 = vmatmul.mubr.bf16.gmra.mrb[0].mxu0 %v2044
        %v2146 = vpop.f32.mrb[0].mxu0
        %v2147 = vadd.f32 0.0, %v2146
        %v2148 = vpop.f32.mrb[0].mxu0
        %v2149 = vpop.f32.mrb[0].mxu0
        %v2150 = vadd.f32 0.0, %v2149
        %v2151 = vpop.f32.mrb[0].mxu0
        %2152 = vmatprep.mubr.bf16.mxu0 0
        %2153 = vmatmul.mubr.bf16.gmra.mrb[0].mxu0 %v2047
        %v2154 = vpop.f32.mrb[0].mxu0
        %v2155 = vadd.f32 0.0, %v2154
        %v2156 = vpop.f32.mrb[0].mxu0
        %v2157 = vpop.f32.mrb[0].mxu0
        %v2158 = vadd.f32 0.0, %v2157
        %v2159 = vpop.f32.mrb[0].mxu0
        %2160 = vmatprep.mubr.bf16.mxu0 0
        %2161 = vmatmul.mubr.bf16.gmra.mrb[0].mxu0 %v2050
        %v2162 = vpop.f32.mrb[0].mxu0
        %v2163 = vadd.f32 0.0, %v2162
        %v2164 = vpop.f32.mrb[0].mxu0
        %v2165 = vpop.f32.mrb[0].mxu0
        %v2166 = vadd.f32 0.0, %v2165
        %v2167 = vpop.f32.mrb[0].mxu0
        %2168 = vmatprep.mubr.bf16.mxu0 0
        %2169 = vmatmul.mubr.bf16.gmra.mrb[0].mxu0 %v2053
        %v2170 = vpop.f32.mrb[0].mxu0
        %v2171 = vadd.f32 0.0, %v2170
        %v2172 = vpop.f32.mrb[0].mxu0
        %v2173 = vpop.f32.mrb[0].mxu0
        %v2174 = vadd.f32 0.0, %v2173
        %v2175 = vpop.f32.mrb[0].mxu0
        %2176 = vmatprep.mubr.bf16.mxu0 0
        %2177 = vmatmul.mubr.bf16.gmra.mrb[0].mxu0 %v2056
        %v2178 = vpop.f32.mrb[0].mxu0
        %v2179 = vadd.f32 0.0, %v2178
        %v2180 = vpop.f32.mrb[0].mxu0
        %v2181 = vpop.f32.mrb[0].mxu0
        %v2182 = vadd.f32 0.0, %v2181
        %v2183 = vpop.f32.mrb[0].mxu0
        %2184 = vmatprep.mubr.bf16.mxu0 0
        %2185 = vmatmul.mubr.bf16.gmra.mrb[0].mxu0 %v2059
        %v2186 = vpop.f32.mrb[0].mxu0
        %v2187 = vadd.f32 0.0, %v2186
        %v2188 = vpop.f32.mrb[0].mxu0
        %v2189 = vpop.f32.mrb[0].mxu0
        %v2190 = vadd.f32 0.0, %v2189
        %v2191 = vpop.f32.mrb[0].mxu0
        %2192 = vmatprep.mubr.bf16.mxu0 0
        %2193 = vmatmul.mubr.bf16.gmra.mrb[0].mxu0 %v2062
        %v2194 = vpop.f32.mrb[0].mxu0
        %v2195 = vadd.f32 0.0, %v2194
        %v2196 = vpop.f32.mrb[0].mxu0
        %v2197 = vpop.f32.mrb[0].mxu0
        %v2198 = vadd.f32 0.0, %v2197
        %v2199 = vpop.f32.mrb[0].mxu0
        %2200 = vmatprep.mubr.bf16.mxu0 0
        %2201 = vmatmul.mubr.bf16.gmra.mrb[0].mxu0 %v2065
        %v2202 = vpop.f32.mrb[0].mxu0
        %v2203 = vadd.f32 0.0, %v2202
        %v2204 = vpop.f32.mrb[0].mxu0
        %v2205 = vpop.f32.mrb[0].mxu0
        %v2206 = vadd.f32 0.0, %v2205
        %v2207 = vpop.f32.mrb[0].mxu0
        %2208 = vmatprep.mubr.bf16.mxu0 0
        %2209 = vmatmul.mubr.bf16.gmra.mrb[0].mxu0 %v2068
        %v2210 = vpop.f32.mrb[0].mxu0
        %v2211 = vadd.f32 0.0, %v2210
        %v2212 = vpop.f32.mrb[0].mxu0
        %v2213 = vpop.f32.mrb[0].mxu0
        %v2214 = vadd.f32 0.0, %v2213
        %v2215 = vpop.f32.mrb[0].mxu0
        %2216 = vmatprep.mubr.bf16.mxu0 0
        %2217 = vmatmul.mubr.bf16.gmra.mrb[0].mxu0 %v2071
        %v2218 = vpop.f32.mrb[0].mxu0
        %v2219 = vadd.f32 0.0, %v2218
        %v2220 = vpop.f32.mrb[0].mxu0
        %v2221 = vpop.f32.mrb[0].mxu0
        %v2222 = vadd.f32 0.0, %v2221
        %v2223 = vpop.f32.mrb[0].mxu0
        %2224 = vmatprep.mubr.bf16.mxu0 0
        %2225 = vmatmul.mubr.bf16.gmra.mrb[0].mxu0 %v2074
        %v2226 = vpop.f32.mrb[0].mxu0
        %v2227 = vadd.f32 0.0, %v2226
        %v2228 = vpop.f32.mrb[0].mxu0
        %v2229 = vpop.f32.mrb[0].mxu0
        %v2230 = vadd.f32 0.0, %v2229
        %v2231 = vpop.f32.mrb[0].mxu0
        %2232 = vmatprep.mubr.bf16.mxu0 0
        %2233 = vmatmul.mubr.bf16.gmra.mrb[0].mxu0 %v2077
        %v2234 = vpop.f32.mrb[0].mxu0
        %v2235 = vadd.f32 0.0, %v2234
        %v2236 = vpop.f32.mrb[0].mxu0
        %v2237 = vpop.f32.mrb[0].mxu0
        %v2238 = vadd.f32 0.0, %v2237
        %v2239 = vpop.f32.mrb[0].mxu0
        %2240 = vmatprep.mubr.bf16.mxu0 0
        %2241 = vmatmul.mubr.bf16.gmra.mrb[0].mxu0 %v2080
        %v2242 = vpop.f32.mrb[0].mxu0
        %v2243 = vadd.f32 0.0, %v2242
        %v2244 = vpop.f32.mrb[0].mxu0
        %v2245 = vpop.f32.mrb[0].mxu0
        %v2246 = vadd.f32 0.0, %v2245
        %v2247 = vpop.f32.mrb[0].mxu0
        %2248 = vmatprep.mubr.bf16.mxu0 0
        %2249 = vmatmul.mubr.bf16.gmra.mrb[0].mxu0 %v2083
        %v2250 = vpop.f32.mrb[0].mxu0
        %v2251 = vadd.f32 0.0, %v2250
        %v2252 = vpop.f32.mrb[0].mxu0
        %v2253 = vpop.f32.mrb[0].mxu0
        %v2254 = vadd.f32 0.0, %v2253
        %v2255 = vpop.f32.mrb[0].mxu0
        %2256 = vmatprep.mubr.bf16.mxu0 0
        %2257 = vmatmul.mubr.bf16.gmra.mrb[0].mxu0 %v2086
        %v2258 = vpop.f32.mrb[0].mxu0
        %v2259 = vadd.f32 0.0, %v2258
        %v2260 = vpop.f32.mrb[0].mxu0
        %v2261 = vpop.f32.mrb[0].mxu0
        %v2262 = vadd.f32 0.0, %v2261
        %v2263 = vpop.f32.mrb[0].mxu0
        %2264 = vdwg.mxu0
        %v2265 = vadd.f32 %v1752, %v2123
        %v2266 = vadd.f32 %v1755, %v2126
        %v2267 = vadd.f32 %v1760, %v2131
        %v2268 = vadd.f32 %v1763, %v2134
        %v2269 = vadd.f32 %v1768, %v2139
        %v2270 = vadd.f32 %v1771, %v2142
        %v2271 = vadd.f32 %v1776, %v2147
        %v2272 = vadd.f32 %v1779, %v2150
        %v2273 = vadd.f32 %v1784, %v2155
        %v2274 = vadd.f32 %v1787, %v2158
        %v2275 = vadd.f32 %v1792, %v2163
        %v2276 = vadd.f32 %v1795, %v2166
        %v2277 = vadd.f32 %v1800, %v2171
        %v2278 = vadd.f32 %v1803, %v2174
        %v2279 = vadd.f32 %v1808, %v2179
        %v2280 = vadd.f32 %v1811, %v2182
        %v2281 = vadd.f32 %v1816, %v2187
        %v2282 = vadd.f32 %v1819, %v2190
        %v2283 = vadd.f32 %v1824, %v2195
        %v2284 = vadd.f32 %v1827, %v2198
        %v2285 = vadd.f32 %v1832, %v2203
        %v2286 = vadd.f32 %v1835, %v2206
        %v2287 = vadd.f32 %v1840, %v2211
        %v2288 = vadd.f32 %v1843, %v2214
        %v2289 = vadd.f32 %v1848, %v2219
        %v2290 = vadd.f32 %v1851, %v2222
        %v2291 = vadd.f32 %v1856, %v2227
        %v2292 = vadd.f32 %v1859, %v2230
        %v2293 = vadd.f32 %v1864, %v2235
        %v2294 = vadd.f32 %v1867, %v2238
        %v2295 = vadd.f32 %v1872, %v2243
        %v2296 = vadd.f32 %v1875, %v2246
        %v2297 = vadd.f32 %v1880, %v2251
        %v2298 = vadd.f32 %v1883, %v2254
        %v2299 = vadd.f32 %v1888, %v2259
        %v2300 = vadd.f32 %v1891, %v2262
        %v2301 = vld [vmem:[%s3] sm:$0x1]
        %v2303 = vlaneseq
        %v2304 = vshrl.u32 %v2303, 7
        %v2305 = vsub.s32 0, %v2304
        %v2306 = vrot.slane %v2301, %v2305
        %v2308 = vadd.f32 %v2265, %v2306
        %v2309 = vadd.f32 %v2266, %v2306
        %v2310 = vadd.f32 %v2267, %v2306
        %v2311 = vadd.f32 %v2268, %v2306
        %v2312 = vadd.f32 %v2269, %v2306
        %v2313 = vadd.f32 %v2270, %v2306
        %v2314 = vadd.f32 %v2271, %v2306
        %v2315 = vadd.f32 %v2272, %v2306
        %v2316 = vadd.f32 %v2273, %v2306
        %v2317 = vadd.f32 %v2274, %v2306
        %v2318 = vadd.f32 %v2275, %v2306
        %v2319 = vadd.f32 %v2276, %v2306
        %v2320 = vadd.f32 %v2277, %v2306
        %v2321 = vadd.f32 %v2278, %v2306
        %v2322 = vadd.f32 %v2279, %v2306
        %v2323 = vadd.f32 %v2280, %v2306
        %v2324 = vadd.f32 %v2281, %v2306
        %v2325 = vadd.f32 %v2282, %v2306
        %v2326 = vadd.f32 %v2283, %v2306
        %v2327 = vadd.f32 %v2284, %v2306
        %v2328 = vadd.f32 %v2285, %v2306
        %v2329 = vadd.f32 %v2286, %v2306
        %v2330 = vadd.f32 %v2287, %v2306
        %v2331 = vadd.f32 %v2288, %v2306
        %v2332 = vadd.f32 %v2289, %v2306
        %v2333 = vadd.f32 %v2290, %v2306
        %v2334 = vadd.f32 %v2291, %v2306
        %v2335 = vadd.f32 %v2292, %v2306
        %v2336 = vadd.f32 %v2293, %v2306
        %v2337 = vadd.f32 %v2294, %v2306
        %v2338 = vadd.f32 %v2295, %v2306
        %v2339 = vadd.f32 %v2296, %v2306
        %v2340 = vadd.f32 %v2297, %v2306
        %v2341 = vadd.f32 %v2298, %v2306
        %v2342 = vadd.f32 %v2299, %v2306
        %v2343 = vadd.f32 %v2300, %v2306
        %v2344 = vmax.f32 %v2308, 0.0
        %v2345 = vmax.f32 %v2309, 0.0
        %v2346 = vmax.f32 %v2310, 0.0
        %v2347 = vmax.f32 %v2311, 0.0
        %v2348 = vmax.f32 %v2312, 0.0
        %v2349 = vmax.f32 %v2313, 0.0
        %v2350 = vmax.f32 %v2314, 0.0
        %v2351 = vmax.f32 %v2315, 0.0
        %v2352 = vmax.f32 %v2316, 0.0
        %v2353 = vmax.f32 %v2317, 0.0
        %v2354 = vmax.f32 %v2318, 0.0
        %v2355 = vmax.f32 %v2319, 0.0
        %v2356 = vmax.f32 %v2320, 0.0
        %v2357 = vmax.f32 %v2321, 0.0
        %v2358 = vmax.f32 %v2322, 0.0
        %v2359 = vmax.f32 %v2323, 0.0
        %v2360 = vmax.f32 %v2324, 0.0
        %v2361 = vmax.f32 %v2325, 0.0
        %v2362 = vmax.f32 %v2326, 0.0
        %v2363 = vmax.f32 %v2327, 0.0
        %v2364 = vmax.f32 %v2328, 0.0
        %v2365 = vmax.f32 %v2329, 0.0
        %v2366 = vmax.f32 %v2330, 0.0
        %v2367 = vmax.f32 %v2331, 0.0
        %v2368 = vmax.f32 %v2332, 0.0
        %v2369 = vmax.f32 %v2333, 0.0
        %v2370 = vmax.f32 %v2334, 0.0
        %v2371 = vmax.f32 %v2335, 0.0
        %v2372 = vmax.f32 %v2336, 0.0
        %v2373 = vmax.f32 %v2337, 0.0
        %v2374 = vmax.f32 %v2338, 0.0
        %v2375 = vmax.f32 %v2339, 0.0
        %v2376 = vmax.f32 %v2340, 0.0
        %v2377 = vmax.f32 %v2341, 0.0
        %v2378 = vmax.f32 %v2342, 0.0
        %v2379 = vmax.f32 %v2343, 0.0
        %s2380 = ssub.s32 %s239, 1
        %v2381 = vlaneseq
        %v2382 = vshrl.u32 %v2381, 7
        %v2383 = vadd.s32 %v2382, 8
        %v2384 = vadd.s32 %v2382, 16
        %v2385 = vstv %s2380
        %v2386 = vadd.s32 %v2385, %v2382
        %v2387 = vadd.s32 %v2385, %v2383
        %v2388 = vadd.s32 %v2385, %v2384
        %vm2389 = vcmp.ge.s32.totalorder %v2386, 0
        %vm2390 = vcmp.ge.s32.totalorder %v2387, 0
        %vm2391 = vcmp.ge.s32.totalorder %v2388, 0
        %vm2392 = vcmp.lt.s32.totalorder %v2386, 16
        %vm2393 = vcmp.lt.s32.totalorder %v2387, 16
        %vm2394 = vcmp.lt.s32.totalorder %v2388, 16
        %vm2395 = vmand %vm2389, %vm2392
        %vm2396 = vmand %vm2390, %vm2393
        %vm2397 = vmand %vm2391, %vm2394
        %v2398 = vsel %vm2395, 1, 0
        %v2399 = vsel %vm2396, 1, 0
        %v2400 = vsel %vm2397, 1, 0
        %v2401 = vlaneseq
        %v2402 = vshrl.u32 %v2401, 7
        %v2403 = vsub.s32 0, %v2402
        %v2404 = vrot.slane %v2398, %v2403
        %v2405 = vlaneseq
        %v2406 = vshrl.u32 %v2405, 7
        %v2407 = vsub.s32 1, %v2406
        %v2408 = vrot.slane %v2398, %v2407
        %v2409 = vlaneseq
        %v2410 = vshrl.u32 %v2409, 7
        %v2411 = vsub.s32 2, %v2410
        %v2412 = vrot.slane %v2398, %v2411
        %v2413 = vlaneseq
        %v2414 = vshrl.u32 %v2413, 7
        %v2415 = vsub.s32 3, %v2414
        %v2416 = vrot.slane %v2398, %v2415
        %v2417 = vlaneseq
        %v2418 = vshrl.u32 %v2417, 7
        %v2419 = vsub.s32 4, %v2418
        %v2420 = vrot.slane %v2398, %v2419
        %v2421 = vlaneseq
        %v2422 = vshrl.u32 %v2421, 7
        %v2423 = vsub.s32 5, %v2422
        %v2424 = vrot.slane %v2398, %v2423
        %v2425 = vlaneseq
        %v2426 = vshrl.u32 %v2425, 7
        %v2427 = vsub.s32 6, %v2426
        %v2428 = vrot.slane %v2398, %v2427
        %v2429 = vlaneseq
        %v2430 = vshrl.u32 %v2429, 7
        %v2431 = vsub.s32 7, %v2430
        %v2432 = vrot.slane %v2398, %v2431
        %v2433 = vlaneseq
        %v2434 = vshrl.u32 %v2433, 7
        %v2435 = vsub.s32 0, %v2434
        %v2436 = vrot.slane %v2399, %v2435
        %v2437 = vlaneseq
        %v2438 = vshrl.u32 %v2437, 7
        %v2439 = vsub.s32 1, %v2438
        %v2440 = vrot.slane %v2399, %v2439
        %v2441 = vlaneseq
        %v2442 = vshrl.u32 %v2441, 7
        %v2443 = vsub.s32 2, %v2442
        %v2444 = vrot.slane %v2399, %v2443
        %v2445 = vlaneseq
        %v2446 = vshrl.u32 %v2445, 7
        %v2447 = vsub.s32 3, %v2446
        %v2448 = vrot.slane %v2399, %v2447
        %v2449 = vlaneseq
        %v2450 = vshrl.u32 %v2449, 7
        %v2451 = vsub.s32 4, %v2450
        %v2452 = vrot.slane %v2399, %v2451
        %v2453 = vlaneseq
        %v2454 = vshrl.u32 %v2453, 7
        %v2455 = vsub.s32 5, %v2454
        %v2456 = vrot.slane %v2399, %v2455
        %v2457 = vlaneseq
        %v2458 = vshrl.u32 %v2457, 7
        %v2459 = vsub.s32 6, %v2458
        %v2460 = vrot.slane %v2399, %v2459
        %v2461 = vlaneseq
        %v2462 = vshrl.u32 %v2461, 7
        %v2463 = vsub.s32 7, %v2462
        %v2464 = vrot.slane %v2399, %v2463
        %v2465 = vlaneseq
        %v2466 = vshrl.u32 %v2465, 7
        %v2467 = vsub.s32 0, %v2466
        %v2468 = vrot.slane %v2400, %v2467
        %v2469 = vlaneseq
        %v2470 = vshrl.u32 %v2469, 7
        %v2471 = vsub.s32 1, %v2470
        %v2472 = vrot.slane %v2400, %v2471
        %vm2473 = vcmp.ne.s32.totalorder %v2404, 0
        %vm2474 = vcmp.ne.s32.totalorder %v2408, 0
        %vm2475 = vcmp.ne.s32.totalorder %v2412, 0
        %vm2476 = vcmp.ne.s32.totalorder %v2416, 0
        %vm2477 = vcmp.ne.s32.totalorder %v2420, 0
        %vm2478 = vcmp.ne.s32.totalorder %v2424, 0
        %vm2479 = vcmp.ne.s32.totalorder %v2428, 0
        %vm2480 = vcmp.ne.s32.totalorder %v2432, 0
        %vm2481 = vcmp.ne.s32.totalorder %v2436, 0
        %vm2482 = vcmp.ne.s32.totalorder %v2440, 0
        %vm2483 = vcmp.ne.s32.totalorder %v2444, 0
        %vm2484 = vcmp.ne.s32.totalorder %v2448, 0
        %vm2485 = vcmp.ne.s32.totalorder %v2452, 0
        %vm2486 = vcmp.ne.s32.totalorder %v2456, 0
        %vm2487 = vcmp.ne.s32.totalorder %v2460, 0
        %vm2488 = vcmp.ne.s32.totalorder %v2464, 0
        %vm2489 = vcmp.ne.s32.totalorder %v2468, 0
        %vm2490 = vcmp.ne.s32.totalorder %v2472, 0
        %v2491 = vsel %vm2473, 1, 0
        %v2492 = vsel %vm2474, 1, 0
        %v2493 = vsel %vm2475, 1, 0
        %v2494 = vsel %vm2476, 1, 0
        %v2495 = vsel %vm2477, 1, 0
        %v2496 = vsel %vm2478, 1, 0
        %v2497 = vsel %vm2479, 1, 0
        %v2498 = vsel %vm2480, 1, 0
        %v2499 = vsel %vm2481, 1, 0
        %v2500 = vsel %vm2482, 1, 0
        %v2501 = vsel %vm2483, 1, 0
        %v2502 = vsel %vm2484, 1, 0
        %v2503 = vsel %vm2485, 1, 0
        %v2504 = vsel %vm2486, 1, 0
        %v2505 = vsel %vm2487, 1, 0
        %v2506 = vsel %vm2488, 1, 0
        %v2507 = vsel %vm2489, 1, 0
        %v2508 = vsel %vm2490, 1, 0
        %vm2509 = vcmp.eq.s32.totalorder %v2491, 1
        %vm2510 = vcmp.eq.s32.totalorder %v2492, 1
        %vm2511 = vcmp.eq.s32.totalorder %v2493, 1
        %vm2512 = vcmp.eq.s32.totalorder %v2494, 1
        %vm2513 = vcmp.eq.s32.totalorder %v2495, 1
        %vm2514 = vcmp.eq.s32.totalorder %v2496, 1
        %vm2515 = vcmp.eq.s32.totalorder %v2497, 1
        %vm2516 = vcmp.eq.s32.totalorder %v2498, 1
        %vm2517 = vcmp.eq.s32.totalorder %v2499, 1
        %vm2518 = vcmp.eq.s32.totalorder %v2500, 1
        %vm2519 = vcmp.eq.s32.totalorder %v2501, 1
        %vm2520 = vcmp.eq.s32.totalorder %v2502, 1
        %vm2521 = vcmp.eq.s32.totalorder %v2503, 1
        %vm2522 = vcmp.eq.s32.totalorder %v2504, 1
        %vm2523 = vcmp.eq.s32.totalorder %v2505, 1
        %vm2524 = vcmp.eq.s32.totalorder %v2506, 1
        %vm2525 = vcmp.eq.s32.totalorder %v2507, 1
        %vm2526 = vcmp.eq.s32.totalorder %v2508, 1
        %v2527 = vsel %vm2509, %v2344, 0.0
        %v2528 = vsel %vm2509, %v2345, 0.0
        %v2529 = vsel %vm2510, %v2346, 0.0
        %v2530 = vsel %vm2510, %v2347, 0.0
        %v2531 = vsel %vm2511, %v2348, 0.0
        %v2532 = vsel %vm2511, %v2349, 0.0
        %v2533 = vsel %vm2512, %v2350, 0.0
        %v2534 = vsel %vm2512, %v2351, 0.0
        %v2535 = vsel %vm2513, %v2352, 0.0
        %v2536 = vsel %vm2513, %v2353, 0.0
        %v2537 = vsel %vm2514, %v2354, 0.0
        %v2538 = vsel %vm2514, %v2355, 0.0
        %v2539 = vsel %vm2515, %v2356, 0.0
        %v2540 = vsel %vm2515, %v2357, 0.0
        %v2541 = vsel %vm2516, %v2358, 0.0
        %v2542 = vsel %vm2516, %v2359, 0.0
        %v2543 = vsel %vm2517, %v2360, 0.0
        %v2544 = vsel %vm2517, %v2361, 0.0
        %v2545 = vsel %vm2518, %v2362, 0.0
        %v2546 = vsel %vm2518, %v2363, 0.0
        %v2547 = vsel %vm2519, %v2364, 0.0
        %v2548 = vsel %vm2519, %v2365, 0.0
        %v2549 = vsel %vm2520, %v2366, 0.0
        %v2550 = vsel %vm2520, %v2367, 0.0
        %v2551 = vsel %vm2521, %v2368, 0.0
        %v2552 = vsel %vm2521, %v2369, 0.0
        %v2553 = vsel %vm2522, %v2370, 0.0
        %v2554 = vsel %vm2522, %v2371, 0.0
        %v2555 = vsel %vm2523, %v2372, 0.0
        %v2556 = vsel %vm2523, %v2373, 0.0
        %v2557 = vsel %vm2524, %v2374, 0.0
        %v2558 = vsel %vm2524, %v2375, 0.0
        %v2559 = vsel %vm2525, %v2376, 0.0
        %v2560 = vsel %vm2525, %v2377, 0.0
        %v2561 = vsel %vm2526, %v2378, 0.0
        %v2562 = vsel %vm2526, %v2379, 0.0
        %v2563 = vpack.c.bf16 %v2528, %v2527
        %v2564 = vpack.c.bf16 %v2530, %v2529
        %v2565 = vpack.c.bf16 %v2532, %v2531
        %v2566 = vpack.c.bf16 %v2534, %v2533
        %v2567 = vpack.c.bf16 %v2536, %v2535
        %v2568 = vpack.c.bf16 %v2538, %v2537
        %v2569 = vpack.c.bf16 %v2540, %v2539
        %v2570 = vpack.c.bf16 %v2542, %v2541
        %v2571 = vpack.c.bf16 %v2544, %v2543
        %v2572 = vpack.c.bf16 %v2546, %v2545
        %v2573 = vpack.c.bf16 %v2548, %v2547
        %v2574 = vpack.c.bf16 %v2550, %v2549
        %v2575 = vpack.c.bf16 %v2552, %v2551
        %v2576 = vpack.c.bf16 %v2554, %v2553
        %v2577 = vpack.c.bf16 %v2556, %v2555
        %v2578 = vpack.c.bf16 %v2558, %v2557
        %v2579 = vpack.c.bf16 %v2560, %v2559
        %v2580 = vpack.c.bf16 %v2562, %v2561
        %v2582 = vshrl.u32 %v2563, 16
        %v2584 = vrot.slane %v2582, 7
        %v2585 = vshll.u32 %v2563, 16
        %v2587 = vor.u32 %v2584, %v2585
        %v2589 = vshrl.u32 %v2564, 16
        %v2591 = vrot.slane %v2589, 7
        %v2592 = vshll.u32 %v2564, 16
        %v2594 = vor.u32 %v2591, %v2592
        %v2596 = vshrl.u32 %v2565, 16
        %v2598 = vrot.slane %v2596, 7
        %v2599 = vshll.u32 %v2565, 16
        %v2601 = vor.u32 %v2598, %v2599
        %v2603 = vshrl.u32 %v2566, 16
        %v2605 = vrot.slane %v2603, 7
        %v2606 = vshll.u32 %v2566, 16
        %v2608 = vor.u32 %v2605, %v2606
        %v2610 = vshrl.u32 %v2567, 16
        %v2612 = vrot.slane %v2610, 7
        %v2613 = vshll.u32 %v2567, 16
        %v2615 = vor.u32 %v2612, %v2613
        %v2617 = vshrl.u32 %v2568, 16
        %v2619 = vrot.slane %v2617, 7
        %v2620 = vshll.u32 %v2568, 16
        %v2622 = vor.u32 %v2619, %v2620
        %v2624 = vshrl.u32 %v2569, 16
        %v2626 = vrot.slane %v2624, 7
        %v2627 = vshll.u32 %v2569, 16
        %v2629 = vor.u32 %v2626, %v2627
        %v2631 = vshrl.u32 %v2570, 16
        %v2633 = vrot.slane %v2631, 7
        %v2634 = vshll.u32 %v2570, 16
        %v2636 = vor.u32 %v2633, %v2634
        %v2638 = vshrl.u32 %v2571, 16
        %v2640 = vrot.slane %v2638, 7
        %v2641 = vshll.u32 %v2571, 16
        %v2643 = vor.u32 %v2640, %v2641
        %v2645 = vshrl.u32 %v2572, 16
        %v2647 = vrot.slane %v2645, 7
        %v2648 = vshll.u32 %v2572, 16
        %v2650 = vor.u32 %v2647, %v2648
        %v2652 = vshrl.u32 %v2573, 16
        %v2654 = vrot.slane %v2652, 7
        %v2655 = vshll.u32 %v2573, 16
        %v2657 = vor.u32 %v2654, %v2655
        %v2659 = vshrl.u32 %v2574, 16
        %v2661 = vrot.slane %v2659, 7
        %v2662 = vshll.u32 %v2574, 16
        %v2664 = vor.u32 %v2661, %v2662
        %v2666 = vshrl.u32 %v2575, 16
        %v2668 = vrot.slane %v2666, 7
        %v2669 = vshll.u32 %v2575, 16
        %v2671 = vor.u32 %v2668, %v2669
        %v2673 = vshrl.u32 %v2576, 16
        %v2675 = vrot.slane %v2673, 7
        %v2676 = vshll.u32 %v2576, 16
        %v2678 = vor.u32 %v2675, %v2676
        %v2680 = vshrl.u32 %v2577, 16
        %v2682 = vrot.slane %v2680, 7
        %v2683 = vshll.u32 %v2577, 16
        %v2685 = vor.u32 %v2682, %v2683
        %v2687 = vshrl.u32 %v2578, 16
        %v2689 = vrot.slane %v2687, 7
        %v2690 = vshll.u32 %v2578, 16
        %v2692 = vor.u32 %v2689, %v2690
        %v2694 = vshrl.u32 %v2579, 16
        %v2696 = vrot.slane %v2694, 7
        %v2697 = vshll.u32 %v2579, 16
        %v2699 = vor.u32 %v2696, %v2697
        %v2701 = vshrl.u32 %v2580, 16
        %v2703 = vrot.slane %v2701, 7
        %v2704 = vshll.u32 %v2580, 16
        %v2706 = vor.u32 %v2703, %v2704
        %vm2743 = vcmask 1040384
        %vm2744 = vsmask.f32 256
        %vm2745 = vmand %vm2743, %vm2744
        %v2746 = vsel %vm2745, 0, %v2587
        %v2747 = vsel %vm2745, 0, %v2594
        %v2748 = vsel %vm2745, 0, %v2601
        %v2749 = vsel %vm2745, 0, %v2608
        %v2750 = vsel %vm2745, 0, %v2615
        %v2751 = vsel %vm2745, 0, %v2622
        %v2752 = vsel %vm2745, 0, %v2629
        %v2753 = vsel %vm2745, 0, %v2636
        %v2754 = vsel %vm2745, 0, %v2643
        %v2755 = vsel %vm2745, 0, %v2650
        %v2756 = vsel %vm2745, 0, %v2657
        %v2757 = vsel %vm2745, 0, %v2664
        %v2758 = vsel %vm2745, 0, %v2671
        %v2759 = vsel %vm2745, 0, %v2678
        %v2760 = vsel %vm2745, 0, %v2685
        %v2761 = vsel %vm2745, 0, %v2692
        %v2762 = vsel %vm2745, 0, %v2699
        %v2763 = vsel %vm2745, 0, %v2706
        %v2764 = vsel %vm2745, %v2584, 0
        %v2765 = vsel %vm2745, %v2591, 0
        %v2766 = vsel %vm2745, %v2598, 0
        %v2767 = vsel %vm2745, %v2605, 0
        %v2768 = vsel %vm2745, %v2612, 0
        %v2769 = vsel %vm2745, %v2619, 0
        %v2770 = vsel %vm2745, %v2626, 0
        %v2771 = vsel %vm2745, %v2633, 0
        %v2772 = vsel %vm2745, %v2640, 0
        %v2773 = vsel %vm2745, %v2647, 0
        %v2774 = vsel %vm2745, %v2654, 0
        %v2775 = vsel %vm2745, %v2661, 0
        %v2776 = vsel %vm2745, %v2668, 0
        %v2777 = vsel %vm2745, %v2675, 0
        %v2778 = vsel %vm2745, %v2682, 0
        %v2779 = vsel %vm2745, %v2689, 0
        %v2780 = vsel %vm2745, %v2696, 0
        %v2781 = vsel %vm2745, %v2703, 0
        %2814 = vrot.lane.b32.xlu0 %v2747, 32
        %v2815 = vpop.permute.xlu0 %2814
        %2816 = vrot.lane.b32.xlu0 %v2765, 32
        %v2817 = vpop.permute.xlu0 %2816
        %2818 = vrot.lane.b32.xlu0 %v2748, 32
        %v2819 = vpop.permute.xlu0 %2818
        %2820 = vrot.lane.b32.xlu0 %v2766, 32
        %v2821 = vpop.permute.xlu0 %2820
        %2822 = vrot.lane.b32.xlu0 %v2749, 32
        %v2823 = vpop.permute.xlu0 %2822
        %2824 = vrot.lane.b32.xlu0 %v2767, 32
        %v2825 = vpop.permute.xlu0 %2824
        %2826 = vrot.lane.b32.xlu0 %v2750, 32
        %v2827 = vpop.permute.xlu0 %2826
        %2828 = vrot.lane.b32.xlu0 %v2768, 32
        %v2829 = vpop.permute.xlu0 %2828
        %2830 = vrot.lane.b32.xlu0 %v2751, 32
        %v2831 = vpop.permute.xlu0 %2830
        %2832 = vrot.lane.b32.xlu0 %v2769, 32
        %v2833 = vpop.permute.xlu0 %2832
        %2834 = vrot.lane.b32.xlu0 %v2752, 32
        %v2835 = vpop.permute.xlu0 %2834
        %2836 = vrot.lane.b32.xlu0 %v2770, 32
        %v2837 = vpop.permute.xlu0 %2836
        %2838 = vrot.lane.b32.xlu0 %v2753, 32
        %v2839 = vpop.permute.xlu0 %2838
        %2840 = vrot.lane.b32.xlu0 %v2771, 32
        %v2841 = vpop.permute.xlu0 %2840
        %2842 = vrot.lane.b32.xlu0 %v2754, 32
        %v2843 = vpop.permute.xlu0 %2842
        %2844 = vrot.lane.b32.xlu0 %v2772, 32
        %v2845 = vpop.permute.xlu0 %2844
        %2846 = vrot.lane.b32.xlu0 %v2755, 32
        %v2847 = vpop.permute.xlu0 %2846
        %2848 = vrot.lane.b32.xlu0 %v2773, 32
        %v2849 = vpop.permute.xlu0 %2848
        %2850 = vrot.lane.b32.xlu0 %v2756, 32
        %v2851 = vpop.permute.xlu0 %2850
        %2852 = vrot.lane.b32.xlu0 %v2774, 32
        %v2853 = vpop.permute.xlu0 %2852
        %2854 = vrot.lane.b32.xlu0 %v2757, 32
        %v2855 = vpop.permute.xlu0 %2854
        %2856 = vrot.lane.b32.xlu0 %v2775, 32
        %v2857 = vpop.permute.xlu0 %2856
        %2858 = vrot.lane.b32.xlu0 %v2758, 32
        %v2859 = vpop.permute.xlu0 %2858
        %2860 = vrot.lane.b32.xlu0 %v2776, 32
        %v2861 = vpop.permute.xlu0 %2860
        %2862 = vrot.lane.b32.xlu0 %v2759, 32
        %v2863 = vpop.permute.xlu0 %2862
        %2864 = vrot.lane.b32.xlu0 %v2777, 32
        %v2865 = vpop.permute.xlu0 %2864
        %2866 = vrot.lane.b32.xlu0 %v2760, 32
        %v2867 = vpop.permute.xlu0 %2866
        %2868 = vrot.lane.b32.xlu0 %v2778, 32
        %v2869 = vpop.permute.xlu0 %2868
        %2870 = vrot.lane.b32.xlu0 %v2761, 32
        %v2871 = vpop.permute.xlu0 %2870
        %2872 = vrot.lane.b32.xlu0 %v2779, 32
        %v2873 = vpop.permute.xlu0 %2872
        %2874 = vrot.lane.b32.xlu0 %v2762, 32
        %v2875 = vpop.permute.xlu0 %2874
        %2876 = vrot.lane.b32.xlu0 %v2780, 32
        %v2877 = vpop.permute.xlu0 %2876
        %2880 = vrot.lane.b32.xlu0 %v2748, 64
        %v2881 = vpop.permute.xlu0 %2880
        %2882 = vrot.lane.b32.xlu0 %v2766, 64
        %v2883 = vpop.permute.xlu0 %2882
        %2884 = vrot.lane.b32.xlu0 %v2749, 64
        %v2885 = vpop.permute.xlu0 %2884
        %2886 = vrot.lane.b32.xlu0 %v2767, 64
        %v2887 = vpop.permute.xlu0 %2886
        %2888 = vrot.lane.b32.xlu0 %v2750, 64
        %v2889 = vpop.permute.xlu0 %2888
        %2890 = vrot.lane.b32.xlu0 %v2768, 64
        %v2891 = vpop.permute.xlu0 %2890
        %2892 = vrot.lane.b32.xlu0 %v2751, 64
        %v2893 = vpop.permute.xlu0 %2892
        %2894 = vrot.lane.b32.xlu0 %v2769, 64
        %v2895 = vpop.permute.xlu0 %2894
        %2896 = vrot.lane.b32.xlu0 %v2752, 64
        %v2897 = vpop.permute.xlu0 %2896
        %2898 = vrot.lane.b32.xlu0 %v2770, 64
        %v2899 = vpop.permute.xlu0 %2898
        %2900 = vrot.lane.b32.xlu0 %v2753, 64
        %v2901 = vpop.permute.xlu0 %2900
        %2902 = vrot.lane.b32.xlu0 %v2771, 64
        %v2903 = vpop.permute.xlu0 %2902
        %2904 = vrot.lane.b32.xlu0 %v2754, 64
        %v2905 = vpop.permute.xlu0 %2904
        %2906 = vrot.lane.b32.xlu0 %v2772, 64
        %v2907 = vpop.permute.xlu0 %2906
        %2908 = vrot.lane.b32.xlu0 %v2755, 64
        %v2909 = vpop.permute.xlu0 %2908
        %2910 = vrot.lane.b32.xlu0 %v2773, 64
        %v2911 = vpop.permute.xlu0 %2910
        %2912 = vrot.lane.b32.xlu0 %v2756, 64
        %v2913 = vpop.permute.xlu0 %2912
        %2914 = vrot.lane.b32.xlu0 %v2774, 64
        %v2915 = vpop.permute.xlu0 %2914
        %2916 = vrot.lane.b32.xlu0 %v2757, 64
        %v2917 = vpop.permute.xlu0 %2916
        %2918 = vrot.lane.b32.xlu0 %v2775, 64
        %v2919 = vpop.permute.xlu0 %2918
        %2920 = vrot.lane.b32.xlu0 %v2758, 64
        %v2921 = vpop.permute.xlu0 %2920
        %2922 = vrot.lane.b32.xlu0 %v2776, 64
        %v2923 = vpop.permute.xlu0 %2922
        %2924 = vrot.lane.b32.xlu0 %v2759, 64
        %v2925 = vpop.permute.xlu0 %2924
        %2926 = vrot.lane.b32.xlu0 %v2777, 64
        %v2927 = vpop.permute.xlu0 %2926
        %2928 = vrot.lane.b32.xlu0 %v2760, 64
        %v2929 = vpop.permute.xlu0 %2928
        %2930 = vrot.lane.b32.xlu0 %v2778, 64
        %v2931 = vpop.permute.xlu0 %2930
        %2932 = vrot.lane.b32.xlu0 %v2761, 64
        %v2933 = vpop.permute.xlu0 %2932
        %2934 = vrot.lane.b32.xlu0 %v2779, 64
        %v2935 = vpop.permute.xlu0 %2934
        %2936 = vrot.lane.b32.xlu0 %v2762, 64
        %v2937 = vpop.permute.xlu0 %2936
        %2938 = vrot.lane.b32.xlu0 %v2780, 64
        %v2939 = vpop.permute.xlu0 %2938
        %2940 = vrot.lane.b32.xlu0 %v2763, 64
        %v2941 = vpop.permute.xlu0 %2940
        %2942 = vrot.lane.b32.xlu0 %v2781, 64
        %v2943 = vpop.permute.xlu0 %2942
        %v2946 = vsel %vm989, %v2746, %v2815
        %v2949 = vsel %vm989, %v2764, %v2817
        %v2952 = vsel %vm989, %v2747, %v2819
        %v2955 = vsel %vm989, %v2765, %v2821
        %v2958 = vsel %vm989, %v2748, %v2823
        %v2961 = vsel %vm989, %v2766, %v2825
        %v2964 = vsel %vm989, %v2749, %v2827
        %v2967 = vsel %vm989, %v2767, %v2829
        %v2970 = vsel %vm989, %v2750, %v2831
        %v2973 = vsel %vm989, %v2768, %v2833
        %v2976 = vsel %vm989, %v2751, %v2835
        %v2979 = vsel %vm989, %v2769, %v2837
        %v2982 = vsel %vm989, %v2752, %v2839
        %v2985 = vsel %vm989, %v2770, %v2841
        %v2988 = vsel %vm989, %v2753, %v2843
        %v2991 = vsel %vm989, %v2771, %v2845
        %v2994 = vsel %vm989, %v2754, %v2847
        %v2997 = vsel %vm989, %v2772, %v2849
        %v3000 = vsel %vm989, %v2755, %v2851
        %v3003 = vsel %vm989, %v2773, %v2853
        %v3006 = vsel %vm989, %v2756, %v2855
        %v3009 = vsel %vm989, %v2774, %v2857
        %v3012 = vsel %vm989, %v2757, %v2859
        %v3015 = vsel %vm989, %v2775, %v2861
        %v3018 = vsel %vm989, %v2758, %v2863
        %v3021 = vsel %vm989, %v2776, %v2865
        %v3024 = vsel %vm989, %v2759, %v2867
        %v3027 = vsel %vm989, %v2777, %v2869
        %v3030 = vsel %vm989, %v2760, %v2871
        %v3033 = vsel %vm989, %v2778, %v2873
        %v3036 = vsel %vm989, %v2761, %v2875
        %v3039 = vsel %vm989, %v2779, %v2877
        %v3041 = vsel %vm1098, %v2946, %v2881
        %v3043 = vsel %vm1098, %v2949, %v2883
        %v3045 = vsel %vm1098, %v2952, %v2885
        %v3047 = vsel %vm1098, %v2955, %v2887
        %v3049 = vsel %vm1098, %v2958, %v2889
        %v3051 = vsel %vm1098, %v2961, %v2891
        %v3053 = vsel %vm1098, %v2964, %v2893
        %v3055 = vsel %vm1098, %v2967, %v2895
        %v3057 = vsel %vm1098, %v2970, %v2897
        %v3059 = vsel %vm1098, %v2973, %v2899
        %v3061 = vsel %vm1098, %v2976, %v2901
        %v3063 = vsel %vm1098, %v2979, %v2903
        %v3065 = vsel %vm1098, %v2982, %v2905
        %v3067 = vsel %vm1098, %v2985, %v2907
        %v3069 = vsel %vm1098, %v2988, %v2909
        %v3071 = vsel %vm1098, %v2991, %v2911
        %v3073 = vsel %vm1098, %v2994, %v2913
        %v3075 = vsel %vm1098, %v2997, %v2915
        %v3077 = vsel %vm1098, %v3000, %v2917
        %v3079 = vsel %vm1098, %v3003, %v2919
        %v3081 = vsel %vm1098, %v3006, %v2921
        %v3083 = vsel %vm1098, %v3009, %v2923
        %v3085 = vsel %vm1098, %v3012, %v2925
        %v3087 = vsel %vm1098, %v3015, %v2927
        %v3089 = vsel %vm1098, %v3018, %v2929
        %v3091 = vsel %vm1098, %v3021, %v2931
        %v3093 = vsel %vm1098, %v3024, %v2933
        %v3095 = vsel %vm1098, %v3027, %v2935
        %v3097 = vsel %vm1098, %v3030, %v2937
        %v3099 = vsel %vm1098, %v3033, %v2939
        %v3101 = vsel %vm1098, %v3036, %v2941
        %v3103 = vsel %vm1098, %v3039, %v2943
        %v3104 = vld [vmem:[%s2] sm:$0xf]
        %v3105 = vld [vmem:[%s2 + $0x4] sm:$0xf]
        %v3106 = vld [vmem:[%s2 + $0x8] sm:$0xf]
        %v3107 = vld [vmem:[%s2 + $0xc] sm:$0xf]
        %v3108 = vld [vmem:[%s2 + $0x10] sm:$0xf]
        %v3109 = vld [vmem:[%s2 + $0x14] sm:$0xf]
        %v3110 = vld [vmem:[%s2 + $0x18] sm:$0xf]
        %v3111 = vld [vmem:[%s2 + $0x1c] sm:$0xf]
        %v3112 = vld [vmem:[%s2 + $0x20] sm:$0xf]
        %v3113 = vld [vmem:[%s2 + $0x24] sm:$0xf]
        %v3114 = vld [vmem:[%s2 + $0x28] sm:$0xf]
        %v3115 = vld [vmem:[%s2 + $0x2c] sm:$0xf]
        %v3116 = vshrl.u32 %v3041, 16
        %v3118 = vshll.u32 %v3041, 16
        %v3120 = vrot.slane %v3118, 1
        %v3121 = vor.u32 %v3116, %v3120
        %v3122 = vshll.u32 %v3043, 16
        %v3124 = vrot.slane %v3122, 1
        %v3125 = vsel %vm1183, %v3121, %v3124
        %v3126 = vshrl.u32 %v3045, 16
        %v3128 = vshll.u32 %v3045, 16
        %v3130 = vrot.slane %v3128, 1
        %v3131 = vor.u32 %v3126, %v3130
        %v3132 = vshll.u32 %v3047, 16
        %v3134 = vrot.slane %v3132, 1
        %v3135 = vsel %vm1183, %v3131, %v3134
        %v3136 = vshrl.u32 %v3049, 16
        %v3138 = vshll.u32 %v3049, 16
        %v3140 = vrot.slane %v3138, 1
        %v3141 = vor.u32 %v3136, %v3140
        %v3142 = vshll.u32 %v3051, 16
        %v3144 = vrot.slane %v3142, 1
        %v3145 = vsel %vm1183, %v3141, %v3144
        %v3146 = vshrl.u32 %v3053, 16
        %v3148 = vshll.u32 %v3053, 16
        %v3150 = vrot.slane %v3148, 1
        %v3151 = vor.u32 %v3146, %v3150
        %v3152 = vshll.u32 %v3055, 16
        %v3154 = vrot.slane %v3152, 1
        %v3155 = vsel %vm1183, %v3151, %v3154
        %v3156 = vshrl.u32 %v3057, 16
        %v3158 = vshll.u32 %v3057, 16
        %v3160 = vrot.slane %v3158, 1
        %v3161 = vor.u32 %v3156, %v3160
        %v3162 = vshll.u32 %v3059, 16
        %v3164 = vrot.slane %v3162, 1
        %v3165 = vsel %vm1183, %v3161, %v3164
        %v3166 = vshrl.u32 %v3061, 16
        %v3168 = vshll.u32 %v3061, 16
        %v3170 = vrot.slane %v3168, 1
        %v3171 = vor.u32 %v3166, %v3170
        %v3172 = vshll.u32 %v3063, 16
        %v3174 = vrot.slane %v3172, 1
        %v3175 = vsel %vm1183, %v3171, %v3174
        %v3176 = vshrl.u32 %v3065, 16
        %v3178 = vshll.u32 %v3065, 16
        %v3180 = vrot.slane %v3178, 1
        %v3181 = vor.u32 %v3176, %v3180
        %v3182 = vshll.u32 %v3067, 16
        %v3184 = vrot.slane %v3182, 1
        %v3185 = vsel %vm1183, %v3181, %v3184
        %v3186 = vshrl.u32 %v3069, 16
        %v3188 = vshll.u32 %v3069, 16
        %v3190 = vrot.slane %v3188, 1
        %v3191 = vor.u32 %v3186, %v3190
        %v3192 = vshll.u32 %v3071, 16
        %v3194 = vrot.slane %v3192, 1
        %v3195 = vsel %vm1183, %v3191, %v3194
        %v3196 = vshrl.u32 %v3073, 16
        %v3198 = vshll.u32 %v3073, 16
        %v3200 = vrot.slane %v3198, 1
        %v3201 = vor.u32 %v3196, %v3200
        %v3202 = vshll.u32 %v3075, 16
        %v3204 = vrot.slane %v3202, 1
        %v3205 = vsel %vm1183, %v3201, %v3204
        %v3206 = vshrl.u32 %v3077, 16
        %v3208 = vshll.u32 %v3077, 16
        %v3210 = vrot.slane %v3208, 1
        %v3211 = vor.u32 %v3206, %v3210
        %v3212 = vshll.u32 %v3079, 16
        %v3214 = vrot.slane %v3212, 1
        %v3215 = vsel %vm1183, %v3211, %v3214
        %v3216 = vshrl.u32 %v3081, 16
        %v3218 = vshll.u32 %v3081, 16
        %v3220 = vrot.slane %v3218, 1
        %v3221 = vor.u32 %v3216, %v3220
        %v3222 = vshll.u32 %v3083, 16
        %v3224 = vrot.slane %v3222, 1
        %v3225 = vsel %vm1183, %v3221, %v3224
        %v3226 = vshrl.u32 %v3085, 16
        %v3228 = vshll.u32 %v3085, 16
        %v3230 = vrot.slane %v3228, 1
        %v3231 = vor.u32 %v3226, %v3230
        %v3232 = vshll.u32 %v3087, 16
        %v3234 = vrot.slane %v3232, 1
        %v3235 = vsel %vm1183, %v3231, %v3234
        %v3236 = vshrl.u32 %v3089, 16
        %v3238 = vshll.u32 %v3089, 16
        %v3240 = vrot.slane %v3238, 1
        %v3241 = vor.u32 %v3236, %v3240
        %v3242 = vshll.u32 %v3091, 16
        %v3244 = vrot.slane %v3242, 1
        %v3245 = vsel %vm1183, %v3241, %v3244
        %v3246 = vshrl.u32 %v3093, 16
        %v3248 = vshll.u32 %v3093, 16
        %v3250 = vrot.slane %v3248, 1
        %v3251 = vor.u32 %v3246, %v3250
        %v3252 = vshll.u32 %v3095, 16
        %v3254 = vrot.slane %v3252, 1
        %v3255 = vsel %vm1183, %v3251, %v3254
        %v3256 = vshrl.u32 %v3097, 16
        %v3258 = vshll.u32 %v3097, 16
        %v3260 = vrot.slane %v3258, 1
        %v3261 = vor.u32 %v3256, %v3260
        %v3262 = vshll.u32 %v3099, 16
        %v3264 = vrot.slane %v3262, 1
        %v3265 = vsel %vm1183, %v3261, %v3264
        %v3266 = vshrl.u32 %v3101, 16
        %v3268 = vshll.u32 %v3101, 16
        %v3270 = vrot.slane %v3268, 1
        %v3271 = vor.u32 %v3266, %v3270
        %v3272 = vshll.u32 %v3103, 16
        %v3274 = vrot.slane %v3272, 1
        %v3275 = vsel %vm1183, %v3271, %v3274
        %s3276 = scalar_lea.vmem %s2, 48
        %v3277 = vld [vmem:[%s3276] sm:$0xf]
        %v3278 = vld [vmem:[%s3276 + $0x4] sm:$0xf]
        %v3279 = vld [vmem:[%s3276 + $0x8] sm:$0xf]
        %v3280 = vld [vmem:[%s3276 + $0xc] sm:$0xf]
        %v3281 = vld [vmem:[%s3276 + $0x10] sm:$0xf]
        %v3282 = vld [vmem:[%s3276 + $0x14] sm:$0xf]
        %v3283 = vld [vmem:[%s3276 + $0x18] sm:$0xf]
        %v3284 = vld [vmem:[%s3276 + $0x1c] sm:$0xf]
        %v3285 = vld [vmem:[%s3276 + $0x20] sm:$0xf]
        %v3286 = vld [vmem:[%s3276 + $0x24] sm:$0xf]
        %v3287 = vld [vmem:[%s3276 + $0x28] sm:$0xf]
        %v3288 = vld [vmem:[%s3276 + $0x2c] sm:$0xf]
        %v3301 = vunpack.c.l.b16 %v3277
        %v3302 = vunpack.c.l.b16 %v3278
        %v3303 = vunpack.c.l.b16 %v3279
        %v3304 = vunpack.c.l.b16 %v3280
        %v3305 = vunpack.c.l.b16 %v3281
        %v3306 = vunpack.c.l.b16 %v3282
        %v3307 = vunpack.c.l.b16 %v3283
        %v3308 = vunpack.c.l.b16 %v3284
        %v3309 = vunpack.c.l.b16 %v3285
        %v3310 = vunpack.c.l.b16 %v3286
        %v3311 = vunpack.c.l.b16 %v3287
        %v3312 = vunpack.c.l.b16 %v3288
        %v3313 = vpack.c.b16 %v3302, %v3301
        %v3314 = vpack.c.b16 %v3304, %v3303
        %v3315 = vpack.c.b16 %v3306, %v3305
        %v3316 = vpack.c.b16 %v3308, %v3307
        %v3317 = vpack.c.b16 %v3310, %v3309
        %v3318 = vpack.c.b16 %v3312, %v3311
        %v3326 = vsel %vm1413, %v3125, 0
        %v3329 = vsel %vm1413, %v3135, 0
        %v3332 = vsel %vm1413, %v3145, 0
        %v3335 = vsel %vm1413, %v3155, 0
        %v3338 = vsel %vm1413, %v3165, 0
        %v3341 = vsel %vm1413, %v3175, 0
        %v3344 = vsel %vm1413, %v3185, 0
        %v3347 = vsel %vm1413, %v3195, 0
        %v3350 = vsel %vm1413, %v3205, 0
        %v3353 = vsel %vm1413, %v3215, 0
        %v3356 = vsel %vm1413, %v3225, 0
        %v3359 = vsel %vm1413, %v3235, 0
        %v3362 = vsel %vm1413, %v3245, 0
        %v3365 = vsel %vm1413, %v3255, 0
        %v3368 = vsel %vm1413, %v3265, 0
        %v3371 = vsel %vm1413, %v3275, 0
        %3373 = vmatprep.subr.bf16.mxu0 0
        %3374 = vmatpush1.bf16.msra.mxu0 %v3313
        %3375 = vmatprep.subr.bf16.mxu0 0
        %3376 = vmatpush1.bf16.msra.mxu0 %v3314
        %3377 = vmatprep.subr.bf16.mxu0 0
        %3378 = vmatpush1.bf16.msra.mxu0 %v3315
        %3379 = vmatprep.subr.bf16.mxu0 0
        %3380 = vmatpush1.bf16.msra.mxu0 %v3316
        %3381 = vmatprep.subr.bf16.mxu0 0
        %3382 = vmatpush1.bf16.msra.mxu0 %v3317
        %3383 = vmatprep.subr.bf16.mxu0 0
        %3384 = vmatpush1.bf16.msra.mxu0 %v3318
        %3385 = vmatprep.subr.bf16.mxu0 0
        %3386 = vmatpush1.bf16.msra.mxu0 0
        %3387 = vmatprep.subr.bf16.mxu0 0
        %3388 = vmatpush1.bf16.msra.mxu0 0
        %3389 = vmatprep.subr.bf16.mxu0 0
        %3390 = vmatpush1.bf16.msra.mxu0 0
        %3391 = vmatprep.subr.bf16.mxu0 0
        %3392 = vmatpush1.bf16.msra.mxu0 0
        %3393 = vmatprep.subr.bf16.mxu0 0
        %3394 = vmatpush1.bf16.msra.mxu0 0
        %3395 = vmatprep.subr.bf16.mxu0 0
        %3396 = vmatpush1.bf16.msra.mxu0 0
        %3397 = vmatprep.subr.bf16.mxu0 0
        %3398 = vmatpush1.bf16.msra.mxu0 0
        %3399 = vmatprep.subr.bf16.mxu0 0
        %3400 = vmatpush1.bf16.msra.mxu0 0
        %3401 = vmatprep.subr.bf16.mxu0 0
        %3402 = vmatpush1.bf16.msra.mxu0 0
        %3403 = vmatprep.subr.bf16.mxu0 0
        %3404 = vmatpush1.bf16.msra.mxu0 0
        %3405 = vmatprep.mubr.bf16.mxu0 0
        %3406 = vmatmul.mubr.bf16.gmra.mrb[0].mxu0 %v3326
        %v3407 = vpop.f32.mrb[0].mxu0
        %v3408 = vadd.f32 0.0, %v3407
        %v3409 = vpop.f32.mrb[0].mxu0
        %v3410 = vpop.f32.mrb[0].mxu0
        %v3411 = vadd.f32 0.0, %v3410
        %v3412 = vpop.f32.mrb[0].mxu0
        %3413 = vmatprep.mubr.bf16.mxu0 0
        %3414 = vmatmul.mubr.bf16.gmra.mrb[0].mxu0 %v3329
        %v3415 = vpop.f32.mrb[0].mxu0
        %v3416 = vadd.f32 0.0, %v3415
        %v3417 = vpop.f32.mrb[0].mxu0
        %v3418 = vpop.f32.mrb[0].mxu0
        %v3419 = vadd.f32 0.0, %v3418
        %v3420 = vpop.f32.mrb[0].mxu0
        %3421 = vmatprep.mubr.bf16.mxu0 0
        %3422 = vmatmul.mubr.bf16.gmra.mrb[0].mxu0 %v3332
        %v3423 = vpop.f32.mrb[0].mxu0
        %v3424 = vadd.f32 0.0, %v3423
        %v3425 = vpop.f32.mrb[0].mxu0
        %v3426 = vpop.f32.mrb[0].mxu0
        %v3427 = vadd.f32 0.0, %v3426
        %v3428 = vpop.f32.mrb[0].mxu0
        %3429 = vmatprep.mubr.bf16.mxu0 0
        %3430 = vmatmul.mubr.bf16.gmra.mrb[0].mxu0 %v3335
        %v3431 = vpop.f32.mrb[0].mxu0
        %v3432 = vadd.f32 0.0, %v3431
        %v3433 = vpop.f32.mrb[0].mxu0
        %v3434 = vpop.f32.mrb[0].mxu0
        %v3435 = vadd.f32 0.0, %v3434
        %v3436 = vpop.f32.mrb[0].mxu0
        %3437 = vmatprep.mubr.bf16.mxu0 0
        %3438 = vmatmul.mubr.bf16.gmra.mrb[0].mxu0 %v3338
        %v3439 = vpop.f32.mrb[0].mxu0
        %v3440 = vadd.f32 0.0, %v3439
        %v3441 = vpop.f32.mrb[0].mxu0
        %v3442 = vpop.f32.mrb[0].mxu0
        %v3443 = vadd.f32 0.0, %v3442
        %v3444 = vpop.f32.mrb[0].mxu0
        %3445 = vmatprep.mubr.bf16.mxu0 0
        %3446 = vmatmul.mubr.bf16.gmra.mrb[0].mxu0 %v3341
        %v3447 = vpop.f32.mrb[0].mxu0
        %v3448 = vadd.f32 0.0, %v3447
        %v3449 = vpop.f32.mrb[0].mxu0
        %v3450 = vpop.f32.mrb[0].mxu0
        %v3451 = vadd.f32 0.0, %v3450
        %v3452 = vpop.f32.mrb[0].mxu0
        %3453 = vmatprep.mubr.bf16.mxu0 0
        %3454 = vmatmul.mubr.bf16.gmra.mrb[0].mxu0 %v3344
        %v3455 = vpop.f32.mrb[0].mxu0
        %v3456 = vadd.f32 0.0, %v3455
        %v3457 = vpop.f32.mrb[0].mxu0
        %v3458 = vpop.f32.mrb[0].mxu0
        %v3459 = vadd.f32 0.0, %v3458
        %v3460 = vpop.f32.mrb[0].mxu0
        %3461 = vmatprep.mubr.bf16.mxu0 0
        %3462 = vmatmul.mubr.bf16.gmra.mrb[0].mxu0 %v3347
        %v3463 = vpop.f32.mrb[0].mxu0
        %v3464 = vadd.f32 0.0, %v3463
        %v3465 = vpop.f32.mrb[0].mxu0
        %v3466 = vpop.f32.mrb[0].mxu0
        %v3467 = vadd.f32 0.0, %v3466
        %v3468 = vpop.f32.mrb[0].mxu0
        %3469 = vmatprep.mubr.bf16.mxu0 0
        %3470 = vmatmul.mubr.bf16.gmra.mrb[0].mxu0 %v3350
        %v3471 = vpop.f32.mrb[0].mxu0
        %v3472 = vadd.f32 0.0, %v3471
        %v3473 = vpop.f32.mrb[0].mxu0
        %v3474 = vpop.f32.mrb[0].mxu0
        %v3475 = vadd.f32 0.0, %v3474
        %v3476 = vpop.f32.mrb[0].mxu0
        %3477 = vmatprep.mubr.bf16.mxu0 0
        %3478 = vmatmul.mubr.bf16.gmra.mrb[0].mxu0 %v3353
        %v3479 = vpop.f32.mrb[0].mxu0
        %v3480 = vadd.f32 0.0, %v3479
        %v3481 = vpop.f32.mrb[0].mxu0
        %v3482 = vpop.f32.mrb[0].mxu0
        %v3483 = vadd.f32 0.0, %v3482
        %v3484 = vpop.f32.mrb[0].mxu0
        %3485 = vmatprep.mubr.bf16.mxu0 0
        %3486 = vmatmul.mubr.bf16.gmra.mrb[0].mxu0 %v3356
        %v3487 = vpop.f32.mrb[0].mxu0
        %v3488 = vadd.f32 0.0, %v3487
        %v3489 = vpop.f32.mrb[0].mxu0
        %v3490 = vpop.f32.mrb[0].mxu0
        %v3491 = vadd.f32 0.0, %v3490
        %v3492 = vpop.f32.mrb[0].mxu0
        %3493 = vmatprep.mubr.bf16.mxu0 0
        %3494 = vmatmul.mubr.bf16.gmra.mrb[0].mxu0 %v3359
        %v3495 = vpop.f32.mrb[0].mxu0
        %v3496 = vadd.f32 0.0, %v3495
        %v3497 = vpop.f32.mrb[0].mxu0
        %v3498 = vpop.f32.mrb[0].mxu0
        %v3499 = vadd.f32 0.0, %v3498
        %v3500 = vpop.f32.mrb[0].mxu0
        %3501 = vmatprep.mubr.bf16.mxu0 0
        %3502 = vmatmul.mubr.bf16.gmra.mrb[0].mxu0 %v3362
        %v3503 = vpop.f32.mrb[0].mxu0
        %v3504 = vadd.f32 0.0, %v3503
        %v3505 = vpop.f32.mrb[0].mxu0
        %v3506 = vpop.f32.mrb[0].mxu0
        %v3507 = vadd.f32 0.0, %v3506
        %v3508 = vpop.f32.mrb[0].mxu0
        %3509 = vmatprep.mubr.bf16.mxu0 0
        %3510 = vmatmul.mubr.bf16.gmra.mrb[0].mxu0 %v3365
        %v3511 = vpop.f32.mrb[0].mxu0
        %v3512 = vadd.f32 0.0, %v3511
        %v3513 = vpop.f32.mrb[0].mxu0
        %v3514 = vpop.f32.mrb[0].mxu0
        %v3515 = vadd.f32 0.0, %v3514
        %v3516 = vpop.f32.mrb[0].mxu0
        %3517 = vmatprep.mubr.bf16.mxu0 0
        %3518 = vmatmul.mubr.bf16.gmra.mrb[0].mxu0 %v3368
        %v3519 = vpop.f32.mrb[0].mxu0
        %v3520 = vadd.f32 0.0, %v3519
        %v3521 = vpop.f32.mrb[0].mxu0
        %v3522 = vpop.f32.mrb[0].mxu0
        %v3523 = vadd.f32 0.0, %v3522
        %v3524 = vpop.f32.mrb[0].mxu0
        %3525 = vmatprep.mubr.bf16.mxu0 0
        %3526 = vmatmul.mubr.bf16.gmra.mrb[0].mxu0 %v3371
        %v3527 = vpop.f32.mrb[0].mxu0
        %v3528 = vadd.f32 0.0, %v3527
        %v3529 = vpop.f32.mrb[0].mxu0
        %v3530 = vpop.f32.mrb[0].mxu0
        %v3531 = vadd.f32 0.0, %v3530
        %v3532 = vpop.f32.mrb[0].mxu0
        %3533 = vdwg.mxu0
        %v3546 = vunpack.c.l.b16 %v3104
        %v3547 = vunpack.c.l.b16 %v3105
        %v3548 = vunpack.c.l.b16 %v3106
        %v3549 = vunpack.c.l.b16 %v3107
        %v3550 = vunpack.c.l.b16 %v3108
        %v3551 = vunpack.c.l.b16 %v3109
        %v3552 = vunpack.c.l.b16 %v3110
        %v3553 = vunpack.c.l.b16 %v3111
        %v3554 = vunpack.c.l.b16 %v3112
        %v3555 = vunpack.c.l.b16 %v3113
        %v3556 = vunpack.c.l.b16 %v3114
        %v3557 = vunpack.c.l.b16 %v3115
        %v3558 = vpack.c.b16 %v3547, %v3546
        %v3559 = vpack.c.b16 %v3549, %v3548
        %v3560 = vpack.c.b16 %v3551, %v3550
        %v3561 = vpack.c.b16 %v3553, %v3552
        %v3562 = vpack.c.b16 %v3555, %v3554
        %v3563 = vpack.c.b16 %v3557, %v3556
        %v3570 = vsel %vm1413, %v3041, 0
        %v3572 = vsel %vm1413, %v3045, 0
        %v3574 = vsel %vm1413, %v3049, 0
        %v3576 = vsel %vm1413, %v3053, 0
        %v3578 = vsel %vm1413, %v3057, 0
        %v3580 = vsel %vm1413, %v3061, 0
        %v3582 = vsel %vm1413, %v3065, 0
        %v3584 = vsel %vm1413, %v3069, 0
        %v3586 = vsel %vm1413, %v3073, 0
        %v3588 = vsel %vm1413, %v3077, 0
        %v3590 = vsel %vm1413, %v3081, 0
        %v3592 = vsel %vm1413, %v3085, 0
        %v3594 = vsel %vm1413, %v3089, 0
        %v3596 = vsel %vm1413, %v3093, 0
        %v3598 = vsel %vm1413, %v3097, 0
        %v3600 = vsel %vm1413, %v3101, 0
        %3602 = vmatprep.subr.bf16.mxu0 0
        %3603 = vmatpush1.bf16.msra.mxu0 %v3558
        %3604 = vmatprep.subr.bf16.mxu0 0
        %3605 = vmatpush1.bf16.msra.mxu0 %v3559
        %3606 = vmatprep.subr.bf16.mxu0 0
        %3607 = vmatpush1.bf16.msra.mxu0 %v3560
        %3608 = vmatprep.subr.bf16.mxu0 0
        %3609 = vmatpush1.bf16.msra.mxu0 %v3561
        %3610 = vmatprep.subr.bf16.mxu0 0
        %3611 = vmatpush1.bf16.msra.mxu0 %v3562
        %3612 = vmatprep.subr.bf16.mxu0 0
        %3613 = vmatpush1.bf16.msra.mxu0 %v3563
        %3614 = vmatprep.subr.bf16.mxu0 0
        %3615 = vmatpush1.bf16.msra.mxu0 0
        %3616 = vmatprep.subr.bf16.mxu0 0
        %3617 = vmatpush1.bf16.msra.mxu0 0
        %3618 = vmatprep.subr.bf16.mxu0 0
        %3619 = vmatpush1.bf16.msra.mxu0 0
        %3620 = vmatprep.subr.bf16.mxu0 0
        %3621 = vmatpush1.bf16.msra.mxu0 0
        %3622 = vmatprep.subr.bf16.mxu0 0
        %3623 = vmatpush1.bf16.msra.mxu0 0
        %3624 = vmatprep.subr.bf16.mxu0 0
        %3625 = vmatpush1.bf16.msra.mxu0 0
        %3626 = vmatprep.subr.bf16.mxu0 0
        %3627 = vmatpush1.bf16.msra.mxu0 0
        %3628 = vmatprep.subr.bf16.mxu0 0
        %3629 = vmatpush1.bf16.msra.mxu0 0
        %3630 = vmatprep.subr.bf16.mxu0 0
        %3631 = vmatpush1.bf16.msra.mxu0 0
        %3632 = vmatprep.subr.bf16.mxu0 0
        %3633 = vmatpush1.bf16.msra.mxu0 0
        %3634 = vmatprep.mubr.bf16.mxu0 0
        %3635 = vmatmul.mubr.bf16.gmra.mrb[0].mxu0 %v3570
        %v3636 = vpop.f32.mrb[0].mxu0
        %v3637 = vadd.f32 %v3408, %v3636
        %v3638 = vpop.f32.mrb[0].mxu0
        %v3639 = vpop.f32.mrb[0].mxu0
        %v3640 = vadd.f32 %v3411, %v3639
        %v3641 = vpop.f32.mrb[0].mxu0
        %3642 = vmatprep.mubr.bf16.mxu0 0
        %3643 = vmatmul.mubr.bf16.gmra.mrb[0].mxu0 %v3572
        %v3644 = vpop.f32.mrb[0].mxu0
        %v3645 = vadd.f32 %v3416, %v3644
        %v3646 = vpop.f32.mrb[0].mxu0
        %v3647 = vpop.f32.mrb[0].mxu0
        %v3648 = vadd.f32 %v3419, %v3647
        %v3649 = vpop.f32.mrb[0].mxu0
        %3650 = vmatprep.mubr.bf16.mxu0 0
        %3651 = vmatmul.mubr.bf16.gmra.mrb[0].mxu0 %v3574
        %v3652 = vpop.f32.mrb[0].mxu0
        %v3653 = vadd.f32 %v3424, %v3652
        %v3654 = vpop.f32.mrb[0].mxu0
        %v3655 = vpop.f32.mrb[0].mxu0
        %v3656 = vadd.f32 %v3427, %v3655
        %v3657 = vpop.f32.mrb[0].mxu0
        %3658 = vmatprep.mubr.bf16.mxu0 0
        %3659 = vmatmul.mubr.bf16.gmra.mrb[0].mxu0 %v3576
        %v3660 = vpop.f32.mrb[0].mxu0
        %v3661 = vadd.f32 %v3432, %v3660
        %v3662 = vpop.f32.mrb[0].mxu0
        %v3663 = vpop.f32.mrb[0].mxu0
        %v3664 = vadd.f32 %v3435, %v3663
        %v3665 = vpop.f32.mrb[0].mxu0
        %3666 = vmatprep.mubr.bf16.mxu0 0
        %3667 = vmatmul.mubr.bf16.gmra.mrb[0].mxu0 %v3578
        %v3668 = vpop.f32.mrb[0].mxu0
        %v3669 = vadd.f32 %v3440, %v3668
        %v3670 = vpop.f32.mrb[0].mxu0
        %v3671 = vpop.f32.mrb[0].mxu0
        %v3672 = vadd.f32 %v3443, %v3671
        %v3673 = vpop.f32.mrb[0].mxu0
        %3674 = vmatprep.mubr.bf16.mxu0 0
        %3675 = vmatmul.mubr.bf16.gmra.mrb[0].mxu0 %v3580
        %v3676 = vpop.f32.mrb[0].mxu0
        %v3677 = vadd.f32 %v3448, %v3676
        %v3678 = vpop.f32.mrb[0].mxu0
        %v3679 = vpop.f32.mrb[0].mxu0
        %v3680 = vadd.f32 %v3451, %v3679
        %v3681 = vpop.f32.mrb[0].mxu0
        %3682 = vmatprep.mubr.bf16.mxu0 0
        %3683 = vmatmul.mubr.bf16.gmra.mrb[0].mxu0 %v3582
        %v3684 = vpop.f32.mrb[0].mxu0
        %v3685 = vadd.f32 %v3456, %v3684
        %v3686 = vpop.f32.mrb[0].mxu0
        %v3687 = vpop.f32.mrb[0].mxu0
        %v3688 = vadd.f32 %v3459, %v3687
        %v3689 = vpop.f32.mrb[0].mxu0
        %3690 = vmatprep.mubr.bf16.mxu0 0
        %3691 = vmatmul.mubr.bf16.gmra.mrb[0].mxu0 %v3584
        %v3692 = vpop.f32.mrb[0].mxu0
        %v3693 = vadd.f32 %v3464, %v3692
        %v3694 = vpop.f32.mrb[0].mxu0
        %v3695 = vpop.f32.mrb[0].mxu0
        %v3696 = vadd.f32 %v3467, %v3695
        %v3697 = vpop.f32.mrb[0].mxu0
        %3698 = vmatprep.mubr.bf16.mxu0 0
        %3699 = vmatmul.mubr.bf16.gmra.mrb[0].mxu0 %v3586
        %v3700 = vpop.f32.mrb[0].mxu0
        %v3701 = vadd.f32 %v3472, %v3700
        %v3702 = vpop.f32.mrb[0].mxu0
        %v3703 = vpop.f32.mrb[0].mxu0
        %v3704 = vadd.f32 %v3475, %v3703
        %v3705 = vpop.f32.mrb[0].mxu0
        %3706 = vmatprep.mubr.bf16.mxu0 0
        %3707 = vmatmul.mubr.bf16.gmra.mrb[0].mxu0 %v3588
        %v3708 = vpop.f32.mrb[0].mxu0
        %v3709 = vadd.f32 %v3480, %v3708
        %v3710 = vpop.f32.mrb[0].mxu0
        %v3711 = vpop.f32.mrb[0].mxu0
        %v3712 = vadd.f32 %v3483, %v3711
        %v3713 = vpop.f32.mrb[0].mxu0
        %3714 = vmatprep.mubr.bf16.mxu0 0
        %3715 = vmatmul.mubr.bf16.gmra.mrb[0].mxu0 %v3590
        %v3716 = vpop.f32.mrb[0].mxu0
        %v3717 = vadd.f32 %v3488, %v3716
        %v3718 = vpop.f32.mrb[0].mxu0
        %v3719 = vpop.f32.mrb[0].mxu0
        %v3720 = vadd.f32 %v3491, %v3719
        %v3721 = vpop.f32.mrb[0].mxu0
        %3722 = vmatprep.mubr.bf16.mxu0 0
        %3723 = vmatmul.mubr.bf16.gmra.mrb[0].mxu0 %v3592
        %v3724 = vpop.f32.mrb[0].mxu0
        %v3725 = vadd.f32 %v3496, %v3724
        %v3726 = vpop.f32.mrb[0].mxu0
        %v3727 = vpop.f32.mrb[0].mxu0
        %v3728 = vadd.f32 %v3499, %v3727
        %v3729 = vpop.f32.mrb[0].mxu0
        %3730 = vmatprep.mubr.bf16.mxu0 0
        %3731 = vmatmul.mubr.bf16.gmra.mrb[0].mxu0 %v3594
        %v3732 = vpop.f32.mrb[0].mxu0
        %v3733 = vadd.f32 %v3504, %v3732
        %v3734 = vpop.f32.mrb[0].mxu0
        %v3735 = vpop.f32.mrb[0].mxu0
        %v3736 = vadd.f32 %v3507, %v3735
        %v3737 = vpop.f32.mrb[0].mxu0
        %3738 = vmatprep.mubr.bf16.mxu0 0
        %3739 = vmatmul.mubr.bf16.gmra.mrb[0].mxu0 %v3596
        %v3740 = vpop.f32.mrb[0].mxu0
        %v3741 = vadd.f32 %v3512, %v3740
        %v3742 = vpop.f32.mrb[0].mxu0
        %v3743 = vpop.f32.mrb[0].mxu0
        %v3744 = vadd.f32 %v3515, %v3743
        %v3745 = vpop.f32.mrb[0].mxu0
        %3746 = vmatprep.mubr.bf16.mxu0 0
        %3747 = vmatmul.mubr.bf16.gmra.mrb[0].mxu0 %v3598
        %v3748 = vpop.f32.mrb[0].mxu0
        %v3749 = vadd.f32 %v3520, %v3748
        %v3750 = vpop.f32.mrb[0].mxu0
        %v3751 = vpop.f32.mrb[0].mxu0
        %v3752 = vadd.f32 %v3523, %v3751
        %v3753 = vpop.f32.mrb[0].mxu0
        %3754 = vmatprep.mubr.bf16.mxu0 0
        %3755 = vmatmul.mubr.bf16.gmra.mrb[0].mxu0 %v3600
        %v3756 = vpop.f32.mrb[0].mxu0
        %v3757 = vadd.f32 %v3528, %v3756
        %v3758 = vpop.f32.mrb[0].mxu0
        %v3759 = vpop.f32.mrb[0].mxu0
        %v3760 = vadd.f32 %v3531, %v3759
        %v3761 = vpop.f32.mrb[0].mxu0
        %3762 = vdwg.mxu0
        %v3795 = vrot.slane %v3041, 1
        %v3796 = vrot.slane %v3043, 1
        %v3797 = vsel %vm1930, %v3795, %v3796
        %v3798 = vrot.slane %v3045, 1
        %v3799 = vrot.slane %v3047, 1
        %v3800 = vsel %vm1930, %v3798, %v3799
        %v3801 = vrot.slane %v3049, 1
        %v3802 = vrot.slane %v3051, 1
        %v3803 = vsel %vm1930, %v3801, %v3802
        %v3804 = vrot.slane %v3053, 1
        %v3805 = vrot.slane %v3055, 1
        %v3806 = vsel %vm1930, %v3804, %v3805
        %v3807 = vrot.slane %v3057, 1
        %v3808 = vrot.slane %v3059, 1
        %v3809 = vsel %vm1930, %v3807, %v3808
        %v3810 = vrot.slane %v3061, 1
        %v3811 = vrot.slane %v3063, 1
        %v3812 = vsel %vm1930, %v3810, %v3811
        %v3813 = vrot.slane %v3065, 1
        %v3814 = vrot.slane %v3067, 1
        %v3815 = vsel %vm1930, %v3813, %v3814
        %v3816 = vrot.slane %v3069, 1
        %v3817 = vrot.slane %v3071, 1
        %v3818 = vsel %vm1930, %v3816, %v3817
        %v3819 = vrot.slane %v3073, 1
        %v3820 = vrot.slane %v3075, 1
        %v3821 = vsel %vm1930, %v3819, %v3820
        %v3822 = vrot.slane %v3077, 1
        %v3823 = vrot.slane %v3079, 1
        %v3824 = vsel %vm1930, %v3822, %v3823
        %v3825 = vrot.slane %v3081, 1
        %v3826 = vrot.slane %v3083, 1
        %v3827 = vsel %vm1930, %v3825, %v3826
        %v3828 = vrot.slane %v3085, 1
        %v3829 = vrot.slane %v3087, 1
        %v3830 = vsel %vm1930, %v3828, %v3829
        %v3831 = vrot.slane %v3089, 1
        %v3832 = vrot.slane %v3091, 1
        %v3833 = vsel %vm1930, %v3831, %v3832
        %v3834 = vrot.slane %v3093, 1
        %v3835 = vrot.slane %v3095, 1
        %v3836 = vsel %vm1930, %v3834, %v3835
        %v3837 = vrot.slane %v3097, 1
        %v3838 = vrot.slane %v3099, 1
        %v3839 = vsel %vm1930, %v3837, %v3838
        %v3840 = vrot.slane %v3101, 1
        %v3841 = vrot.slane %v3103, 1
        %v3842 = vsel %vm1930, %v3840, %v3841
        %s3843 = scalar_lea.vmem %s2, 96
        %v3844 = vld [vmem:[%s3843] sm:$0xf]
        %v3845 = vld [vmem:[%s3843 + $0x4] sm:$0xf]
        %v3846 = vld [vmem:[%s3843 + $0x8] sm:$0xf]
        %v3847 = vld [vmem:[%s3843 + $0xc] sm:$0xf]
        %v3848 = vld [vmem:[%s3843 + $0x10] sm:$0xf]
        %v3849 = vld [vmem:[%s3843 + $0x14] sm:$0xf]
        %v3850 = vld [vmem:[%s3843 + $0x18] sm:$0xf]
        %v3851 = vld [vmem:[%s3843 + $0x1c] sm:$0xf]
        %v3852 = vld [vmem:[%s3843 + $0x20] sm:$0xf]
        %v3853 = vld [vmem:[%s3843 + $0x24] sm:$0xf]
        %v3854 = vld [vmem:[%s3843 + $0x28] sm:$0xf]
        %v3855 = vld [vmem:[%s3843 + $0x2c] sm:$0xf]
        %v3868 = vunpack.c.l.b16 %v3844
        %v3869 = vunpack.c.l.b16 %v3845
        %v3870 = vunpack.c.l.b16 %v3846
        %v3871 = vunpack.c.l.b16 %v3847
        %v3872 = vunpack.c.l.b16 %v3848
        %v3873 = vunpack.c.l.b16 %v3849
        %v3874 = vunpack.c.l.b16 %v3850
        %v3875 = vunpack.c.l.b16 %v3851
        %v3876 = vunpack.c.l.b16 %v3852
        %v3877 = vunpack.c.l.b16 %v3853
        %v3878 = vunpack.c.l.b16 %v3854
        %v3879 = vunpack.c.l.b16 %v3855
        %v3880 = vpack.c.b16 %v3869, %v3868
        %v3881 = vpack.c.b16 %v3871, %v3870
        %v3882 = vpack.c.b16 %v3873, %v3872
        %v3883 = vpack.c.b16 %v3875, %v3874
        %v3884 = vpack.c.b16 %v3877, %v3876
        %v3885 = vpack.c.b16 %v3879, %v3878
        %v3893 = vsel %vm1413, %v3797, 0
        %v3896 = vsel %vm1413, %v3800, 0
        %v3899 = vsel %vm1413, %v3803, 0
        %v3902 = vsel %vm1413, %v3806, 0
        %v3905 = vsel %vm1413, %v3809, 0
        %v3908 = vsel %vm1413, %v3812, 0
        %v3911 = vsel %vm1413, %v3815, 0
        %v3914 = vsel %vm1413, %v3818, 0
        %v3917 = vsel %vm1413, %v3821, 0
        %v3920 = vsel %vm1413, %v3824, 0
        %v3923 = vsel %vm1413, %v3827, 0
        %v3926 = vsel %vm1413, %v3830, 0
        %v3929 = vsel %vm1413, %v3833, 0
        %v3932 = vsel %vm1413, %v3836, 0
        %v3935 = vsel %vm1413, %v3839, 0
        %v3938 = vsel %vm1413, %v3842, 0
        %3940 = vmatprep.subr.bf16.mxu0 0
        %3941 = vmatpush1.bf16.msra.mxu0 %v3880
        %3942 = vmatprep.subr.bf16.mxu0 0
        %3943 = vmatpush1.bf16.msra.mxu0 %v3881
        %3944 = vmatprep.subr.bf16.mxu0 0
        %3945 = vmatpush1.bf16.msra.mxu0 %v3882
        %3946 = vmatprep.subr.bf16.mxu0 0
        %3947 = vmatpush1.bf16.msra.mxu0 %v3883
        %3948 = vmatprep.subr.bf16.mxu0 0
        %3949 = vmatpush1.bf16.msra.mxu0 %v3884
        %3950 = vmatprep.subr.bf16.mxu0 0
        %3951 = vmatpush1.bf16.msra.mxu0 %v3885
        %3952 = vmatprep.subr.bf16.mxu0 0
        %3953 = vmatpush1.bf16.msra.mxu0 0
        %3954 = vmatprep.subr.bf16.mxu0 0
        %3955 = vmatpush1.bf16.msra.mxu0 0
        %3956 = vmatprep.subr.bf16.mxu0 0
        %3957 = vmatpush1.bf16.msra.mxu0 0
        %3958 = vmatprep.subr.bf16.mxu0 0
        %3959 = vmatpush1.bf16.msra.mxu0 0
        %3960 = vmatprep.subr.bf16.mxu0 0
        %3961 = vmatpush1.bf16.msra.mxu0 0
        %3962 = vmatprep.subr.bf16.mxu0 0
        %3963 = vmatpush1.bf16.msra.mxu0 0
        %3964 = vmatprep.subr.bf16.mxu0 0
        %3965 = vmatpush1.bf16.msra.mxu0 0
        %3966 = vmatprep.subr.bf16.mxu0 0
        %3967 = vmatpush1.bf16.msra.mxu0 0
        %3968 = vmatprep.subr.bf16.mxu0 0
        %3969 = vmatpush1.bf16.msra.mxu0 0
        %3970 = vmatprep.subr.bf16.mxu0 0
        %3971 = vmatpush1.bf16.msra.mxu0 0
        %3972 = vmatprep.mubr.bf16.mxu0 0
        %3973 = vmatmul.mubr.bf16.gmra.mrb[0].mxu0 %v3893
        %v3974 = vpop.f32.mrb[0].mxu0
        %v3975 = vadd.f32 0.0, %v3974
        %v3976 = vpop.f32.mrb[0].mxu0
        %v3977 = vpop.f32.mrb[0].mxu0
        %v3978 = vadd.f32 0.0, %v3977
        %v3979 = vpop.f32.mrb[0].mxu0
        %3980 = vmatprep.mubr.bf16.mxu0 0
        %3981 = vmatmul.mubr.bf16.gmra.mrb[0].mxu0 %v3896
        %v3982 = vpop.f32.mrb[0].mxu0
        %v3983 = vadd.f32 0.0, %v3982
        %v3984 = vpop.f32.mrb[0].mxu0
        %v3985 = vpop.f32.mrb[0].mxu0
        %v3986 = vadd.f32 0.0, %v3985
        %v3987 = vpop.f32.mrb[0].mxu0
        %3988 = vmatprep.mubr.bf16.mxu0 0
        %3989 = vmatmul.mubr.bf16.gmra.mrb[0].mxu0 %v3899
        %v3990 = vpop.f32.mrb[0].mxu0
        %v3991 = vadd.f32 0.0, %v3990
        %v3992 = vpop.f32.mrb[0].mxu0
        %v3993 = vpop.f32.mrb[0].mxu0
        %v3994 = vadd.f32 0.0, %v3993
        %v3995 = vpop.f32.mrb[0].mxu0
        %3996 = vmatprep.mubr.bf16.mxu0 0
        %3997 = vmatmul.mubr.bf16.gmra.mrb[0].mxu0 %v3902
        %v3998 = vpop.f32.mrb[0].mxu0
        %v3999 = vadd.f32 0.0, %v3998
        %v4000 = vpop.f32.mrb[0].mxu0
        %v4001 = vpop.f32.mrb[0].mxu0
        %v4002 = vadd.f32 0.0, %v4001
        %v4003 = vpop.f32.mrb[0].mxu0
        %4004 = vmatprep.mubr.bf16.mxu0 0
        %4005 = vmatmul.mubr.bf16.gmra.mrb[0].mxu0 %v3905
        %v4006 = vpop.f32.mrb[0].mxu0
        %v4007 = vadd.f32 0.0, %v4006
        %v4008 = vpop.f32.mrb[0].mxu0
        %v4009 = vpop.f32.mrb[0].mxu0
        %v4010 = vadd.f32 0.0, %v4009
        %v4011 = vpop.f32.mrb[0].mxu0
        %4012 = vmatprep.mubr.bf16.mxu0 0
        %4013 = vmatmul.mubr.bf16.gmra.mrb[0].mxu0 %v3908
        %v4014 = vpop.f32.mrb[0].mxu0
        %v4015 = vadd.f32 0.0, %v4014
        %v4016 = vpop.f32.mrb[0].mxu0
        %v4017 = vpop.f32.mrb[0].mxu0
        %v4018 = vadd.f32 0.0, %v4017
        %v4019 = vpop.f32.mrb[0].mxu0
        %4020 = vmatprep.mubr.bf16.mxu0 0
        %4021 = vmatmul.mubr.bf16.gmra.mrb[0].mxu0 %v3911
        %v4022 = vpop.f32.mrb[0].mxu0
        %v4023 = vadd.f32 0.0, %v4022
        %v4024 = vpop.f32.mrb[0].mxu0
        %v4025 = vpop.f32.mrb[0].mxu0
        %v4026 = vadd.f32 0.0, %v4025
        %v4027 = vpop.f32.mrb[0].mxu0
        %4028 = vmatprep.mubr.bf16.mxu0 0
        %4029 = vmatmul.mubr.bf16.gmra.mrb[0].mxu0 %v3914
        %v4030 = vpop.f32.mrb[0].mxu0
        %v4031 = vadd.f32 0.0, %v4030
        %v4032 = vpop.f32.mrb[0].mxu0
        %v4033 = vpop.f32.mrb[0].mxu0
        %v4034 = vadd.f32 0.0, %v4033
        %v4035 = vpop.f32.mrb[0].mxu0
        %4036 = vmatprep.mubr.bf16.mxu0 0
        %4037 = vmatmul.mubr.bf16.gmra.mrb[0].mxu0 %v3917
        %v4038 = vpop.f32.mrb[0].mxu0
        %v4039 = vadd.f32 0.0, %v4038
        %v4040 = vpop.f32.mrb[0].mxu0
        %v4041 = vpop.f32.mrb[0].mxu0
        %v4042 = vadd.f32 0.0, %v4041
        %v4043 = vpop.f32.mrb[0].mxu0
        %4044 = vmatprep.mubr.bf16.mxu0 0
        %4045 = vmatmul.mubr.bf16.gmra.mrb[0].mxu0 %v3920
        %v4046 = vpop.f32.mrb[0].mxu0
        %v4047 = vadd.f32 0.0, %v4046
        %v4048 = vpop.f32.mrb[0].mxu0
        %v4049 = vpop.f32.mrb[0].mxu0
        %v4050 = vadd.f32 0.0, %v4049
        %v4051 = vpop.f32.mrb[0].mxu0
        %4052 = vmatprep.mubr.bf16.mxu0 0
        %4053 = vmatmul.mubr.bf16.gmra.mrb[0].mxu0 %v3923
        %v4054 = vpop.f32.mrb[0].mxu0
        %v4055 = vadd.f32 0.0, %v4054
        %v4056 = vpop.f32.mrb[0].mxu0
        %v4057 = vpop.f32.mrb[0].mxu0
        %v4058 = vadd.f32 0.0, %v4057
        %v4059 = vpop.f32.mrb[0].mxu0
        %4060 = vmatprep.mubr.bf16.mxu0 0
        %4061 = vmatmul.mubr.bf16.gmra.mrb[0].mxu0 %v3926
        %v4062 = vpop.f32.mrb[0].mxu0
        %v4063 = vadd.f32 0.0, %v4062
        %v4064 = vpop.f32.mrb[0].mxu0
        %v4065 = vpop.f32.mrb[0].mxu0
        %v4066 = vadd.f32 0.0, %v4065
        %v4067 = vpop.f32.mrb[0].mxu0
        %4068 = vmatprep.mubr.bf16.mxu0 0
        %4069 = vmatmul.mubr.bf16.gmra.mrb[0].mxu0 %v3929
        %v4070 = vpop.f32.mrb[0].mxu0
        %v4071 = vadd.f32 0.0, %v4070
        %v4072 = vpop.f32.mrb[0].mxu0
        %v4073 = vpop.f32.mrb[0].mxu0
        %v4074 = vadd.f32 0.0, %v4073
        %v4075 = vpop.f32.mrb[0].mxu0
        %4076 = vmatprep.mubr.bf16.mxu0 0
        %4077 = vmatmul.mubr.bf16.gmra.mrb[0].mxu0 %v3932
        %v4078 = vpop.f32.mrb[0].mxu0
        %v4079 = vadd.f32 0.0, %v4078
        %v4080 = vpop.f32.mrb[0].mxu0
        %v4081 = vpop.f32.mrb[0].mxu0
        %v4082 = vadd.f32 0.0, %v4081
        %v4083 = vpop.f32.mrb[0].mxu0
        %4084 = vmatprep.mubr.bf16.mxu0 0
        %4085 = vmatmul.mubr.bf16.gmra.mrb[0].mxu0 %v3935
        %v4086 = vpop.f32.mrb[0].mxu0
        %v4087 = vadd.f32 0.0, %v4086
        %v4088 = vpop.f32.mrb[0].mxu0
        %v4089 = vpop.f32.mrb[0].mxu0
        %v4090 = vadd.f32 0.0, %v4089
        %v4091 = vpop.f32.mrb[0].mxu0
        %4092 = vmatprep.mubr.bf16.mxu0 0
        %4093 = vmatmul.mubr.bf16.gmra.mrb[0].mxu0 %v3938
        %v4094 = vpop.f32.mrb[0].mxu0
        %v4095 = vadd.f32 0.0, %v4094
        %v4096 = vpop.f32.mrb[0].mxu0
        %v4097 = vpop.f32.mrb[0].mxu0
        %v4098 = vadd.f32 0.0, %v4097
        %v4099 = vpop.f32.mrb[0].mxu0
        %4100 = vdwg.mxu0
        %v4101 = vadd.f32 %v3637, %v3975
        %v4102 = vadd.f32 %v3640, %v3978
        %v4103 = vadd.f32 %v3645, %v3983
        %v4104 = vadd.f32 %v3648, %v3986
        %v4105 = vadd.f32 %v3653, %v3991
        %v4106 = vadd.f32 %v3656, %v3994
        %v4107 = vadd.f32 %v3661, %v3999
        %v4108 = vadd.f32 %v3664, %v4002
        %v4109 = vadd.f32 %v3669, %v4007
        %v4110 = vadd.f32 %v3672, %v4010
        %v4111 = vadd.f32 %v3677, %v4015
        %v4112 = vadd.f32 %v3680, %v4018
        %v4113 = vadd.f32 %v3685, %v4023
        %v4114 = vadd.f32 %v3688, %v4026
        %v4115 = vadd.f32 %v3693, %v4031
        %v4116 = vadd.f32 %v3696, %v4034
        %v4117 = vadd.f32 %v3701, %v4039
        %v4118 = vadd.f32 %v3704, %v4042
        %v4119 = vadd.f32 %v3709, %v4047
        %v4120 = vadd.f32 %v3712, %v4050
        %v4121 = vadd.f32 %v3717, %v4055
        %v4122 = vadd.f32 %v3720, %v4058
        %v4123 = vadd.f32 %v3725, %v4063
        %v4124 = vadd.f32 %v3728, %v4066
        %v4125 = vadd.f32 %v3733, %v4071
        %v4126 = vadd.f32 %v3736, %v4074
        %v4127 = vadd.f32 %v3741, %v4079
        %v4128 = vadd.f32 %v3744, %v4082
        %v4129 = vadd.f32 %v3749, %v4087
        %v4130 = vadd.f32 %v3752, %v4090
        %v4131 = vadd.f32 %v3757, %v4095
        %v4132 = vadd.f32 %v3760, %v4098
        %v4133 = vld [vmem:[%s4] sm:$0x1]
        %v4135 = vlaneseq
        %v4136 = vshrl.u32 %v4135, 7
        %v4137 = vsub.s32 0, %v4136
        %v4138 = vrot.slane %v4133, %v4137
        %v4140 = vadd.f32 %v4101, %v4138
        %v4141 = vadd.f32 %v4102, %v4138
        %v4142 = vadd.f32 %v4103, %v4138
        %v4143 = vadd.f32 %v4104, %v4138
        %v4144 = vadd.f32 %v4105, %v4138
        %v4145 = vadd.f32 %v4106, %v4138
        %v4146 = vadd.f32 %v4107, %v4138
        %v4147 = vadd.f32 %v4108, %v4138
        %v4148 = vadd.f32 %v4109, %v4138
        %v4149 = vadd.f32 %v4110, %v4138
        %v4150 = vadd.f32 %v4111, %v4138
        %v4151 = vadd.f32 %v4112, %v4138
        %v4152 = vadd.f32 %v4113, %v4138
        %v4153 = vadd.f32 %v4114, %v4138
        %v4154 = vadd.f32 %v4115, %v4138
        %v4155 = vadd.f32 %v4116, %v4138
        %v4156 = vadd.f32 %v4117, %v4138
        %v4157 = vadd.f32 %v4118, %v4138
        %v4158 = vadd.f32 %v4119, %v4138
        %v4159 = vadd.f32 %v4120, %v4138
        %v4160 = vadd.f32 %v4121, %v4138
        %v4161 = vadd.f32 %v4122, %v4138
        %v4162 = vadd.f32 %v4123, %v4138
        %v4163 = vadd.f32 %v4124, %v4138
        %v4164 = vadd.f32 %v4125, %v4138
        %v4165 = vadd.f32 %v4126, %v4138
        %v4166 = vadd.f32 %v4127, %v4138
        %v4167 = vadd.f32 %v4128, %v4138
        %v4168 = vadd.f32 %v4129, %v4138
        %v4169 = vadd.f32 %v4130, %v4138
        %v4170 = vadd.f32 %v4131, %v4138
        %v4171 = vadd.f32 %v4132, %v4138
        %v4172 = vmax.f32 %v4140, 0.0
        %v4173 = vmax.f32 %v4141, 0.0
        %v4174 = vmax.f32 %v4142, 0.0
        %v4175 = vmax.f32 %v4143, 0.0
        %v4176 = vmax.f32 %v4144, 0.0
        %v4177 = vmax.f32 %v4145, 0.0
        %v4178 = vmax.f32 %v4146, 0.0
        %v4179 = vmax.f32 %v4147, 0.0
        %v4180 = vmax.f32 %v4148, 0.0
        %v4181 = vmax.f32 %v4149, 0.0
        %v4182 = vmax.f32 %v4150, 0.0
        %v4183 = vmax.f32 %v4151, 0.0
        %v4184 = vmax.f32 %v4152, 0.0
        %v4185 = vmax.f32 %v4153, 0.0
        %v4186 = vmax.f32 %v4154, 0.0
        %v4187 = vmax.f32 %v4155, 0.0
        %v4188 = vmax.f32 %v4156, 0.0
        %v4189 = vmax.f32 %v4157, 0.0
        %v4190 = vmax.f32 %v4158, 0.0
        %v4191 = vmax.f32 %v4159, 0.0
        %v4192 = vmax.f32 %v4160, 0.0
        %v4193 = vmax.f32 %v4161, 0.0
        %v4194 = vmax.f32 %v4162, 0.0
        %v4195 = vmax.f32 %v4163, 0.0
        %v4196 = vmax.f32 %v4164, 0.0
        %v4197 = vmax.f32 %v4165, 0.0
        %v4198 = vmax.f32 %v4166, 0.0
        %v4199 = vmax.f32 %v4167, 0.0
        %v4200 = vmax.f32 %v4168, 0.0
        %v4201 = vmax.f32 %v4169, 0.0
        %v4202 = vmax.f32 %v4170, 0.0
        %v4203 = vmax.f32 %v4171, 0.0
        %4204 = vst.msk [vmem:[%s231] sm:$0xff] %vm989, %v4172
        %4205 = vst.msk [vmem:[%s231 + $0x8] sm:$0xff] %vm989, %v4173
        %4206 = vst.msk [vmem:[%s231 + $0x10] sm:$0xff] %vm989, %v4174
        %4207 = vst.msk [vmem:[%s231 + $0x18] sm:$0xff] %vm989, %v4175
        %4208 = vst.msk [vmem:[%s231 + $0x20] sm:$0xff] %vm989, %v4176
        %4209 = vst.msk [vmem:[%s231 + $0x28] sm:$0xff] %vm989, %v4177
        %4210 = vst.msk [vmem:[%s231 + $0x30] sm:$0xff] %vm989, %v4178
        %4211 = vst.msk [vmem:[%s231 + $0x38] sm:$0xff] %vm989, %v4179
        %4212 = vst.msk [vmem:[%s231 + $0x40] sm:$0xff] %vm989, %v4180
        %4213 = vst.msk [vmem:[%s231 + $0x48] sm:$0xff] %vm989, %v4181
        %4214 = vst.msk [vmem:[%s231 + $0x50] sm:$0xff] %vm989, %v4182
        %4215 = vst.msk [vmem:[%s231 + $0x58] sm:$0xff] %vm989, %v4183
        %4216 = vst.msk [vmem:[%s231 + $0x60] sm:$0xff] %vm989, %v4184
        %4217 = vst.msk [vmem:[%s231 + $0x68] sm:$0xff] %vm989, %v4185
        %4218 = vst.msk [vmem:[%s231 + $0x70] sm:$0xff] %vm989, %v4186
        %4219 = vst.msk [vmem:[%s231 + $0x78] sm:$0xff] %vm989, %v4187
        %4220 = vst.msk [vmem:[%s231 + $0x80] sm:$0xff] %vm989, %v4188
        %4221 = vst.msk [vmem:[%s231 + $0x88] sm:$0xff] %vm989, %v4189
        %4222 = vst.msk [vmem:[%s231 + $0x90] sm:$0xff] %vm989, %v4190
        %4223 = vst.msk [vmem:[%s231 + $0x98] sm:$0xff] %vm989, %v4191
        %4224 = vst.msk [vmem:[%s231 + $0xa0] sm:$0xff] %vm989, %v4192
        %4225 = vst.msk [vmem:[%s231 + $0xa8] sm:$0xff] %vm989, %v4193
        %4226 = vst.msk [vmem:[%s231 + $0xb0] sm:$0xff] %vm989, %v4194
        %4227 = vst.msk [vmem:[%s231 + $0xb8] sm:$0xff] %vm989, %v4195
        %4228 = vst.msk [vmem:[%s231 + $0xc0] sm:$0xff] %vm989, %v4196
        %4229 = vst.msk [vmem:[%s231 + $0xc8] sm:$0xff] %vm989, %v4197
        %4230 = vst.msk [vmem:[%s231 + $0xd0] sm:$0xff] %vm989, %v4198
        %4231 = vst.msk [vmem:[%s231 + $0xd8] sm:$0xff] %vm989, %v4199
        %4232 = vst.msk [vmem:[%s231 + $0xe0] sm:$0xff] %vm989, %v4200
        %4233 = vst.msk [vmem:[%s231 + $0xe8] sm:$0xff] %vm989, %v4201
        %4234 = vst.msk [vmem:[%s231 + $0xf0] sm:$0xff] %vm989, %v4202
        %4235 = vst.msk [vmem:[%s231 + $0xf8] sm:$0xff] %vm989, %v4203
        %s4236 = sand.u32 %s151, 1
        %s4237 = scalar_lea.sflag [#allocation3], %s4236
        %s4238 = sand.u32 %s151, 1
        %s4239 = smul.addr %s4238, 256
        %s4240 = scalar_lea.vmem [#allocation2], %s4239
        // Predicated region
        $region41: #{student_s32_forward.1} parent=39 // pred_check
          %p4241 = pneg %p161
        $region42: #{student_s32_forward.1} parent=39 // pred_check_branch
          %4243 = sbr.rel (%p4241) target = $region44
        $region43: #{student_s32_forward.1} parent=39 // pred_region
          %s4244 = smul.u32 16, %s24
          %s4246 = ssub.s32 4096, 4096
          %4247 = vsyncadd %s4237, %s4246
          %s4248 = smul.addr %s4244, 2
          %s4249 = smul.addr %s23, 32
          %s4250 = sadd.s32 %s4248, %s4249
          %s4251 = smul.addr %s4250, 128
          %s4252 = scalar_lea.hbm %s5, %s4251
          %s4253 = sshll.u32 %s4240, 4
          %s4254 = int_to_ptr.vmem [resolvable:$true] %s4253
          %4259 = dma.vmem_to_hbm [thread:$0]  %s4254, 4096, %s4252, %s4237, 128, 128, 8
        $region44: #{student_s32_forward.1} parent=39 // pred_fallthru
          _
      $region40: #{student_s32_forward.1} parent=5 // pred_fallthru
        _
      %p4260 = scmp.le.s32.totalorder 2, %s14
      // Predicated region
      $region45: #{student_s32_forward.1} parent=5 // pred_check
        %p4261 = pneg %p4260
      $region46: #{student_s32_forward.1} parent=5 // pred_check_branch
        %4263 = sbr.rel (%p4261) target = $region48
      $region47: #{student_s32_forward.1} parent=5 // pred_region
        %s4264 = ssub.s32 %s14, 2
        // Predicated region
        $region49: #{student_s32_forward.1} parent=47 // pred_check
          %p4265 = pneg %p167
        $region50: #{student_s32_forward.1} parent=47 // pred_check_branch
          %4267 = sbr.rel (%p4265) target = $region52
        $region51: #{student_s32_forward.1} parent=47 // pred_region
          %s4268 = sand.u32 %s152, 1
          %s4269 = scalar_lea.sflag [#allocation3], %s4268
          %s4270 = sand.u32 %s152, 1
          %s4271 = smul.addr %s4270, 256
          %s4272 = scalar_lea.vmem [#allocation2], %s4271
          %4273 = dma.done %s4269, 4096
        $region52: #{student_s32_forward.1} parent=47 // pred_fallthru
          _
      $region48: #{student_s32_forward.1} parent=5 // pred_fallthru
        _
    $region6: #{student_s32_forward.1} parent=1 // loop_footer
      %s18 = sadd.s32 1, %s14
    $region7: #{student_s32_forward.1} parent=1 // loop_footer_branch
      %13 = sbr.rel target = $region3
    $region8: #{student_s32_forward.1} parent=1 // loop_exit
      _
    %4274 = vsyncpa [#allocation3], 1
    %s4275 = scalar_lea.sflag [#allocation3], 1
    %4276 = vsyncpa %s4275, 1

</llo_original>
